<compile_context>
chip_gen: v7x
topology: tpu7x:2x2x1
jax: 0.10.0
libtpu: 0.0.40
codegen_flags: <defaults>
</compile_context>

<pallas_src>
import jax
import jax.numpy as jnp
from jax.experimental import pallas as pl
from jax.experimental.pallas import tpu as pltpu

IMGS_PER_STEP = 2                 # 2 images * 64 spatial positions = 128 lanes
GRID8 = 8                         # backbone output spatial size (8x8)
LANES = IMGS_PER_STEP * GRID8 * GRID8


# ----------------------------------------------------------------------------
# Fused kernel: conv1 -> conv2 -> deconv (4 sub-pixel phases) -> 1x1 head
# ----------------------------------------------------------------------------
def _pose_net_kernel(patches_ref, mask_ref, w1_ref, b1_ref, w2_ref, b2_ref,
                     wd_ref, bd_ref, wf_ref, bf_ref, o_ref):
    f32 = jnp.float32
    m_lanes = patches_ref.shape[1]            # 128
    c2 = w2_ref.shape[1]                      # 32
    cd = wd_ref.shape[1]                      # 16
    nj = wf_ref.shape[0]                      # 8 (num_joints)

    def tap(x, si, sj):
        # shifted[:, m] = x[:, m + si*8 + sj] for m = (img, i, j) over the 8x8
        # grid, zeroed where (i+si, j+sj) leaves the grid (the mask also kills
        # the roll wrap-around across rows / images).
        if si == 0 and sj == 0:
            return x
        delta = si * GRID8 + sj
        shifted = pltpu.roll(x, shift=(-delta) % m_lanes, axis=1)
        return shifted * mask_ref[(si + 1) * 3 + (sj + 1)]

    # --- backbone conv1: 3x3/s2 as one GEMM (input-layer im2col done outside)
    a1 = jnp.dot(w1_ref[...], patches_ref[...], preferred_element_type=f32)
    a1 = jnp.maximum(a1 + b1_ref[...], 0.0)                     # [16, 128]

    # --- backbone conv2: 3x3/s1/p1, in-kernel im2col = 9 shifted matmuls
    a2 = jnp.zeros((c2, m_lanes), f32)
    for di in range(3):
        for dj in range(3):
            a2 = a2 + jnp.dot(w2_ref[di * 3 + dj], tap(a1, di - 1, dj - 1),
                              preferred_element_type=f32)
    a2 = jnp.maximum(a2 + b2_ref[...], 0.0)                     # [32, 128]

    # --- decoder: ConvTranspose2d 4x4/s2/p1 via sub-pixel decomposition.
    # Output pixel I = 2*io + r receives taps `a` with a == r+1 (mod 2); from
    # I = 2*i - pad + a the (kernel tap a, input shift i - io) pairs are:
    deconv_taps = (((1, 0), (3, -1)),         # output parity r = 0
                   ((0, 1), (2, 0)))          # output parity r = 1
    a2_shift = {(si, sj): tap(a2, si, sj)
                for si in (-1, 0, 1) for sj in (-1, 0, 1)}
    for rh in range(2):
        for rw in range(2):
            d = jnp.zeros((cd, m_lanes), f32)
            for a, sa in deconv_taps[rh]:
                for b, sb in deconv_taps[rw]:
                    d = d + jnp.dot(wd_ref[a * 4 + b], a2_shift[(sa, sb)],
                                    preferred_element_type=f32)
            d = jnp.maximum(d + bd_ref[...], 0.0)               # [16, 128]
            # --- decoder head: 1x1 conv (16 -> num_joints) + bias, no ReLU
            heat = jnp.dot(wf_ref[...], d, preferred_element_type=f32)
            heat = heat + bf_ref[...]
            phase = rh * 2 + rw
            o_ref[phase * nj:(phase + 1) * nj, :] = heat


# ----------------------------------------------------------------------------
# JAX-side glue: input-layer im2col, tap masks, parameter folding
# ----------------------------------------------------------------------------
def _im2col(x_nhwc, kh, kw, stride, pad):
    x = jnp.pad(x_nhwc, ((0, 0), (pad, pad), (pad, pad), (0, 0)))
    n, hp, wp, c = x.shape
    ho = (hp - kh) // stride + 1
    wo = (wp - kw) // stride + 1
    cols = []
    for i in range(kh):
        for j in range(kw):
            cols.append(x[:, i:i + stride * ho:stride, j:j + stride * wo:stride, :])
    patches = jnp.concatenate(cols, axis=-1)        # (n, ho, wo, kh*kw*c)
    return patches.reshape(n * ho * wo, kh * kw * c)


def _make_tap_masks():
    # mask[(si+1)*3 + (sj+1), 0, m] = 1 iff position m = (img, i, j) of the 8x8
    # grid has (i+si, j+sj) still inside the grid.
    m = jnp.arange(LANES)
    i = (m % (GRID8 * GRID8)) // GRID8
    j = m % GRID8
    rows = []
    for si in (-1, 0, 1):
        for sj in (-1, 0, 1):
            ok = (i + si >= 0) & (i + si < GRID8) & (j + sj >= 0) & (j + sj < GRID8)
            rows.append(ok)
    return jnp.stack(rows).astype(jnp.float32).reshape(9, 1, LANES)


def fold_params(p):
    """One-time fold of BN scales into weights + relayout into kernel format."""
    c1 = p["w1"].shape[0]
    c2 = p["w2"].shape[0]
    cd = p["wd"].shape[1]
    # conv1: [Cout, K] with K ordered (kh, kw, cin), BN scale folded.
    w1 = (jnp.transpose(p["w1"], (2, 3, 1, 0)).reshape(-1, c1) * p["s1"]).T
    # conv2 taps: [9, Cout, Cin] (t = di*3 + dj), BN scale folded.
    w2 = (jnp.transpose(p["w2"], (2, 3, 0, 1)) * p["s2"][None, None, :, None]
          ).reshape(9, c2, p["w2"].shape[1])
    # deconv taps: torch layout (Cin, Cout, kh, kw) -> [16, Cout, Cin] (t = a*4+b).
    wd = (jnp.transpose(p["wd"], (2, 3, 1, 0)) * p["sd"][None, None, :, None]
          ).reshape(16, cd, p["wd"].shape[0])
    return {
        "w1": w1, "b1": p["b1"].reshape(-1, 1),
        "w2": w2, "b2": p["b2"].reshape(-1, 1),
        "wd": wd, "bd": p["bd"].reshape(-1, 1),
        "wf": p["wf"][:, :, 0, 0], "bf": p["bf"].reshape(-1, 1),
        "mask": _make_tap_masks(),
    }


# ----------------------------------------------------------------------------
# Deterministic parameter construction (same instantiation as before)
# ----------------------------------------------------------------------------
def _bn_fold(key, c, eps=1e-5):
    kg, kb, km, kv = jax.random.split(key, 4)
    gamma = 1.0 + 0.1 * jax.random.normal(kg, (c,), jnp.float32)
    beta = 0.1 * jax.random.normal(kb, (c,), jnp.float32)
    mean = 0.1 * jax.random.normal(km, (c,), jnp.float32)
    var = 1.0 + 0.1 * jnp.abs(jax.random.normal(kv, (c,), jnp.float32))
    scale = gamma / jnp.sqrt(var + eps)
    bias = beta - mean * scale
    return scale, bias


def make_params(key, cin=4, num_joints=8):
    ks = jax.random.split(key, 8)
    p = {}
    p["w1"] = 0.1 * jax.random.normal(ks[0], (16, cin, 3, 3), jnp.float32)
    p["s1"], p["b1"] = _bn_fold(ks[1], 16)
    p["w2"] = 0.1 * jax.random.normal(ks[2], (32, 16, 3, 3), jnp.float32)
    p["s2"], p["b2"] = _bn_fold(ks[3], 32)
    p["wd"] = 0.1 * jax.random.normal(ks[4], (32, 16, 4, 4), jnp.float32)  # (Cin,Cout,kh,kw)
    p["sd"], p["bd"] = _bn_fold(ks[5], 16)
    p["wf"] = 0.1 * jax.random.normal(ks[6], (num_joints, 16, 1, 1), jnp.float32)
    p["bf"] = 0.1 * jax.random.normal(ks[7], (num_joints,), jnp.float32)
    return p


# ----------------------------------------------------------------------------
# PoseResNet forward:  x = backbone(x); x = decoder(x)   (single pallas_call)
# ----------------------------------------------------------------------------
@jax.jit
def pose_resnet_forward(x_nchw, fp):
    n, cin, h, w = x_nchw.shape
    assert (h, w) == (16, 16)
    n_pad = -(-n // IMGS_PER_STEP) * IMGS_PER_STEP
    x = x_nchw.astype(jnp.float32)
    if n_pad != n:   # only triggers for odd batch sizes
        x = jnp.pad(x, ((0, n_pad - n), (0, 0), (0, 0), (0, 0)))

    # Input-layer im2col (read-once, ~18 KB) in the transposed lane-dense
    # layout: patches_t[k, m] with m = (image, i, j) over the 8x8 conv1 grid.
    patches_t = _im2col(jnp.transpose(x, (0, 2, 3, 1)), 3, 3, stride=2, pad=1).T

    c1, k1 = fp["w1"].shape          # 16, 36
    c2 = fp["w2"].shape[1]           # 32
    cd = fp["wd"].shape[1]           # 16
    nj = fp["wf"].shape[0]           # 8
    out_rows = 4 * nj                # 4 deconv phases * num_joints
    m_total = n_pad * GRID8 * GRID8
    num_steps = m_total // LANES

    flops = 2 * m_total * (c1 * k1 + 9 * c2 * c1 + 16 * cd * c2 + nj * cd)
    ins = (patches_t, fp["mask"], fp["w1"], fp["b1"], fp["w2"], fp["b2"],
           fp["wd"], fp["bd"], fp["wf"], fp["bf"])
    bytes_accessed = sum(int(a.size) * 4 for a in ins) + out_rows * m_total * 4

    out2d = pl.pallas_call(
        _pose_net_kernel,
        out_shape=jax.ShapeDtypeStruct((out_rows, m_total), jnp.float32),
        grid_spec=pltpu.PrefetchScalarGridSpec(
            num_scalar_prefetch=0,
            grid=(num_steps,),
            in_specs=[
                pl.BlockSpec((k1, LANES), lambda g: (0, g)),        # patches
                pl.BlockSpec((9, 1, LANES), lambda g: (0, 0, 0)),   # tap masks
                pl.BlockSpec((c1, k1), lambda g: (0, 0)),           # w1 (BN folded)
                pl.BlockSpec((c1, 1), lambda g: (0, 0)),            # b1
                pl.BlockSpec((9, c2, c1), lambda g: (0, 0, 0)),     # w2 taps
                pl.BlockSpec((c2, 1), lambda g: (0, 0)),            # b2
                pl.BlockSpec((16, cd, c2), lambda g: (0, 0, 0)),    # deconv taps
                pl.BlockSpec((cd, 1), lambda g: (0, 0)),            # bd
                pl.BlockSpec((nj, cd), lambda g: (0, 0)),           # head weight
                pl.BlockSpec((nj, 1), lambda g: (0, 0)),            # head bias
            ],
            out_specs=pl.BlockSpec((out_rows, LANES), lambda g: (0, g)),
        ),
        compiler_params=pltpu.CompilerParams(dimension_semantics=("parallel",)),
        cost_estimate=pl.CostEstimate(flops=flops, transcendentals=0,
                                      bytes_accessed=bytes_accessed),
    )(*ins)

    # Reassemble [4*nj, N*64] -> NCHW: lane = n*64 + io*8 + jo,
    # row = (rh*2 + rw)*nj + c, output pixel (2*io + rh, 2*jo + rw).
    out = out2d.reshape(2, 2, nj, n_pad, GRID8, GRID8)
    out = jnp.transpose(out, (3, 2, 4, 0, 5, 1)).reshape(n_pad, nj, 16, 16)
    return out if n_pad == n else out[:n]


if __name__ == "__main__":
    key = jax.random.PRNGKey(0)
    kx, kp = jax.random.split(key)
    x = jax.random.normal(kx, (2, 4, 16, 16), jnp.float32)      # NCHW, like PyTorch
    params = make_params(kp, cin=4, num_joints=8)
    fparams = fold_params(params)                               # one-time BN fold

    out = pose_resnet_forward(x, fparams)
    jax.block_until_ready(out)

    assert out.shape == (2, 8, 16, 16), out.shape
    assert jnp.all(jnp.isfinite(out))
    print("KERNEL_OK")
</pallas_src>

<mosaic_0001>
module attributes {stable_mosaic.version = 11 : i64} {
  func.func @_pose_net_kernel(%arg0: i32, %arg1: memref<36x128xf32, #tpu.memory_space<vmem>>, %arg2: memref<9x1x128xf32, #tpu.memory_space<vmem>>, %arg3: memref<16x36xf32, #tpu.memory_space<vmem>>, %arg4: memref<16x1xf32, #tpu.memory_space<vmem>>, %arg5: memref<9x32x16xf32, #tpu.memory_space<vmem>>, %arg6: memref<32x1xf32, #tpu.memory_space<vmem>>, %arg7: memref<16x16x32xf32, #tpu.memory_space<vmem>>, %arg8: memref<16x1xf32, #tpu.memory_space<vmem>>, %arg9: memref<8x16xf32, #tpu.memory_space<vmem>>, %arg10: memref<8x1xf32, #tpu.memory_space<vmem>>, %arg11: memref<32x128xf32, #tpu.memory_space<vmem>>) attributes {dimension_semantics = [#tpu.dimension_semantics<parallel>], iteration_bounds = array<i64: 1>, scalar_prefetch = 0 : i64, scratch_operands = 0 : i64, tpu.core_type = #tpu.core_type<tc>, window_params = [{transform_indices = @transform_0, window_bounds = array<i64: 36, 128>}, {pipeline_mode = #tpu.pipeline_mode<synchronous>, transform_indices = @transform_1, window_bounds = array<i64: 9, 1, 128>}, {pipeline_mode = #tpu.pipeline_mode<synchronous>, transform_indices = @transform_2, window_bounds = array<i64: 16, 36>}, {pipeline_mode = #tpu.pipeline_mode<synchronous>, transform_indices = @transform_3, window_bounds = array<i64: 16, 1>}, {pipeline_mode = #tpu.pipeline_mode<synchronous>, transform_indices = @transform_4, window_bounds = array<i64: 9, 32, 16>}, {pipeline_mode = #tpu.pipeline_mode<synchronous>, transform_indices = @transform_5, window_bounds = array<i64: 32, 1>}, {pipeline_mode = #tpu.pipeline_mode<synchronous>, transform_indices = @transform_6, window_bounds = array<i64: 16, 16, 32>}, {pipeline_mode = #tpu.pipeline_mode<synchronous>, transform_indices = @transform_7, window_bounds = array<i64: 16, 1>}, {pipeline_mode = #tpu.pipeline_mode<synchronous>, transform_indices = @transform_8, window_bounds = array<i64: 8, 16>}, {pipeline_mode = #tpu.pipeline_mode<synchronous>, transform_indices = @transform_9, window_bounds = array<i64: 8, 1>}, {transform_indices = @transform_10, window_bounds = array<i64: 32, 128>}]} {
    %c0 = arith.constant 0 : index
    %c0_0 = arith.constant 0 : index
    %0 = vector.load %arg3[%c0, %c0_0] : memref<16x36xf32, #tpu.memory_space<vmem>>, vector<16x36xf32>
    %c0_1 = arith.constant 0 : index
    %c0_2 = arith.constant 0 : index
    %1 = vector.load %arg1[%c0_1, %c0_2] : memref<36x128xf32, #tpu.memory_space<vmem>>, vector<36x128xf32>
    %cst = arith.constant dense<0.000000e+00> : vector<16x128xf32>
    %2 = tpu.matmul %0, %1, %cst {dimension_numbers = #tpu.dot_dimension_numbers<[1], [0], [0], [1], [0, 0, 1, 1], [], []>} : vector<16x36xf32>, vector<36x128xf32>, vector<16x128xf32> -> vector<16x128xf32>
    %c0_3 = arith.constant 0 : index
    %c0_4 = arith.constant 0 : index
    %3 = vector.load %arg4[%c0_3, %c0_4] : memref<16x1xf32, #tpu.memory_space<vmem>>, vector<16x1xf32>
    %4 = vector.broadcast %3 : vector<16x1xf32> to vector<16x128xf32>
    %5 = arith.addf %2, %4 : vector<16x128xf32>
    %cst_5 = arith.constant 0.000000e+00 : f32
    %6 = vector.broadcast %cst_5 : f32 to vector<16x128xf32>
    %7 = arith.maximumf %5, %6 : vector<16x128xf32>
    %cst_6 = arith.constant 0.000000e+00 : f32
    %8 = vector.broadcast %cst_6 : f32 to vector<32x128xf32>
    %c0_7 = arith.constant 0 : index
    %c0_8 = arith.constant 0 : index
    %c0_9 = arith.constant 0 : index
    %9 = vector.load %arg5[%c0_7, %c0_8, %c0_9] : memref<9x32x16xf32, #tpu.memory_space<vmem>>, vector<1x32x16xf32>
    %10 = vector.shape_cast %9 : vector<1x32x16xf32> to vector<32x16xf32>
    %c9_i32 = arith.constant 9 : i32
    %11 = tpu.dynamic_rotate %7 by %c9_i32 dim 1 : vector<16x128xf32>, i32 -> vector<16x128xf32>
    %c0_10 = arith.constant 0 : index
    %c0_11 = arith.constant 0 : index
    %c0_12 = arith.constant 0 : index
    %12 = vector.load %arg2[%c0_10, %c0_11, %c0_12] : memref<9x1x128xf32, #tpu.memory_space<vmem>>, vector<1x1x128xf32>
    %13 = vector.shape_cast %12 : vector<1x1x128xf32> to vector<1x128xf32>
    %14 = vector.broadcast %13 : vector<1x128xf32> to vector<16x128xf32>
    %15 = arith.mulf %11, %14 : vector<16x128xf32>
    %cst_13 = arith.constant dense<0.000000e+00> : vector<32x128xf32>
    %16 = tpu.matmul %10, %15, %cst_13 {dimension_numbers = #tpu.dot_dimension_numbers<[1], [0], [0], [1], [0, 0, 1, 1], [], []>} : vector<32x16xf32>, vector<16x128xf32>, vector<32x128xf32> -> vector<32x128xf32>
    %17 = arith.addf %8, %16 : vector<32x128xf32>
    %c1 = arith.constant 1 : index
    %c0_14 = arith.constant 0 : index
    %c0_15 = arith.constant 0 : index
    %18 = vector.load %arg5[%c1, %c0_14, %c0_15] : memref<9x32x16xf32, #tpu.memory_space<vmem>>, vector<1x32x16xf32>
    %19 = vector.shape_cast %18 : vector<1x32x16xf32> to vector<32x16xf32>
    %c8_i32 = arith.constant 8 : i32
    %20 = tpu.dynamic_rotate %7 by %c8_i32 dim 1 : vector<16x128xf32>, i32 -> vector<16x128xf32>
    %c1_16 = arith.constant 1 : index
    %c0_17 = arith.constant 0 : index
    %c0_18 = arith.constant 0 : index
    %21 = vector.load %arg2[%c1_16, %c0_17, %c0_18] : memref<9x1x128xf32, #tpu.memory_space<vmem>>, vector<1x1x128xf32>
    %22 = vector.shape_cast %21 : vector<1x1x128xf32> to vector<1x128xf32>
    %23 = vector.broadcast %22 : vector<1x128xf32> to vector<16x128xf32>
    %24 = arith.mulf %20, %23 : vector<16x128xf32>
    %cst_19 = arith.constant dense<0.000000e+00> : vector<32x128xf32>
    %25 = tpu.matmul %19, %24, %cst_19 {dimension_numbers = #tpu.dot_dimension_numbers<[1], [0], [0], [1], [0, 0, 1, 1], [], []>} : vector<32x16xf32>, vector<16x128xf32>, vector<32x128xf32> -> vector<32x128xf32>
    %26 = arith.addf %17, %25 : vector<32x128xf32>
    %c2 = arith.constant 2 : index
    %c0_20 = arith.constant 0 : index
    %c0_21 = arith.constant 0 : index
    %27 = vector.load %arg5[%c2, %c0_20, %c0_21] : memref<9x32x16xf32, #tpu.memory_space<vmem>>, vector<1x32x16xf32>
    %28 = vector.shape_cast %27 : vector<1x32x16xf32> to vector<32x16xf32>
    %c7_i32 = arith.constant 7 : i32
    %29 = tpu.dynamic_rotate %7 by %c7_i32 dim 1 : vector<16x128xf32>, i32 -> vector<16x128xf32>
    %c2_22 = arith.constant 2 : index
    %c0_23 = arith.constant 0 : index
    %c0_24 = arith.constant 0 : index
    %30 = vector.load %arg2[%c2_22, %c0_23, %c0_24] : memref<9x1x128xf32, #tpu.memory_space<vmem>>, vector<1x1x128xf32>
    %31 = vector.shape_cast %30 : vector<1x1x128xf32> to vector<1x128xf32>
    %32 = vector.broadcast %31 : vector<1x128xf32> to vector<16x128xf32>
    %33 = arith.mulf %29, %32 : vector<16x128xf32>
    %cst_25 = arith.constant dense<0.000000e+00> : vector<32x128xf32>
    %34 = tpu.matmul %28, %33, %cst_25 {dimension_numbers = #tpu.dot_dimension_numbers<[1], [0], [0], [1], [0, 0, 1, 1], [], []>} : vector<32x16xf32>, vector<16x128xf32>, vector<32x128xf32> -> vector<32x128xf32>
    %35 = arith.addf %26, %34 : vector<32x128xf32>
    %c3 = arith.constant 3 : index
    %c0_26 = arith.constant 0 : index
    %c0_27 = arith.constant 0 : index
    %36 = vector.load %arg5[%c3, %c0_26, %c0_27] : memref<9x32x16xf32, #tpu.memory_space<vmem>>, vector<1x32x16xf32>
    %37 = vector.shape_cast %36 : vector<1x32x16xf32> to vector<32x16xf32>
    %c1_i32 = arith.constant 1 : i32
    %38 = tpu.dynamic_rotate %7 by %c1_i32 dim 1 : vector<16x128xf32>, i32 -> vector<16x128xf32>
    %c3_28 = arith.constant 3 : index
    %c0_29 = arith.constant 0 : index
    %c0_30 = arith.constant 0 : index
    %39 = vector.load %arg2[%c3_28, %c0_29, %c0_30] : memref<9x1x128xf32, #tpu.memory_space<vmem>>, vector<1x1x128xf32>
    %40 = vector.shape_cast %39 : vector<1x1x128xf32> to vector<1x128xf32>
    %41 = vector.broadcast %40 : vector<1x128xf32> to vector<16x128xf32>
    %42 = arith.mulf %38, %41 : vector<16x128xf32>
    %cst_31 = arith.constant dense<0.000000e+00> : vector<32x128xf32>
    %43 = tpu.matmul %37, %42, %cst_31 {dimension_numbers = #tpu.dot_dimension_numbers<[1], [0], [0], [1], [0, 0, 1, 1], [], []>} : vector<32x16xf32>, vector<16x128xf32>, vector<32x128xf32> -> vector<32x128xf32>
    %44 = arith.addf %35, %43 : vector<32x128xf32>
    %c4 = arith.constant 4 : index
    %c0_32 = arith.constant 0 : index
    %c0_33 = arith.constant 0 : index
    %45 = vector.load %arg5[%c4, %c0_32, %c0_33] : memref<9x32x16xf32, #tpu.memory_space<vmem>>, vector<1x32x16xf32>
    %46 = vector.shape_cast %45 : vector<1x32x16xf32> to vector<32x16xf32>
    %cst_34 = arith.constant dense<0.000000e+00> : vector<32x128xf32>
    %47 = tpu.matmul %46, %7, %cst_34 {dimension_numbers = #tpu.dot_dimension_numbers<[1], [0], [0], [1], [0, 0, 1, 1], [], []>} : vector<32x16xf32>, vector<16x128xf32>, vector<32x128xf32> -> vector<32x128xf32>
    %48 = arith.addf %44, %47 : vector<32x128xf32>
    %c5 = arith.constant 5 : index
    %c0_35 = arith.constant 0 : index
    %c0_36 = arith.constant 0 : index
    %49 = vector.load %arg5[%c5, %c0_35, %c0_36] : memref<9x32x16xf32, #tpu.memory_space<vmem>>, vector<1x32x16xf32>
    %50 = vector.shape_cast %49 : vector<1x32x16xf32> to vector<32x16xf32>
    %c127_i32 = arith.constant 127 : i32
    %51 = tpu.dynamic_rotate %7 by %c127_i32 dim 1 : vector<16x128xf32>, i32 -> vector<16x128xf32>
    %c5_37 = arith.constant 5 : index
    %c0_38 = arith.constant 0 : index
    %c0_39 = arith.constant 0 : index
    %52 = vector.load %arg2[%c5_37, %c0_38, %c0_39] : memref<9x1x128xf32, #tpu.memory_space<vmem>>, vector<1x1x128xf32>
    %53 = vector.shape_cast %52 : vector<1x1x128xf32> to vector<1x128xf32>
    %54 = vector.broadcast %53 : vector<1x128xf32> to vector<16x128xf32>
    %55 = arith.mulf %51, %54 : vector<16x128xf32>
    %cst_40 = arith.constant dense<0.000000e+00> : vector<32x128xf32>
    %56 = tpu.matmul %50, %55, %cst_40 {dimension_numbers = #tpu.dot_dimension_numbers<[1], [0], [0], [1], [0, 0, 1, 1], [], []>} : vector<32x16xf32>, vector<16x128xf32>, vector<32x128xf32> -> vector<32x128xf32>
    %57 = arith.addf %48, %56 : vector<32x128xf32>
    %c6 = arith.constant 6 : index
    %c0_41 = arith.constant 0 : index
    %c0_42 = arith.constant 0 : index
    %58 = vector.load %arg5[%c6, %c0_41, %c0_42] : memref<9x32x16xf32, #tpu.memory_space<vmem>>, vector<1x32x16xf32>
    %59 = vector.shape_cast %58 : vector<1x32x16xf32> to vector<32x16xf32>
    %c121_i32 = arith.constant 121 : i32
    %60 = tpu.dynamic_rotate %7 by %c121_i32 dim 1 : vector<16x128xf32>, i32 -> vector<16x128xf32>
    %c6_43 = arith.constant 6 : index
    %c0_44 = arith.constant 0 : index
    %c0_45 = arith.constant 0 : index
    %61 = vector.load %arg2[%c6_43, %c0_44, %c0_45] : memref<9x1x128xf32, #tpu.memory_space<vmem>>, vector<1x1x128xf32>
    %62 = vector.shape_cast %61 : vector<1x1x128xf32> to vector<1x128xf32>
    %63 = vector.broadcast %62 : vector<1x128xf32> to vector<16x128xf32>
    %64 = arith.mulf %60, %63 : vector<16x128xf32>
    %cst_46 = arith.constant dense<0.000000e+00> : vector<32x128xf32>
    %65 = tpu.matmul %59, %64, %cst_46 {dimension_numbers = #tpu.dot_dimension_numbers<[1], [0], [0], [1], [0, 0, 1, 1], [], []>} : vector<32x16xf32>, vector<16x128xf32>, vector<32x128xf32> -> vector<32x128xf32>
    %66 = arith.addf %57, %65 : vector<32x128xf32>
    %c7 = arith.constant 7 : index
    %c0_47 = arith.constant 0 : index
    %c0_48 = arith.constant 0 : index
    %67 = vector.load %arg5[%c7, %c0_47, %c0_48] : memref<9x32x16xf32, #tpu.memory_space<vmem>>, vector<1x32x16xf32>
    %68 = vector.shape_cast %67 : vector<1x32x16xf32> to vector<32x16xf32>
    %c120_i32 = arith.constant 120 : i32
    %69 = tpu.dynamic_rotate %7 by %c120_i32 dim 1 : vector<16x128xf32>, i32 -> vector<16x128xf32>
    %c7_49 = arith.constant 7 : index
    %c0_50 = arith.constant 0 : index
    %c0_51 = arith.constant 0 : index
    %70 = vector.load %arg2[%c7_49, %c0_50, %c0_51] : memref<9x1x128xf32, #tpu.memory_space<vmem>>, vector<1x1x128xf32>
    %71 = vector.shape_cast %70 : vector<1x1x128xf32> to vector<1x128xf32>
    %72 = vector.broadcast %71 : vector<1x128xf32> to vector<16x128xf32>
    %73 = arith.mulf %69, %72 : vector<16x128xf32>
    %cst_52 = arith.constant dense<0.000000e+00> : vector<32x128xf32>
    %74 = tpu.matmul %68, %73, %cst_52 {dimension_numbers = #tpu.dot_dimension_numbers<[1], [0], [0], [1], [0, 0, 1, 1], [], []>} : vector<32x16xf32>, vector<16x128xf32>, vector<32x128xf32> -> vector<32x128xf32>
    %75 = arith.addf %66, %74 : vector<32x128xf32>
    %c8 = arith.constant 8 : index
    %c0_53 = arith.constant 0 : index
    %c0_54 = arith.constant 0 : index
    %76 = vector.load %arg5[%c8, %c0_53, %c0_54] : memref<9x32x16xf32, #tpu.memory_space<vmem>>, vector<1x32x16xf32>
    %77 = vector.shape_cast %76 : vector<1x32x16xf32> to vector<32x16xf32>
    %c119_i32 = arith.constant 119 : i32
    %78 = tpu.dynamic_rotate %7 by %c119_i32 dim 1 : vector<16x128xf32>, i32 -> vector<16x128xf32>
    %c8_55 = arith.constant 8 : index
    %c0_56 = arith.constant 0 : index
    %c0_57 = arith.constant 0 : index
    %79 = vector.load %arg2[%c8_55, %c0_56, %c0_57] : memref<9x1x128xf32, #tpu.memory_space<vmem>>, vector<1x1x128xf32>
    %80 = vector.shape_cast %79 : vector<1x1x128xf32> to vector<1x128xf32>
    %81 = vector.broadcast %80 : vector<1x128xf32> to vector<16x128xf32>
    %82 = arith.mulf %78, %81 : vector<16x128xf32>
    %cst_58 = arith.constant dense<0.000000e+00> : vector<32x128xf32>
    %83 = tpu.matmul %77, %82, %cst_58 {dimension_numbers = #tpu.dot_dimension_numbers<[1], [0], [0], [1], [0, 0, 1, 1], [], []>} : vector<32x16xf32>, vector<16x128xf32>, vector<32x128xf32> -> vector<32x128xf32>
    %84 = arith.addf %75, %83 : vector<32x128xf32>
    %c0_59 = arith.constant 0 : index
    %c0_60 = arith.constant 0 : index
    %85 = vector.load %arg6[%c0_59, %c0_60] : memref<32x1xf32, #tpu.memory_space<vmem>>, vector<32x1xf32>
    %86 = vector.broadcast %85 : vector<32x1xf32> to vector<32x128xf32>
    %87 = arith.addf %84, %86 : vector<32x128xf32>
    %cst_61 = arith.constant 0.000000e+00 : f32
    %88 = vector.broadcast %cst_61 : f32 to vector<32x128xf32>
    %89 = arith.maximumf %87, %88 : vector<32x128xf32>
    %c9_i32_62 = arith.constant 9 : i32
    %90 = tpu.dynamic_rotate %89 by %c9_i32_62 dim 1 : vector<32x128xf32>, i32 -> vector<32x128xf32>
    %c0_63 = arith.constant 0 : index
    %c0_64 = arith.constant 0 : index
    %c0_65 = arith.constant 0 : index
    %91 = vector.load %arg2[%c0_63, %c0_64, %c0_65] : memref<9x1x128xf32, #tpu.memory_space<vmem>>, vector<1x1x128xf32>
    %92 = vector.shape_cast %91 : vector<1x1x128xf32> to vector<1x128xf32>
    %93 = vector.broadcast %92 : vector<1x128xf32> to vector<32x128xf32>
    %94 = arith.mulf %90, %93 : vector<32x128xf32>
    %c8_i32_66 = arith.constant 8 : i32
    %95 = tpu.dynamic_rotate %89 by %c8_i32_66 dim 1 : vector<32x128xf32>, i32 -> vector<32x128xf32>
    %c1_67 = arith.constant 1 : index
    %c0_68 = arith.constant 0 : index
    %c0_69 = arith.constant 0 : index
    %96 = vector.load %arg2[%c1_67, %c0_68, %c0_69] : memref<9x1x128xf32, #tpu.memory_space<vmem>>, vector<1x1x128xf32>
    %97 = vector.shape_cast %96 : vector<1x1x128xf32> to vector<1x128xf32>
    %98 = vector.broadcast %97 : vector<1x128xf32> to vector<32x128xf32>
    %99 = arith.mulf %95, %98 : vector<32x128xf32>
    %c7_i32_70 = arith.constant 7 : i32
    %100 = tpu.dynamic_rotate %89 by %c7_i32_70 dim 1 : vector<32x128xf32>, i32 -> vector<32x128xf32>
    %c2_71 = arith.constant 2 : index
    %c0_72 = arith.constant 0 : index
    %c0_73 = arith.constant 0 : index
    %101 = vector.load %arg2[%c2_71, %c0_72, %c0_73] : memref<9x1x128xf32, #tpu.memory_space<vmem>>, vector<1x1x128xf32>
    %102 = vector.shape_cast %101 : vector<1x1x128xf32> to vector<1x128xf32>
    %103 = vector.broadcast %102 : vector<1x128xf32> to vector<32x128xf32>
    %104 = arith.mulf %100, %103 : vector<32x128xf32>
    %c1_i32_74 = arith.constant 1 : i32
    %105 = tpu.dynamic_rotate %89 by %c1_i32_74 dim 1 : vector<32x128xf32>, i32 -> vector<32x128xf32>
    %c3_75 = arith.constant 3 : index
    %c0_76 = arith.constant 0 : index
    %c0_77 = arith.constant 0 : index
    %106 = vector.load %arg2[%c3_75, %c0_76, %c0_77] : memref<9x1x128xf32, #tpu.memory_space<vmem>>, vector<1x1x128xf32>
    %107 = vector.shape_cast %106 : vector<1x1x128xf32> to vector<1x128xf32>
    %108 = vector.broadcast %107 : vector<1x128xf32> to vector<32x128xf32>
    %109 = arith.mulf %105, %108 : vector<32x128xf32>
    %c127_i32_78 = arith.constant 127 : i32
    %110 = tpu.dynamic_rotate %89 by %c127_i32_78 dim 1 : vector<32x128xf32>, i32 -> vector<32x128xf32>
    %c5_79 = arith.constant 5 : index
    %c0_80 = arith.constant 0 : index
    %c0_81 = arith.constant 0 : index
    %111 = vector.load %arg2[%c5_79, %c0_80, %c0_81] : memref<9x1x128xf32, #tpu.memory_space<vmem>>, vector<1x1x128xf32>
    %112 = vector.shape_cast %111 : vector<1x1x128xf32> to vector<1x128xf32>
    %113 = vector.broadcast %112 : vector<1x128xf32> to vector<32x128xf32>
    %114 = arith.mulf %110, %113 : vector<32x128xf32>
    %c121_i32_82 = arith.constant 121 : i32
    %115 = tpu.dynamic_rotate %89 by %c121_i32_82 dim 1 : vector<32x128xf32>, i32 -> vector<32x128xf32>
    %c6_83 = arith.constant 6 : index
    %c0_84 = arith.constant 0 : index
    %c0_85 = arith.constant 0 : index
    %116 = vector.load %arg2[%c6_83, %c0_84, %c0_85] : memref<9x1x128xf32, #tpu.memory_space<vmem>>, vector<1x1x128xf32>
    %117 = vector.shape_cast %116 : vector<1x1x128xf32> to vector<1x128xf32>
    %118 = vector.broadcast %117 : vector<1x128xf32> to vector<32x128xf32>
    %119 = arith.mulf %115, %118 : vector<32x128xf32>
    %c120_i32_86 = arith.constant 120 : i32
    %120 = tpu.dynamic_rotate %89 by %c120_i32_86 dim 1 : vector<32x128xf32>, i32 -> vector<32x128xf32>
    %c7_87 = arith.constant 7 : index
    %c0_88 = arith.constant 0 : index
    %c0_89 = arith.constant 0 : index
    %121 = vector.load %arg2[%c7_87, %c0_88, %c0_89] : memref<9x1x128xf32, #tpu.memory_space<vmem>>, vector<1x1x128xf32>
    %122 = vector.shape_cast %121 : vector<1x1x128xf32> to vector<1x128xf32>
    %123 = vector.broadcast %122 : vector<1x128xf32> to vector<32x128xf32>
    %124 = arith.mulf %120, %123 : vector<32x128xf32>
    %c119_i32_90 = arith.constant 119 : i32
    %125 = tpu.dynamic_rotate %89 by %c119_i32_90 dim 1 : vector<32x128xf32>, i32 -> vector<32x128xf32>
    %c8_91 = arith.constant 8 : index
    %c0_92 = arith.constant 0 : index
    %c0_93 = arith.constant 0 : index
    %126 = vector.load %arg2[%c8_91, %c0_92, %c0_93] : memref<9x1x128xf32, #tpu.memory_space<vmem>>, vector<1x1x128xf32>
    %127 = vector.shape_cast %126 : vector<1x1x128xf32> to vector<1x128xf32>
    %128 = vector.broadcast %127 : vector<1x128xf32> to vector<32x128xf32>
    %129 = arith.mulf %125, %128 : vector<32x128xf32>
    %cst_94 = arith.constant 0.000000e+00 : f32
    %130 = vector.broadcast %cst_94 : f32 to vector<16x128xf32>
    %c5_95 = arith.constant 5 : index
    %c0_96 = arith.constant 0 : index
    %c0_97 = arith.constant 0 : index
    %131 = vector.load %arg7[%c5_95, %c0_96, %c0_97] : memref<16x16x32xf32, #tpu.memory_space<vmem>>, vector<1x16x32xf32>
    %132 = vector.shape_cast %131 : vector<1x16x32xf32> to vector<16x32xf32>
    %cst_98 = arith.constant dense<0.000000e+00> : vector<16x128xf32>
    %133 = tpu.matmul %132, %89, %cst_98 {dimension_numbers = #tpu.dot_dimension_numbers<[1], [0], [0], [1], [0, 0, 1, 1], [], []>} : vector<16x32xf32>, vector<32x128xf32>, vector<16x128xf32> -> vector<16x128xf32>
    %134 = arith.addf %130, %133 : vector<16x128xf32>
    %c7_99 = arith.constant 7 : index
    %c0_100 = arith.constant 0 : index
    %c0_101 = arith.constant 0 : index
    %135 = vector.load %arg7[%c7_99, %c0_100, %c0_101] : memref<16x16x32xf32, #tpu.memory_space<vmem>>, vector<1x16x32xf32>
    %136 = vector.shape_cast %135 : vector<1x16x32xf32> to vector<16x32xf32>
    %cst_102 = arith.constant dense<0.000000e+00> : vector<16x128xf32>
    %137 = tpu.matmul %136, %109, %cst_102 {dimension_numbers = #tpu.dot_dimension_numbers<[1], [0], [0], [1], [0, 0, 1, 1], [], []>} : vector<16x32xf32>, vector<32x128xf32>, vector<16x128xf32> -> vector<16x128xf32>
    %138 = arith.addf %134, %137 : vector<16x128xf32>
    %c13 = arith.constant 13 : index
    %c0_103 = arith.constant 0 : index
    %c0_104 = arith.constant 0 : index
    %139 = vector.load %arg7[%c13, %c0_103, %c0_104] : memref<16x16x32xf32, #tpu.memory_space<vmem>>, vector<1x16x32xf32>
    %140 = vector.shape_cast %139 : vector<1x16x32xf32> to vector<16x32xf32>
    %cst_105 = arith.constant dense<0.000000e+00> : vector<16x128xf32>
    %141 = tpu.matmul %140, %99, %cst_105 {dimension_numbers = #tpu.dot_dimension_numbers<[1], [0], [0], [1], [0, 0, 1, 1], [], []>} : vector<16x32xf32>, vector<32x128xf32>, vector<16x128xf32> -> vector<16x128xf32>
    %142 = arith.addf %138, %141 : vector<16x128xf32>
    %c15 = arith.constant 15 : index
    %c0_106 = arith.constant 0 : index
    %c0_107 = arith.constant 0 : index
    %143 = vector.load %arg7[%c15, %c0_106, %c0_107] : memref<16x16x32xf32, #tpu.memory_space<vmem>>, vector<1x16x32xf32>
    %144 = vector.shape_cast %143 : vector<1x16x32xf32> to vector<16x32xf32>
    %cst_108 = arith.constant dense<0.000000e+00> : vector<16x128xf32>
    %145 = tpu.matmul %144, %94, %cst_108 {dimension_numbers = #tpu.dot_dimension_numbers<[1], [0], [0], [1], [0, 0, 1, 1], [], []>} : vector<16x32xf32>, vector<32x128xf32>, vector<16x128xf32> -> vector<16x128xf32>
    %146 = arith.addf %142, %145 : vector<16x128xf32>
    %c0_109 = arith.constant 0 : index
    %c0_110 = arith.constant 0 : index
    %147 = vector.load %arg8[%c0_109, %c0_110] : memref<16x1xf32, #tpu.memory_space<vmem>>, vector<16x1xf32>
    %148 = vector.broadcast %147 : vector<16x1xf32> to vector<16x128xf32>
    %149 = arith.addf %146, %148 : vector<16x128xf32>
    %cst_111 = arith.constant 0.000000e+00 : f32
    %150 = vector.broadcast %cst_111 : f32 to vector<16x128xf32>
    %151 = arith.maximumf %149, %150 : vector<16x128xf32>
    %c0_112 = arith.constant 0 : index
    %c0_113 = arith.constant 0 : index
    %152 = vector.load %arg9[%c0_112, %c0_113] : memref<8x16xf32, #tpu.memory_space<vmem>>, vector<8x16xf32>
    %cst_114 = arith.constant dense<0.000000e+00> : vector<8x128xf32>
    %153 = tpu.matmul %152, %151, %cst_114 {dimension_numbers = #tpu.dot_dimension_numbers<[1], [0], [0], [1], [0, 0, 1, 1], [], []>} : vector<8x16xf32>, vector<16x128xf32>, vector<8x128xf32> -> vector<8x128xf32>
    %c0_115 = arith.constant 0 : index
    %c0_116 = arith.constant 0 : index
    %154 = vector.load %arg10[%c0_115, %c0_116] : memref<8x1xf32, #tpu.memory_space<vmem>>, vector<8x1xf32>
    %155 = vector.broadcast %154 : vector<8x1xf32> to vector<8x128xf32>
    %156 = arith.addf %153, %155 : vector<8x128xf32>
    %c0_117 = arith.constant 0 : index
    %c0_118 = arith.constant 0 : index
    %157 = vector.load %arg11[%c0_117, %c0_118] : memref<32x128xf32, #tpu.memory_space<vmem>>, vector<8x128xf32>
    tpu.vector_store %arg11[%c0_117, %c0_118], %156 {strides = array<i32>} : memref<32x128xf32, #tpu.memory_space<vmem>>, vector<8x128xf32>,
    %cst_119 = arith.constant 0.000000e+00 : f32
    %158 = vector.broadcast %cst_119 : f32 to vector<16x128xf32>
    %c4_120 = arith.constant 4 : index
    %c0_121 = arith.constant 0 : index
    %c0_122 = arith.constant 0 : index
    %159 = vector.load %arg7[%c4_120, %c0_121, %c0_122] : memref<16x16x32xf32, #tpu.memory_space<vmem>>, vector<1x16x32xf32>
    %160 = vector.shape_cast %159 : vector<1x16x32xf32> to vector<16x32xf32>
    %cst_123 = arith.constant dense<0.000000e+00> : vector<16x128xf32>
    %161 = tpu.matmul %160, %114, %cst_123 {dimension_numbers = #tpu.dot_dimension_numbers<[1], [0], [0], [1], [0, 0, 1, 1], [], []>} : vector<16x32xf32>, vector<32x128xf32>, vector<16x128xf32> -> vector<16x128xf32>
    %162 = arith.addf %158, %161 : vector<16x128xf32>
    %c6_124 = arith.constant 6 : index
    %c0_125 = arith.constant 0 : index
    %c0_126 = arith.constant 0 : index
    %163 = vector.load %arg7[%c6_124, %c0_125, %c0_126] : memref<16x16x32xf32, #tpu.memory_space<vmem>>, vector<1x16x32xf32>
    %164 = vector.shape_cast %163 : vector<1x16x32xf32> to vector<16x32xf32>
    %cst_127 = arith.constant dense<0.000000e+00> : vector<16x128xf32>
    %165 = tpu.matmul %164, %89, %cst_127 {dimension_numbers = #tpu.dot_dimension_numbers<[1], [0], [0], [1], [0, 0, 1, 1], [], []>} : vector<16x32xf32>, vector<32x128xf32>, vector<16x128xf32> -> vector<16x128xf32>
    %166 = arith.addf %162, %165 : vector<16x128xf32>
    %c12 = arith.constant 12 : index
    %c0_128 = arith.constant 0 : index
    %c0_129 = arith.constant 0 : index
    %167 = vector.load %arg7[%c12, %c0_128, %c0_129] : memref<16x16x32xf32, #tpu.memory_space<vmem>>, vector<1x16x32xf32>
    %168 = vector.shape_cast %167 : vector<1x16x32xf32> to vector<16x32xf32>
    %cst_130 = arith.constant dense<0.000000e+00> : vector<16x128xf32>
    %169 = tpu.matmul %168, %104, %cst_130 {dimension_numbers = #tpu.dot_dimension_numbers<[1], [0], [0], [1], [0, 0, 1, 1], [], []>} : vector<16x32xf32>, vector<32x128xf32>, vector<16x128xf32> -> vector<16x128xf32>
    %170 = arith.addf %166, %169 : vector<16x128xf32>
    %c14 = arith.constant 14 : index
    %c0_131 = arith.constant 0 : index
    %c0_132 = arith.constant 0 : index
    %171 = vector.load %arg7[%c14, %c0_131, %c0_132] : memref<16x16x32xf32, #tpu.memory_space<vmem>>, vector<1x16x32xf32>
    %172 = vector.shape_cast %171 : vector<1x16x32xf32> to vector<16x32xf32>
    %cst_133 = arith.constant dense<0.000000e+00> : vector<16x128xf32>
    %173 = tpu.matmul %172, %99, %cst_133 {dimension_numbers = #tpu.dot_dimension_numbers<[1], [0], [0], [1], [0, 0, 1, 1], [], []>} : vector<16x32xf32>, vector<32x128xf32>, vector<16x128xf32> -> vector<16x128xf32>
    %174 = arith.addf %170, %173 : vector<16x128xf32>
    %c0_134 = arith.constant 0 : index
    %c0_135 = arith.constant 0 : index
    %175 = vector.load %arg8[%c0_134, %c0_135] : memref<16x1xf32, #tpu.memory_space<vmem>>, vector<16x1xf32>
    %176 = vector.broadcast %175 : vector<16x1xf32> to vector<16x128xf32>
    %177 = arith.addf %174, %176 : vector<16x128xf32>
    %cst_136 = arith.constant 0.000000e+00 : f32
    %178 = vector.broadcast %cst_136 : f32 to vector<16x128xf32>
    %179 = arith.maximumf %177, %178 : vector<16x128xf32>
    %c0_137 = arith.constant 0 : index
    %c0_138 = arith.constant 0 : index
    %180 = vector.load %arg9[%c0_137, %c0_138] : memref<8x16xf32, #tpu.memory_space<vmem>>, vector<8x16xf32>
    %cst_139 = arith.constant dense<0.000000e+00> : vector<8x128xf32>
    %181 = tpu.matmul %180, %179, %cst_139 {dimension_numbers = #tpu.dot_dimension_numbers<[1], [0], [0], [1], [0, 0, 1, 1], [], []>} : vector<8x16xf32>, vector<16x128xf32>, vector<8x128xf32> -> vector<8x128xf32>
    %c0_140 = arith.constant 0 : index
    %c0_141 = arith.constant 0 : index
    %182 = vector.load %arg10[%c0_140, %c0_141] : memref<8x1xf32, #tpu.memory_space<vmem>>, vector<8x1xf32>
    %183 = vector.broadcast %182 : vector<8x1xf32> to vector<8x128xf32>
    %184 = arith.addf %181, %183 : vector<8x128xf32>
    %c8_142 = arith.constant 8 : index
    %c0_143 = arith.constant 0 : index
    %185 = vector.load %arg11[%c8_142, %c0_143] : memref<32x128xf32, #tpu.memory_space<vmem>>, vector<8x128xf32>
    tpu.vector_store %arg11[%c8_142, %c0_143], %184 {strides = array<i32>} : memref<32x128xf32, #tpu.memory_space<vmem>>, vector<8x128xf32>,
    %cst_144 = arith.constant 0.000000e+00 : f32
    %186 = vector.broadcast %cst_144 : f32 to vector<16x128xf32>
    %c1_145 = arith.constant 1 : index
    %c0_146 = arith.constant 0 : index
    %c0_147 = arith.constant 0 : index
    %187 = vector.load %arg7[%c1_145, %c0_146, %c0_147] : memref<16x16x32xf32, #tpu.memory_space<vmem>>, vector<1x16x32xf32>
    %188 = vector.shape_cast %187 : vector<1x16x32xf32> to vector<16x32xf32>
    %cst_148 = arith.constant dense<0.000000e+00> : vector<16x128xf32>
    %189 = tpu.matmul %188, %124, %cst_148 {dimension_numbers = #tpu.dot_dimension_numbers<[1], [0], [0], [1], [0, 0, 1, 1], [], []>} : vector<16x32xf32>, vector<32x128xf32>, vector<16x128xf32> -> vector<16x128xf32>
    %190 = arith.addf %186, %189 : vector<16x128xf32>
    %c3_149 = arith.constant 3 : index
    %c0_150 = arith.constant 0 : index
    %c0_151 = arith.constant 0 : index
    %191 = vector.load %arg7[%c3_149, %c0_150, %c0_151] : memref<16x16x32xf32, #tpu.memory_space<vmem>>, vector<1x16x32xf32>
    %192 = vector.shape_cast %191 : vector<1x16x32xf32> to vector<16x32xf32>
    %cst_152 = arith.constant dense<0.000000e+00> : vector<16x128xf32>
    %193 = tpu.matmul %192, %119, %cst_152 {dimension_numbers = #tpu.dot_dimension_numbers<[1], [0], [0], [1], [0, 0, 1, 1], [], []>} : vector<16x32xf32>, vector<32x128xf32>, vector<16x128xf32> -> vector<16x128xf32>
    %194 = arith.addf %190, %193 : vector<16x128xf32>
    %c9 = arith.constant 9 : index
    %c0_153 = arith.constant 0 : index
    %c0_154 = arith.constant 0 : index
    %195 = vector.load %arg7[%c9, %c0_153, %c0_154] : memref<16x16x32xf32, #tpu.memory_space<vmem>>, vector<1x16x32xf32>
    %196 = vector.shape_cast %195 : vector<1x16x32xf32> to vector<16x32xf32>
    %cst_155 = arith.constant dense<0.000000e+00> : vector<16x128xf32>
    %197 = tpu.matmul %196, %89, %cst_155 {dimension_numbers = #tpu.dot_dimension_numbers<[1], [0], [0], [1], [0, 0, 1, 1], [], []>} : vector<16x32xf32>, vector<32x128xf32>, vector<16x128xf32> -> vector<16x128xf32>
    %198 = arith.addf %194, %197 : vector<16x128xf32>
    %c11 = arith.constant 11 : index
    %c0_156 = arith.constant 0 : index
    %c0_157 = arith.constant 0 : index
    %199 = vector.load %arg7[%c11, %c0_156, %c0_157] : memref<16x16x32xf32, #tpu.memory_space<vmem>>, vector<1x16x32xf32>
    %200 = vector.shape_cast %199 : vector<1x16x32xf32> to vector<16x32xf32>
    %cst_158 = arith.constant dense<0.000000e+00> : vector<16x128xf32>
    %201 = tpu.matmul %200, %109, %cst_158 {dimension_numbers = #tpu.dot_dimension_numbers<[1], [0], [0], [1], [0, 0, 1, 1], [], []>} : vector<16x32xf32>, vector<32x128xf32>, vector<16x128xf32> -> vector<16x128xf32>
    %202 = arith.addf %198, %201 : vector<16x128xf32>
    %c0_159 = arith.constant 0 : index
    %c0_160 = arith.constant 0 : index
    %203 = vector.load %arg8[%c0_159, %c0_160] : memref<16x1xf32, #tpu.memory_space<vmem>>, vector<16x1xf32>
    %204 = vector.broadcast %203 : vector<16x1xf32> to vector<16x128xf32>
    %205 = arith.addf %202, %204 : vector<16x128xf32>
    %cst_161 = arith.constant 0.000000e+00 : f32
    %206 = vector.broadcast %cst_161 : f32 to vector<16x128xf32>
    %207 = arith.maximumf %205, %206 : vector<16x128xf32>
    %c0_162 = arith.constant 0 : index
    %c0_163 = arith.constant 0 : index
    %208 = vector.load %arg9[%c0_162, %c0_163] : memref<8x16xf32, #tpu.memory_space<vmem>>, vector<8x16xf32>
    %cst_164 = arith.constant dense<0.000000e+00> : vector<8x128xf32>
    %209 = tpu.matmul %208, %207, %cst_164 {dimension_numbers = #tpu.dot_dimension_numbers<[1], [0], [0], [1], [0, 0, 1, 1], [], []>} : vector<8x16xf32>, vector<16x128xf32>, vector<8x128xf32> -> vector<8x128xf32>
    %c0_165 = arith.constant 0 : index
    %c0_166 = arith.constant 0 : index
    %210 = vector.load %arg10[%c0_165, %c0_166] : memref<8x1xf32, #tpu.memory_space<vmem>>, vector<8x1xf32>
    %211 = vector.broadcast %210 : vector<8x1xf32> to vector<8x128xf32>
    %212 = arith.addf %209, %211 : vector<8x128xf32>
    %c16 = arith.constant 16 : index
    %c0_167 = arith.constant 0 : index
    %213 = vector.load %arg11[%c16, %c0_167] : memref<32x128xf32, #tpu.memory_space<vmem>>, vector<8x128xf32>
    tpu.vector_store %arg11[%c16, %c0_167], %212 {strides = array<i32>} : memref<32x128xf32, #tpu.memory_space<vmem>>, vector<8x128xf32>,
    %cst_168 = arith.constant 0.000000e+00 : f32
    %214 = vector.broadcast %cst_168 : f32 to vector<16x128xf32>
    %c0_169 = arith.constant 0 : index
    %c0_170 = arith.constant 0 : index
    %c0_171 = arith.constant 0 : index
    %215 = vector.load %arg7[%c0_169, %c0_170, %c0_171] : memref<16x16x32xf32, #tpu.memory_space<vmem>>, vector<1x16x32xf32>
    %216 = vector.shape_cast %215 : vector<1x16x32xf32> to vector<16x32xf32>
    %cst_172 = arith.constant dense<0.000000e+00> : vector<16x128xf32>
    %217 = tpu.matmul %216, %129, %cst_172 {dimension_numbers = #tpu.dot_dimension_numbers<[1], [0], [0], [1], [0, 0, 1, 1], [], []>} : vector<16x32xf32>, vector<32x128xf32>, vector<16x128xf32> -> vector<16x128xf32>
    %218 = arith.addf %214, %217 : vector<16x128xf32>
    %c2_173 = arith.constant 2 : index
    %c0_174 = arith.constant 0 : index
    %c0_175 = arith.constant 0 : index
    %219 = vector.load %arg7[%c2_173, %c0_174, %c0_175] : memref<16x16x32xf32, #tpu.memory_space<vmem>>, vector<1x16x32xf32>
    %220 = vector.shape_cast %219 : vector<1x16x32xf32> to vector<16x32xf32>
    %cst_176 = arith.constant dense<0.000000e+00> : vector<16x128xf32>
    %221 = tpu.matmul %220, %124, %cst_176 {dimension_numbers = #tpu.dot_dimension_numbers<[1], [0], [0], [1], [0, 0, 1, 1], [], []>} : vector<16x32xf32>, vector<32x128xf32>, vector<16x128xf32> -> vector<16x128xf32>
    %222 = arith.addf %218, %221 : vector<16x128xf32>
    %c8_177 = arith.constant 8 : index
    %c0_178 = arith.constant 0 : index
    %c0_179 = arith.constant 0 : index
    %223 = vector.load %arg7[%c8_177, %c0_178, %c0_179] : memref<16x16x32xf32, #tpu.memory_space<vmem>>, vector<1x16x32xf32>
    %224 = vector.shape_cast %223 : vector<1x16x32xf32> to vector<16x32xf32>
    %cst_180 = arith.constant dense<0.000000e+00> : vector<16x128xf32>
    %225 = tpu.matmul %224, %114, %cst_180 {dimension_numbers = #tpu.dot_dimension_numbers<[1], [0], [0], [1], [0, 0, 1, 1], [], []>} : vector<16x32xf32>, vector<32x128xf32>, vector<16x128xf32> -> vector<16x128xf32>
    %226 = arith.addf %222, %225 : vector<16x128xf32>
    %c10 = arith.constant 10 : index
    %c0_181 = arith.constant 0 : index
    %c0_182 = arith.constant 0 : index
    %227 = vector.load %arg7[%c10, %c0_181, %c0_182] : memref<16x16x32xf32, #tpu.memory_space<vmem>>, vector<1x16x32xf32>
    %228 = vector.shape_cast %227 : vector<1x16x32xf32> to vector<16x32xf32>
    %cst_183 = arith.constant dense<0.000000e+00> : vector<16x128xf32>
    %229 = tpu.matmul %228, %89, %cst_183 {dimension_numbers = #tpu.dot_dimension_numbers<[1], [0], [0], [1], [0, 0, 1, 1], [], []>} : vector<16x32xf32>, vector<32x128xf32>, vector<16x128xf32> -> vector<16x128xf32>
    %230 = arith.addf %226, %229 : vector<16x128xf32>
    %c0_184 = arith.constant 0 : index
    %c0_185 = arith.constant 0 : index
    %231 = vector.load %arg8[%c0_184, %c0_185] : memref<16x1xf32, #tpu.memory_space<vmem>>, vector<16x1xf32>
    %232 = vector.broadcast %231 : vector<16x1xf32> to vector<16x128xf32>
    %233 = arith.addf %230, %232 : vector<16x128xf32>
    %cst_186 = arith.constant 0.000000e+00 : f32
    %234 = vector.broadcast %cst_186 : f32 to vector<16x128xf32>
    %235 = arith.maximumf %233, %234 : vector<16x128xf32>
    %c0_187 = arith.constant 0 : index
    %c0_188 = arith.constant 0 : index
    %236 = vector.load %arg9[%c0_187, %c0_188] : memref<8x16xf32, #tpu.memory_space<vmem>>, vector<8x16xf32>
    %cst_189 = arith.constant dense<0.000000e+00> : vector<8x128xf32>
    %237 = tpu.matmul %236, %235, %cst_189 {dimension_numbers = #tpu.dot_dimension_numbers<[1], [0], [0], [1], [0, 0, 1, 1], [], []>} : vector<8x16xf32>, vector<16x128xf32>, vector<8x128xf32> -> vector<8x128xf32>
    %c0_190 = arith.constant 0 : index
    %c0_191 = arith.constant 0 : index
    %238 = vector.load %arg10[%c0_190, %c0_191] : memref<8x1xf32, #tpu.memory_space<vmem>>, vector<8x1xf32>
    %239 = vector.broadcast %238 : vector<8x1xf32> to vector<8x128xf32>
    %240 = arith.addf %237, %239 : vector<8x128xf32>
    %c24 = arith.constant 24 : index
    %c0_192 = arith.constant 0 : index
    %241 = vector.load %arg11[%c24, %c0_192] : memref<32x128xf32, #tpu.memory_space<vmem>>, vector<8x128xf32>
    tpu.vector_store %arg11[%c24, %c0_192], %240 {strides = array<i32>} : memref<32x128xf32, #tpu.memory_space<vmem>>, vector<8x128xf32>,
    return
  }
  func.func @transform_0(%arg0: i32) -> (i32, i32) {
    %c0_i32 = arith.constant 0 : i32
    %c0_i32_0 = arith.constant 0 : i32
    return %c0_i32, %arg0 : i32, i32
  }
  func.func @transform_1(%arg0: i32) -> (i32, i32, i32) {
    %c0_i32 = arith.constant 0 : i32
    %c0_i32_0 = arith.constant 0 : i32
    %c0_i32_1 = arith.constant 0 : i32
    %c0_i32_2 = arith.constant 0 : i32
    return %c0_i32, %c0_i32_0, %c0_i32_1 : i32, i32, i32
  }
  func.func @transform_2(%arg0: i32) -> (i32, i32) {
    %c0_i32 = arith.constant 0 : i32
    %c0_i32_0 = arith.constant 0 : i32
    %c0_i32_1 = arith.constant 0 : i32
    return %c0_i32, %c0_i32_0 : i32, i32
  }
  func.func @transform_3(%arg0: i32) -> (i32, i32) {
    %c0_i32 = arith.constant 0 : i32
    %c0_i32_0 = arith.constant 0 : i32
    %c0_i32_1 = arith.constant 0 : i32
    return %c0_i32, %c0_i32_0 : i32, i32
  }
  func.func @transform_4(%arg0: i32) -> (i32, i32, i32) {
    %c0_i32 = arith.constant 0 : i32
    %c0_i32_0 = arith.constant 0 : i32
    %c0_i32_1 = arith.constant 0 : i32
    %c0_i32_2 = arith.constant 0 : i32
    return %c0_i32, %c0_i32_0, %c0_i32_1 : i32, i32, i32
  }
  func.func @transform_5(%arg0: i32) -> (i32, i32) {
    %c0_i32 = arith.constant 0 : i32
    %c0_i32_0 = arith.constant 0 : i32
    %c0_i32_1 = arith.constant 0 : i32
    return %c0_i32, %c0_i32_0 : i32, i32
  }
  func.func @transform_6(%arg0: i32) -> (i32, i32, i32) {
    %c0_i32 = arith.constant 0 : i32
    %c0_i32_0 = arith.constant 0 : i32
    %c0_i32_1 = arith.constant 0 : i32
    %c0_i32_2 = arith.constant 0 : i32
    return %c0_i32, %c0_i32_0, %c0_i32_1 : i32, i32, i32
  }
  func.func @transform_7(%arg0: i32) -> (i32, i32) {
    %c0_i32 = arith.constant 0 : i32
    %c0_i32_0 = arith.constant 0 : i32
    %c0_i32_1 = arith.constant 0 : i32
    return %c0_i32, %c0_i32_0 : i32, i32
  }
  func.func @transform_8(%arg0: i32) -> (i32, i32) {
    %c0_i32 = arith.constant 0 : i32
    %c0_i32_0 = arith.constant 0 : i32
    %c0_i32_1 = arith.constant 0 : i32
    return %c0_i32, %c0_i32_0 : i32, i32
  }
  func.func @transform_9(%arg0: i32) -> (i32, i32) {
    %c0_i32 = arith.constant 0 : i32
    %c0_i32_0 = arith.constant 0 : i32
    %c0_i32_1 = arith.constant 0 : i32
    return %c0_i32, %c0_i32_0 : i32, i32
  }
  func.func @transform_10(%arg0: i32) -> (i32, i32) {
    %c0_i32 = arith.constant 0 : i32
    %c0_i32_0 = arith.constant 0 : i32
    return %c0_i32, %arg0 : i32, i32
  }
}

</mosaic_0001>

<llo_original>
// kernel: pose_resnet_forward.1
$region0: #{pose_resnet_forward.1}
  #allocation0 [shape = 'u32[]', space=smem, size = 0x4, offset = 0x4, fixed_abs, tag = 'smem constant byte address 0x4 - core index']
  #allocation1 [shape = 'u32[144,128]{1,0:T(1,128)}', space=vmem, size = 0x12000, scoped, tag = 'internal scratch']
  %s0 = inlined_call_operand.vmem [shape: f32[36,128], index: 0, kind: input, shape index: {}]
  %s1 = inlined_call_operand.vmem [shape: f32[9,1,128], index: 1, kind: input, shape index: {}]
  %s2 = inlined_call_operand.vmem [shape: f32[16,36], index: 2, kind: input, shape index: {}]
  %s3 = inlined_call_operand.vmem [shape: f32[16,1], index: 3, kind: input, shape index: {}]
  %s4 = inlined_call_operand.vmem [shape: f32[9,32,16], index: 4, kind: input, shape index: {}]
  %s5 = inlined_call_operand.vmem [shape: f32[32,1], index: 5, kind: input, shape index: {}]
  %s6 = inlined_call_operand.vmem [shape: f32[16,16,32], index: 6, kind: input, shape index: {}]
  %s7 = inlined_call_operand.vmem [shape: f32[16,1], index: 7, kind: input, shape index: {}]
  %s8 = inlined_call_operand.vmem [shape: f32[8,16], index: 8, kind: input, shape index: {}]
  %s9 = inlined_call_operand.vmem [shape: f32[8,1], index: 9, kind: input, shape index: {}]
  %s10 = inlined_call_operand.vmem [shape: f32[32,128], index: 10, kind: output, shape index: {}]
  %s11 = sld [smem:[#allocation0]]
  $region50: #{pose_resnet_forward.1} parent=0
    _
  %s13 = ssub.s32 1, %s11
  %s14 = scalar_select 0, %s13, %s11
  // Predicated region
  $region2: #{pose_resnet_forward.1} parent=0 // pred_check
    _
  $region3: #{pose_resnet_forward.1} parent=0 // pred_check_branch
    %16 = sbr.rel (0) target = $region5
  $region4: #{pose_resnet_forward.1} parent=0 // pred_region
    _
  $region5: #{pose_resnet_forward.1} parent=0 // pred_fallthru
    _
  // Predicated region
  $region6: #{pose_resnet_forward.1} parent=0 // pred_check
    _
  $region7: #{pose_resnet_forward.1} parent=0 // pred_check_branch
    %18 = sbr.rel (0) target = $region9
  $region8: #{pose_resnet_forward.1} parent=0 // pred_region
    _
  $region9: #{pose_resnet_forward.1} parent=0 // pred_fallthru
    _
  // Predicated region
  $region10: #{pose_resnet_forward.1} parent=0 // pred_check
    _
  $region11: #{pose_resnet_forward.1} parent=0 // pred_check_branch
    %20 = sbr.rel (0) target = $region13
  $region12: #{pose_resnet_forward.1} parent=0 // pred_region
    _
  $region13: #{pose_resnet_forward.1} parent=0 // pred_fallthru
    _
  // Predicated region
  $region14: #{pose_resnet_forward.1} parent=0 // pred_check
    _
  $region15: #{pose_resnet_forward.1} parent=0 // pred_check_branch
    %22 = sbr.rel (0) target = $region17
  $region16: #{pose_resnet_forward.1} parent=0 // pred_region
    _
  $region17: #{pose_resnet_forward.1} parent=0 // pred_fallthru
    _
  // Predicated region
  $region18: #{pose_resnet_forward.1} parent=0 // pred_check
    _
  $region19: #{pose_resnet_forward.1} parent=0 // pred_check_branch
    %24 = sbr.rel (0) target = $region21
  $region20: #{pose_resnet_forward.1} parent=0 // pred_region
    _
  $region21: #{pose_resnet_forward.1} parent=0 // pred_fallthru
    _
  // Predicated region
  $region22: #{pose_resnet_forward.1} parent=0 // pred_check
    _
  $region23: #{pose_resnet_forward.1} parent=0 // pred_check_branch
    %26 = sbr.rel (0) target = $region25
  $region24: #{pose_resnet_forward.1} parent=0 // pred_region
    _
  $region25: #{pose_resnet_forward.1} parent=0 // pred_fallthru
    _
  // Predicated region
  $region26: #{pose_resnet_forward.1} parent=0 // pred_check
    _
  $region27: #{pose_resnet_forward.1} parent=0 // pred_check_branch
    %28 = sbr.rel (0) target = $region29
  $region28: #{pose_resnet_forward.1} parent=0 // pred_region
    _
  $region29: #{pose_resnet_forward.1} parent=0 // pred_fallthru
    _
  // Predicated region
  $region30: #{pose_resnet_forward.1} parent=0 // pred_check
    _
  $region31: #{pose_resnet_forward.1} parent=0 // pred_check_branch
    %30 = sbr.rel (0) target = $region33
  $region32: #{pose_resnet_forward.1} parent=0 // pred_region
    _
  $region33: #{pose_resnet_forward.1} parent=0 // pred_fallthru
    _
  // Predicated region
  $region34: #{pose_resnet_forward.1} parent=0 // pred_check
    _
  $region35: #{pose_resnet_forward.1} parent=0 // pred_check_branch
    %32 = sbr.rel (0) target = $region37
  $region36: #{pose_resnet_forward.1} parent=0 // pred_region
    _
  $region37: #{pose_resnet_forward.1} parent=0 // pred_fallthru
    _
  // Predicated region
  $region38: #{pose_resnet_forward.1} parent=0 // pred_check
    _
  $region39: #{pose_resnet_forward.1} parent=0 // pred_check_branch
    %34 = sbr.rel (0) target = $region41
  $region40: #{pose_resnet_forward.1} parent=0 // pred_region
    _
  $region41: #{pose_resnet_forward.1} parent=0 // pred_fallthru
    _
  %v35 = vld [vmem:[%s2] sm:$0xff]
  %v36 = vld [vmem:[%s2 + $0x8] sm:$0xff]
  %v37 = vld [vmem:[%s0] sm:$0xff]
  %v38 = vld [vmem:[%s0 + $0x8] sm:$0xff]
  %v39 = vld [vmem:[%s0 + $0x10] sm:$0xff]
  %v40 = vld [vmem:[%s0 + $0x18] sm:$0xff]
  %v41 = vld [vmem:[%s0 + $0x20] sm:$0xf]
  %v42 = vld [vmem:[%s3] sm:$0xff]
  %v43 = vld [vmem:[%s3 + $0x8] sm:$0xff]
  %45 = vset.pattern.permute.xlu0 0
  %46 = vperm.xlu0 %45, %v42
  %v47 = vpop.permute.xlu0 %46
  %50 = vset.pattern.permute.xlu0 0
  %51 = vperm.xlu0 %50, %v43
  %v52 = vpop.permute.xlu0 %51
  %vm54 = vcmask 293888
  %v56 = vsel %vm54, %v35, 0
  %v59 = vsel %vm54, %v36, 0
  %vm61 = vcmask 1043456
  %v63 = vsel %vm61, %v41, 0
  %65 = vmatprep.subr.mxu0 0.0
  %66 = vmatpush1.msra.mxu0 %v37
  %67 = vmatprep.subr.mxu0 0.0
  %68 = vmatpush1.msra.mxu0 %v38
  %69 = vmatprep.subr.mxu0 0.0
  %70 = vmatpush1.msra.mxu0 %v39
  %71 = vmatprep.subr.mxu0 0.0
  %72 = vmatpush1.msra.mxu0 %v40
  %73 = vmatprep.subr.mxu0 0.0
  %74 = vmatpush1.msra.mxu0 %v63
  %75 = vmatprep.subr.mxu0 0.0
  %76 = vmatpush1.msra.mxu0 0.0
  %77 = vmatprep.subr.mxu0 0.0
  %78 = vmatpush1.msra.mxu0 0.0
  %79 = vmatprep.subr.mxu0 0.0
  %80 = vmatpush1.msra.mxu0 0.0
  %81 = vmatprep.subr.mxu0 0.0
  %82 = vmatpush1.msra.mxu0 0.0
  %83 = vmatprep.subr.mxu0 0.0
  %84 = vmatpush1.msra.mxu0 0.0
  %85 = vmatprep.subr.mxu0 0.0
  %86 = vmatpush1.msra.mxu0 0.0
  %87 = vmatprep.subr.mxu0 0.0
  %88 = vmatpush1.msra.mxu0 0.0
  %89 = vmatprep.subr.mxu0 0.0
  %90 = vmatpush1.msra.mxu0 0.0
  %91 = vmatprep.subr.mxu0 0.0
  %92 = vmatpush1.msra.mxu0 0.0
  %93 = vmatprep.subr.mxu0 0.0
  %94 = vmatpush1.msra.mxu0 0.0
  %95 = vmatprep.subr.mxu0 0.0
  %96 = vmatpush1.msra.mxu0 0.0
  %97 = vmatprep.subr.mxu0 0.0
  %98 = vmatpush1.msra.mxu0 0.0
  %99 = vmatprep.subr.mxu0 0.0
  %100 = vmatpush1.msra.mxu0 0.0
  %101 = vmatprep.subr.mxu0 0.0
  %102 = vmatpush1.msra.mxu0 0.0
  %103 = vmatprep.subr.mxu0 0.0
  %104 = vmatpush1.msra.mxu0 0.0
  %105 = vmatprep.subr.mxu0 0.0
  %106 = vmatpush1.msra.mxu0 0.0
  %107 = vmatprep.subr.mxu0 0.0
  %108 = vmatpush1.msra.mxu0 0.0
  %109 = vmatprep.subr.mxu0 0.0
  %110 = vmatpush1.msra.mxu0 0.0
  %111 = vmatprep.subr.mxu0 0.0
  %112 = vmatpush1.msra.mxu0 0.0
  %113 = vmatprep.subr.mxu0 0.0
  %114 = vmatpush1.msra.mxu0 0.0
  %115 = vmatprep.subr.mxu0 0.0
  %116 = vmatpush1.msra.mxu0 0.0
  %117 = vmatprep.subr.mxu0 0.0
  %118 = vmatpush1.msra.mxu0 0.0
  %119 = vmatprep.subr.mxu0 0.0
  %120 = vmatpush1.msra.mxu0 0.0
  %121 = vmatprep.subr.mxu0 0.0
  %122 = vmatpush1.msra.mxu0 0.0
  %123 = vmatprep.subr.mxu0 0.0
  %124 = vmatpush1.msra.mxu0 0.0
  %125 = vmatprep.subr.mxu0 0.0
  %126 = vmatpush1.msra.mxu0 0.0
  %127 = vmatprep.subr.mxu0 0.0
  %128 = vmatpush1.msra.mxu0 0.0
  %129 = vmatprep.mubr.f32.mxu0 0.0
  %130 = vmatmul.mubr.f32.gmra.mrb[0].mxu0 %v56
  %v131 = vpop.f32.mrb[0].mxu0
  %v132 = vadd.f32 %v47, %v131
  %v133 = vpop.f32.mrb[0].mxu0
  %134 = vmatprep.mubr.f32.mxu0 0.0
  %135 = vmatmul.mubr.f32.gmra.mrb[0].mxu0 %v59
  %v136 = vpop.f32.mrb[0].mxu0
  %v137 = vadd.f32 %v52, %v136
  %v138 = vpop.f32.mrb[0].mxu0
  %139 = vdwg.mxu0
  %v140 = vmax.f32 %v132, 0.0
  %v141 = vmax.f32 %v137, 0.0
  %v142 = vld [vmem:[%s4] sm:$0xff]
  %v143 = vld [vmem:[%s4 + $0x8] sm:$0xff]
  %v144 = vld [vmem:[%s4 + $0x10] sm:$0xff]
  %v145 = vld [vmem:[%s4 + $0x18] sm:$0xff]
  %146 = vrot.lane.b32.xlu0 %v140, 9
  %v147 = vpop.permute.xlu0 %146
  %148 = vrot.lane.b32.xlu0 %v141, 9
  %v149 = vpop.permute.xlu0 %148
  %v150 = vld [vmem:[%s1] sm:$0x1]
  %v152 = vlaneseq
  %v153 = vshrl.u32 %v152, 7
  %v154 = vsub.s32 0, %v153
  %v155 = vrot.slane %v150, %v154
  %v157 = vmul.f32 %v147, %v155
  %v158 = vmul.f32 %v149, %v155
  %s159 = scalar_lea.vmem %s4, 32
  %v160 = vld [vmem:[%s159] sm:$0xff]
  %v161 = vld [vmem:[%s159 + $0x8] sm:$0xff]
  %v162 = vld [vmem:[%s159 + $0x10] sm:$0xff]
  %v163 = vld [vmem:[%s159 + $0x18] sm:$0xff]
  %164 = vrot.lane.b32.xlu0 %v140, 8
  %v165 = vpop.permute.xlu0 %164
  %166 = vrot.lane.b32.xlu0 %v141, 8
  %v167 = vpop.permute.xlu0 %166
  %s168 = scalar_lea.vmem %s1, 1
  %v169 = vld [vmem:[%s168] sm:$0x1]
  %v171 = vlaneseq
  %v172 = vshrl.u32 %v171, 7
  %v173 = vsub.s32 0, %v172
  %v174 = vrot.slane %v169, %v173
  %v176 = vmul.f32 %v165, %v174
  %v177 = vmul.f32 %v167, %v174
  %vm178 = vcmask 130048
  %v180 = vsel %vm178, %v160, 0
  %v183 = vsel %vm178, %v161, 0
  %v186 = vsel %vm178, %v162, 0
  %v189 = vsel %vm178, %v163, 0
  %191 = vmatprep.subr.mxu0 0.0
  %192 = vmatpush1.msra.mxu0 %v176
  %193 = vmatprep.subr.mxu0 0.0
  %194 = vmatpush1.msra.mxu0 %v177
  %195 = vmatprep.subr.mxu0 0.0
  %196 = vmatpush1.msra.mxu0 0.0
  %197 = vmatprep.subr.mxu0 0.0
  %198 = vmatpush1.msra.mxu0 0.0
  %199 = vmatprep.subr.mxu0 0.0
  %200 = vmatpush1.msra.mxu0 0.0
  %201 = vmatprep.subr.mxu0 0.0
  %202 = vmatpush1.msra.mxu0 0.0
  %203 = vmatprep.subr.mxu0 0.0
  %204 = vmatpush1.msra.mxu0 0.0
  %205 = vmatprep.subr.mxu0 0.0
  %206 = vmatpush1.msra.mxu0 0.0
  %207 = vmatprep.subr.mxu0 0.0
  %208 = vmatpush1.msra.mxu0 0.0
  %209 = vmatprep.subr.mxu0 0.0
  %210 = vmatpush1.msra.mxu0 0.0
  %211 = vmatprep.subr.mxu0 0.0
  %212 = vmatpush1.msra.mxu0 0.0
  %213 = vmatprep.subr.mxu0 0.0
  %214 = vmatpush1.msra.mxu0 0.0
  %215 = vmatprep.subr.mxu0 0.0
  %216 = vmatpush1.msra.mxu0 0.0
  %217 = vmatprep.subr.mxu0 0.0
  %218 = vmatpush1.msra.mxu0 0.0
  %219 = vmatprep.subr.mxu0 0.0
  %220 = vmatpush1.msra.mxu0 0.0
  %221 = vmatprep.subr.mxu0 0.0
  %222 = vmatpush1.msra.mxu0 0.0
  %223 = vmatprep.subr.mxu0 0.0
  %224 = vmatpush1.msra.mxu0 0.0
  %225 = vmatprep.subr.mxu0 0.0
  %226 = vmatpush1.msra.mxu0 0.0
  %227 = vmatprep.subr.mxu0 0.0
  %228 = vmatpush1.msra.mxu0 0.0
  %229 = vmatprep.subr.mxu0 0.0
  %230 = vmatpush1.msra.mxu0 0.0
  %231 = vmatprep.subr.mxu0 0.0
  %232 = vmatpush1.msra.mxu0 0.0
  %233 = vmatprep.subr.mxu0 0.0
  %234 = vmatpush1.msra.mxu0 0.0
  %235 = vmatprep.subr.mxu0 0.0
  %236 = vmatpush1.msra.mxu0 0.0
  %237 = vmatprep.subr.mxu0 0.0
  %238 = vmatpush1.msra.mxu0 0.0
  %239 = vmatprep.subr.mxu0 0.0
  %240 = vmatpush1.msra.mxu0 0.0
  %241 = vmatprep.subr.mxu0 0.0
  %242 = vmatpush1.msra.mxu0 0.0
  %243 = vmatprep.subr.mxu0 0.0
  %244 = vmatpush1.msra.mxu0 0.0
  %245 = vmatprep.subr.mxu0 0.0
  %246 = vmatpush1.msra.mxu0 0.0
  %247 = vmatprep.subr.mxu0 0.0
  %248 = vmatpush1.msra.mxu0 0.0
  %249 = vmatprep.subr.mxu0 0.0
  %250 = vmatpush1.msra.mxu0 0.0
  %251 = vmatprep.subr.mxu0 0.0
  %252 = vmatpush1.msra.mxu0 0.0
  %253 = vmatprep.subr.mxu0 0.0
  %254 = vmatpush1.msra.mxu0 0.0
  %255 = vmatprep.mubr.f32.mxu0 0.0
  %256 = vmatmul.mubr.f32.gmra.mrb[0].mxu0 %v180
  %v257 = vpop.f32.mrb[0].mxu0
  %v258 = vadd.f32 0.0, %v257
  %v259 = vpop.f32.mrb[0].mxu0
  %260 = vmatprep.mubr.f32.mxu0 0.0
  %261 = vmatmul.mubr.f32.gmra.mrb[0].mxu0 %v183
  %v262 = vpop.f32.mrb[0].mxu0
  %v263 = vadd.f32 0.0, %v262
  %v264 = vpop.f32.mrb[0].mxu0
  %265 = vmatprep.mubr.f32.mxu0 0.0
  %266 = vmatmul.mubr.f32.gmra.mrb[0].mxu0 %v186
  %v267 = vpop.f32.mrb[0].mxu0
  %v268 = vadd.f32 0.0, %v267
  %v269 = vpop.f32.mrb[0].mxu0
  %270 = vmatprep.mubr.f32.mxu0 0.0
  %271 = vmatmul.mubr.f32.gmra.mrb[0].mxu0 %v189
  %v272 = vpop.f32.mrb[0].mxu0
  %v273 = vadd.f32 0.0, %v272
  %v274 = vpop.f32.mrb[0].mxu0
  %275 = vdwg.mxu0
  %v277 = vsel %vm178, %v142, 0
  %v280 = vsel %vm178, %v143, 0
  %v283 = vsel %vm178, %v144, 0
  %v286 = vsel %vm178, %v145, 0
  %288 = vmatprep.subr.mxu0 0.0
  %289 = vmatpush1.msra.mxu0 %v157
  %290 = vmatprep.subr.mxu0 0.0
  %291 = vmatpush1.msra.mxu0 %v158
  %292 = vmatprep.subr.mxu0 0.0
  %293 = vmatpush1.msra.mxu0 0.0
  %294 = vmatprep.subr.mxu0 0.0
  %295 = vmatpush1.msra.mxu0 0.0
  %296 = vmatprep.subr.mxu0 0.0
  %297 = vmatpush1.msra.mxu0 0.0
  %298 = vmatprep.subr.mxu0 0.0
  %299 = vmatpush1.msra.mxu0 0.0
  %300 = vmatprep.subr.mxu0 0.0
  %301 = vmatpush1.msra.mxu0 0.0
  %302 = vmatprep.subr.mxu0 0.0
  %303 = vmatpush1.msra.mxu0 0.0
  %304 = vmatprep.subr.mxu0 0.0
  %305 = vmatpush1.msra.mxu0 0.0
  %306 = vmatprep.subr.mxu0 0.0
  %307 = vmatpush1.msra.mxu0 0.0
  %308 = vmatprep.subr.mxu0 0.0
  %309 = vmatpush1.msra.mxu0 0.0
  %310 = vmatprep.subr.mxu0 0.0
  %311 = vmatpush1.msra.mxu0 0.0
  %312 = vmatprep.subr.mxu0 0.0
  %313 = vmatpush1.msra.mxu0 0.0
  %314 = vmatprep.subr.mxu0 0.0
  %315 = vmatpush1.msra.mxu0 0.0
  %316 = vmatprep.subr.mxu0 0.0
  %317 = vmatpush1.msra.mxu0 0.0
  %318 = vmatprep.subr.mxu0 0.0
  %319 = vmatpush1.msra.mxu0 0.0
  %320 = vmatprep.subr.mxu0 0.0
  %321 = vmatpush1.msra.mxu0 0.0
  %322 = vmatprep.subr.mxu0 0.0
  %323 = vmatpush1.msra.mxu0 0.0
  %324 = vmatprep.subr.mxu0 0.0
  %325 = vmatpush1.msra.mxu0 0.0
  %326 = vmatprep.subr.mxu0 0.0
  %327 = vmatpush1.msra.mxu0 0.0
  %328 = vmatprep.subr.mxu0 0.0
  %329 = vmatpush1.msra.mxu0 0.0
  %330 = vmatprep.subr.mxu0 0.0
  %331 = vmatpush1.msra.mxu0 0.0
  %332 = vmatprep.subr.mxu0 0.0
  %333 = vmatpush1.msra.mxu0 0.0
  %334 = vmatprep.subr.mxu0 0.0
  %335 = vmatpush1.msra.mxu0 0.0
  %336 = vmatprep.subr.mxu0 0.0
  %337 = vmatpush1.msra.mxu0 0.0
  %338 = vmatprep.subr.mxu0 0.0
  %339 = vmatpush1.msra.mxu0 0.0
  %340 = vmatprep.subr.mxu0 0.0
  %341 = vmatpush1.msra.mxu0 0.0
  %342 = vmatprep.subr.mxu0 0.0
  %343 = vmatpush1.msra.mxu0 0.0
  %344 = vmatprep.subr.mxu0 0.0
  %345 = vmatpush1.msra.mxu0 0.0
  %346 = vmatprep.subr.mxu0 0.0
  %347 = vmatpush1.msra.mxu0 0.0
  %348 = vmatprep.subr.mxu0 0.0
  %349 = vmatpush1.msra.mxu0 0.0
  %350 = vmatprep.subr.mxu0 0.0
  %351 = vmatpush1.msra.mxu0 0.0
  %352 = vmatprep.mubr.f32.mxu0 0.0
  %353 = vmatmul.mubr.f32.gmra.mrb[0].mxu0 %v277
  %v354 = vpop.f32.mrb[0].mxu0
  %v355 = vadd.f32 %v258, %v354
  %v356 = vpop.f32.mrb[0].mxu0
  %357 = vmatprep.mubr.f32.mxu0 0.0
  %358 = vmatmul.mubr.f32.gmra.mrb[0].mxu0 %v280
  %v359 = vpop.f32.mrb[0].mxu0
  %v360 = vadd.f32 %v263, %v359
  %v361 = vpop.f32.mrb[0].mxu0
  %362 = vmatprep.mubr.f32.mxu0 0.0
  %363 = vmatmul.mubr.f32.gmra.mrb[0].mxu0 %v283
  %v364 = vpop.f32.mrb[0].mxu0
  %v365 = vadd.f32 %v268, %v364
  %v366 = vpop.f32.mrb[0].mxu0
  %367 = vmatprep.mubr.f32.mxu0 0.0
  %368 = vmatmul.mubr.f32.gmra.mrb[0].mxu0 %v286
  %v369 = vpop.f32.mrb[0].mxu0
  %v370 = vadd.f32 %v273, %v369
  %v371 = vpop.f32.mrb[0].mxu0
  %372 = vdwg.mxu0
  %s373 = scalar_lea.vmem %s4, 64
  %v374 = vld [vmem:[%s373] sm:$0xff]
  %v375 = vld [vmem:[%s373 + $0x8] sm:$0xff]
  %v376 = vld [vmem:[%s373 + $0x10] sm:$0xff]
  %v377 = vld [vmem:[%s373 + $0x18] sm:$0xff]
  %378 = vrot.lane.b32.xlu0 %v140, 7
  %v379 = vpop.permute.xlu0 %378
  %380 = vrot.lane.b32.xlu0 %v141, 7
  %v381 = vpop.permute.xlu0 %380
  %s382 = scalar_lea.vmem %s1, 2
  %v383 = vld [vmem:[%s382] sm:$0x1]
  %v385 = vlaneseq
  %v386 = vshrl.u32 %v385, 7
  %v387 = vsub.s32 0, %v386
  %v388 = vrot.slane %v383, %v387
  %v390 = vmul.f32 %v379, %v388
  %v391 = vmul.f32 %v381, %v388
  %v393 = vsel %vm178, %v374, 0
  %v396 = vsel %vm178, %v375, 0
  %v399 = vsel %vm178, %v376, 0
  %v402 = vsel %vm178, %v377, 0
  %404 = vmatprep.subr.mxu0 0.0
  %405 = vmatpush1.msra.mxu0 %v390
  %406 = vmatprep.subr.mxu0 0.0
  %407 = vmatpush1.msra.mxu0 %v391
  %408 = vmatprep.subr.mxu0 0.0
  %409 = vmatpush1.msra.mxu0 0.0
  %410 = vmatprep.subr.mxu0 0.0
  %411 = vmatpush1.msra.mxu0 0.0
  %412 = vmatprep.subr.mxu0 0.0
  %413 = vmatpush1.msra.mxu0 0.0
  %414 = vmatprep.subr.mxu0 0.0
  %415 = vmatpush1.msra.mxu0 0.0
  %416 = vmatprep.subr.mxu0 0.0
  %417 = vmatpush1.msra.mxu0 0.0
  %418 = vmatprep.subr.mxu0 0.0
  %419 = vmatpush1.msra.mxu0 0.0
  %420 = vmatprep.subr.mxu0 0.0
  %421 = vmatpush1.msra.mxu0 0.0
  %422 = vmatprep.subr.mxu0 0.0
  %423 = vmatpush1.msra.mxu0 0.0
  %424 = vmatprep.subr.mxu0 0.0
  %425 = vmatpush1.msra.mxu0 0.0
  %426 = vmatprep.subr.mxu0 0.0
  %427 = vmatpush1.msra.mxu0 0.0
  %428 = vmatprep.subr.mxu0 0.0
  %429 = vmatpush1.msra.mxu0 0.0
  %430 = vmatprep.subr.mxu0 0.0
  %431 = vmatpush1.msra.mxu0 0.0
  %432 = vmatprep.subr.mxu0 0.0
  %433 = vmatpush1.msra.mxu0 0.0
  %434 = vmatprep.subr.mxu0 0.0
  %435 = vmatpush1.msra.mxu0 0.0
  %436 = vmatprep.subr.mxu0 0.0
  %437 = vmatpush1.msra.mxu0 0.0
  %438 = vmatprep.subr.mxu0 0.0
  %439 = vmatpush1.msra.mxu0 0.0
  %440 = vmatprep.subr.mxu0 0.0
  %441 = vmatpush1.msra.mxu0 0.0
  %442 = vmatprep.subr.mxu0 0.0
  %443 = vmatpush1.msra.mxu0 0.0
  %444 = vmatprep.subr.mxu0 0.0
  %445 = vmatpush1.msra.mxu0 0.0
  %446 = vmatprep.subr.mxu0 0.0
  %447 = vmatpush1.msra.mxu0 0.0
  %448 = vmatprep.subr.mxu0 0.0
  %449 = vmatpush1.msra.mxu0 0.0
  %450 = vmatprep.subr.mxu0 0.0
  %451 = vmatpush1.msra.mxu0 0.0
  %452 = vmatprep.subr.mxu0 0.0
  %453 = vmatpush1.msra.mxu0 0.0
  %454 = vmatprep.subr.mxu0 0.0
  %455 = vmatpush1.msra.mxu0 0.0
  %456 = vmatprep.subr.mxu0 0.0
  %457 = vmatpush1.msra.mxu0 0.0
  %458 = vmatprep.subr.mxu0 0.0
  %459 = vmatpush1.msra.mxu0 0.0
  %460 = vmatprep.subr.mxu0 0.0
  %461 = vmatpush1.msra.mxu0 0.0
  %462 = vmatprep.subr.mxu0 0.0
  %463 = vmatpush1.msra.mxu0 0.0
  %464 = vmatprep.subr.mxu0 0.0
  %465 = vmatpush1.msra.mxu0 0.0
  %466 = vmatprep.subr.mxu0 0.0
  %467 = vmatpush1.msra.mxu0 0.0
  %468 = vmatprep.mubr.f32.mxu0 0.0
  %469 = vmatmul.mubr.f32.gmra.mrb[0].mxu0 %v393
  %v470 = vpop.f32.mrb[0].mxu0
  %v471 = vadd.f32 0.0, %v470
  %v472 = vpop.f32.mrb[0].mxu0
  %473 = vmatprep.mubr.f32.mxu0 0.0
  %474 = vmatmul.mubr.f32.gmra.mrb[0].mxu0 %v396
  %v475 = vpop.f32.mrb[0].mxu0
  %v476 = vadd.f32 0.0, %v475
  %v477 = vpop.f32.mrb[0].mxu0
  %478 = vmatprep.mubr.f32.mxu0 0.0
  %479 = vmatmul.mubr.f32.gmra.mrb[0].mxu0 %v399
  %v480 = vpop.f32.mrb[0].mxu0
  %v481 = vadd.f32 0.0, %v480
  %v482 = vpop.f32.mrb[0].mxu0
  %483 = vmatprep.mubr.f32.mxu0 0.0
  %484 = vmatmul.mubr.f32.gmra.mrb[0].mxu0 %v402
  %v485 = vpop.f32.mrb[0].mxu0
  %v486 = vadd.f32 0.0, %v485
  %v487 = vpop.f32.mrb[0].mxu0
  %488 = vdwg.mxu0
  %v489 = vadd.f32 %v355, %v471
  %v490 = vadd.f32 %v360, %v476
  %v491 = vadd.f32 %v365, %v481
  %v492 = vadd.f32 %v370, %v486
  %s493 = scalar_lea.vmem %s4, 96
  %v494 = vld [vmem:[%s493] sm:$0xff]
  %v495 = vld [vmem:[%s493 + $0x8] sm:$0xff]
  %v496 = vld [vmem:[%s493 + $0x10] sm:$0xff]
  %v497 = vld [vmem:[%s493 + $0x18] sm:$0xff]
  %498 = vrot.lane.b32.xlu0 %v140, 1
  %v499 = vpop.permute.xlu0 %498
  %500 = vrot.lane.b32.xlu0 %v141, 1
  %v501 = vpop.permute.xlu0 %500
  %s502 = scalar_lea.vmem %s1, 3
  %v503 = vld [vmem:[%s502] sm:$0x1]
  %v505 = vlaneseq
  %v506 = vshrl.u32 %v505, 7
  %v507 = vsub.s32 0, %v506
  %v508 = vrot.slane %v503, %v507
  %v510 = vmul.f32 %v499, %v508
  %v511 = vmul.f32 %v501, %v508
  %v513 = vsel %vm178, %v494, 0
  %v516 = vsel %vm178, %v495, 0
  %v519 = vsel %vm178, %v496, 0
  %v522 = vsel %vm178, %v497, 0
  %524 = vmatprep.subr.mxu0 0.0
  %525 = vmatpush1.msra.mxu0 %v510
  %526 = vmatprep.subr.mxu0 0.0
  %527 = vmatpush1.msra.mxu0 %v511
  %528 = vmatprep.subr.mxu0 0.0
  %529 = vmatpush1.msra.mxu0 0.0
  %530 = vmatprep.subr.mxu0 0.0
  %531 = vmatpush1.msra.mxu0 0.0
  %532 = vmatprep.subr.mxu0 0.0
  %533 = vmatpush1.msra.mxu0 0.0
  %534 = vmatprep.subr.mxu0 0.0
  %535 = vmatpush1.msra.mxu0 0.0
  %536 = vmatprep.subr.mxu0 0.0
  %537 = vmatpush1.msra.mxu0 0.0
  %538 = vmatprep.subr.mxu0 0.0
  %539 = vmatpush1.msra.mxu0 0.0
  %540 = vmatprep.subr.mxu0 0.0
  %541 = vmatpush1.msra.mxu0 0.0
  %542 = vmatprep.subr.mxu0 0.0
  %543 = vmatpush1.msra.mxu0 0.0
  %544 = vmatprep.subr.mxu0 0.0
  %545 = vmatpush1.msra.mxu0 0.0
  %546 = vmatprep.subr.mxu0 0.0
  %547 = vmatpush1.msra.mxu0 0.0
  %548 = vmatprep.subr.mxu0 0.0
  %549 = vmatpush1.msra.mxu0 0.0
  %550 = vmatprep.subr.mxu0 0.0
  %551 = vmatpush1.msra.mxu0 0.0
  %552 = vmatprep.subr.mxu0 0.0
  %553 = vmatpush1.msra.mxu0 0.0
  %554 = vmatprep.subr.mxu0 0.0
  %555 = vmatpush1.msra.mxu0 0.0
  %556 = vmatprep.subr.mxu0 0.0
  %557 = vmatpush1.msra.mxu0 0.0
  %558 = vmatprep.subr.mxu0 0.0
  %559 = vmatpush1.msra.mxu0 0.0
  %560 = vmatprep.subr.mxu0 0.0
  %561 = vmatpush1.msra.mxu0 0.0
  %562 = vmatprep.subr.mxu0 0.0
  %563 = vmatpush1.msra.mxu0 0.0
  %564 = vmatprep.subr.mxu0 0.0
  %565 = vmatpush1.msra.mxu0 0.0
  %566 = vmatprep.subr.mxu0 0.0
  %567 = vmatpush1.msra.mxu0 0.0
  %568 = vmatprep.subr.mxu0 0.0
  %569 = vmatpush1.msra.mxu0 0.0
  %570 = vmatprep.subr.mxu0 0.0
  %571 = vmatpush1.msra.mxu0 0.0
  %572 = vmatprep.subr.mxu0 0.0
  %573 = vmatpush1.msra.mxu0 0.0
  %574 = vmatprep.subr.mxu0 0.0
  %575 = vmatpush1.msra.mxu0 0.0
  %576 = vmatprep.subr.mxu0 0.0
  %577 = vmatpush1.msra.mxu0 0.0
  %578 = vmatprep.subr.mxu0 0.0
  %579 = vmatpush1.msra.mxu0 0.0
  %580 = vmatprep.subr.mxu0 0.0
  %581 = vmatpush1.msra.mxu0 0.0
  %582 = vmatprep.subr.mxu0 0.0
  %583 = vmatpush1.msra.mxu0 0.0
  %584 = vmatprep.subr.mxu0 0.0
  %585 = vmatpush1.msra.mxu0 0.0
  %586 = vmatprep.subr.mxu0 0.0
  %587 = vmatpush1.msra.mxu0 0.0
  %588 = vmatprep.mubr.f32.mxu0 0.0
  %589 = vmatmul.mubr.f32.gmra.mrb[0].mxu0 %v513
  %v590 = vpop.f32.mrb[0].mxu0
  %v591 = vadd.f32 0.0, %v590
  %v592 = vpop.f32.mrb[0].mxu0
  %593 = vmatprep.mubr.f32.mxu0 0.0
  %594 = vmatmul.mubr.f32.gmra.mrb[0].mxu0 %v516
  %v595 = vpop.f32.mrb[0].mxu0
  %v596 = vadd.f32 0.0, %v595
  %v597 = vpop.f32.mrb[0].mxu0
  %598 = vmatprep.mubr.f32.mxu0 0.0
  %599 = vmatmul.mubr.f32.gmra.mrb[0].mxu0 %v519
  %v600 = vpop.f32.mrb[0].mxu0
  %v601 = vadd.f32 0.0, %v600
  %v602 = vpop.f32.mrb[0].mxu0
  %603 = vmatprep.mubr.f32.mxu0 0.0
  %604 = vmatmul.mubr.f32.gmra.mrb[0].mxu0 %v522
  %v605 = vpop.f32.mrb[0].mxu0
  %v606 = vadd.f32 0.0, %v605
  %v607 = vpop.f32.mrb[0].mxu0
  %608 = vdwg.mxu0
  %v609 = vadd.f32 %v489, %v591
  %v610 = vadd.f32 %v490, %v596
  %v611 = vadd.f32 %v491, %v601
  %v612 = vadd.f32 %v492, %v606
  %s613 = scalar_lea.vmem %s4, 128
  %v614 = vld [vmem:[%s613] sm:$0xff]
  %v615 = vld [vmem:[%s613 + $0x8] sm:$0xff]
  %v616 = vld [vmem:[%s613 + $0x10] sm:$0xff]
  %v617 = vld [vmem:[%s613 + $0x18] sm:$0xff]
  %v619 = vsel %vm178, %v614, 0
  %v622 = vsel %vm178, %v615, 0
  %v625 = vsel %vm178, %v616, 0
  %v628 = vsel %vm178, %v617, 0
  %630 = vmatprep.subr.mxu0 0.0
  %631 = vmatpush1.msra.mxu0 %v140
  %632 = vmatprep.subr.mxu0 0.0
  %633 = vmatpush1.msra.mxu0 %v141
  %634 = vmatprep.subr.mxu0 0.0
  %635 = vmatpush1.msra.mxu0 0.0
  %636 = vmatprep.subr.mxu0 0.0
  %637 = vmatpush1.msra.mxu0 0.0
  %638 = vmatprep.subr.mxu0 0.0
  %639 = vmatpush1.msra.mxu0 0.0
  %640 = vmatprep.subr.mxu0 0.0
  %641 = vmatpush1.msra.mxu0 0.0
  %642 = vmatprep.subr.mxu0 0.0
  %643 = vmatpush1.msra.mxu0 0.0
  %644 = vmatprep.subr.mxu0 0.0
  %645 = vmatpush1.msra.mxu0 0.0
  %646 = vmatprep.subr.mxu0 0.0
  %647 = vmatpush1.msra.mxu0 0.0
  %648 = vmatprep.subr.mxu0 0.0
  %649 = vmatpush1.msra.mxu0 0.0
  %650 = vmatprep.subr.mxu0 0.0
  %651 = vmatpush1.msra.mxu0 0.0
  %652 = vmatprep.subr.mxu0 0.0
  %653 = vmatpush1.msra.mxu0 0.0
  %654 = vmatprep.subr.mxu0 0.0
  %655 = vmatpush1.msra.mxu0 0.0
  %656 = vmatprep.subr.mxu0 0.0
  %657 = vmatpush1.msra.mxu0 0.0
  %658 = vmatprep.subr.mxu0 0.0
  %659 = vmatpush1.msra.mxu0 0.0
  %660 = vmatprep.subr.mxu0 0.0
  %661 = vmatpush1.msra.mxu0 0.0
  %662 = vmatprep.subr.mxu0 0.0
  %663 = vmatpush1.msra.mxu0 0.0
  %664 = vmatprep.subr.mxu0 0.0
  %665 = vmatpush1.msra.mxu0 0.0
  %666 = vmatprep.subr.mxu0 0.0
  %667 = vmatpush1.msra.mxu0 0.0
  %668 = vmatprep.subr.mxu0 0.0
  %669 = vmatpush1.msra.mxu0 0.0
  %670 = vmatprep.subr.mxu0 0.0
  %671 = vmatpush1.msra.mxu0 0.0
  %672 = vmatprep.subr.mxu0 0.0
  %673 = vmatpush1.msra.mxu0 0.0
  %674 = vmatprep.subr.mxu0 0.0
  %675 = vmatpush1.msra.mxu0 0.0
  %676 = vmatprep.subr.mxu0 0.0
  %677 = vmatpush1.msra.mxu0 0.0
  %678 = vmatprep.subr.mxu0 0.0
  %679 = vmatpush1.msra.mxu0 0.0
  %680 = vmatprep.subr.mxu0 0.0
  %681 = vmatpush1.msra.mxu0 0.0
  %682 = vmatprep.subr.mxu0 0.0
  %683 = vmatpush1.msra.mxu0 0.0
  %684 = vmatprep.subr.mxu0 0.0
  %685 = vmatpush1.msra.mxu0 0.0
  %686 = vmatprep.subr.mxu0 0.0
  %687 = vmatpush1.msra.mxu0 0.0
  %688 = vmatprep.subr.mxu0 0.0
  %689 = vmatpush1.msra.mxu0 0.0
  %690 = vmatprep.subr.mxu0 0.0
  %691 = vmatpush1.msra.mxu0 0.0
  %692 = vmatprep.subr.mxu0 0.0
  %693 = vmatpush1.msra.mxu0 0.0
  %694 = vmatprep.mubr.f32.mxu0 0.0
  %695 = vmatmul.mubr.f32.gmra.mrb[0].mxu0 %v619
  %v696 = vpop.f32.mrb[0].mxu0
  %v697 = vadd.f32 0.0, %v696
  %v698 = vpop.f32.mrb[0].mxu0
  %699 = vmatprep.mubr.f32.mxu0 0.0
  %700 = vmatmul.mubr.f32.gmra.mrb[0].mxu0 %v622
  %v701 = vpop.f32.mrb[0].mxu0
  %v702 = vadd.f32 0.0, %v701
  %v703 = vpop.f32.mrb[0].mxu0
  %704 = vmatprep.mubr.f32.mxu0 0.0
  %705 = vmatmul.mubr.f32.gmra.mrb[0].mxu0 %v625
  %v706 = vpop.f32.mrb[0].mxu0
  %v707 = vadd.f32 0.0, %v706
  %v708 = vpop.f32.mrb[0].mxu0
  %709 = vmatprep.mubr.f32.mxu0 0.0
  %710 = vmatmul.mubr.f32.gmra.mrb[0].mxu0 %v628
  %v711 = vpop.f32.mrb[0].mxu0
  %v712 = vadd.f32 0.0, %v711
  %v713 = vpop.f32.mrb[0].mxu0
  %714 = vdwg.mxu0
  %v715 = vadd.f32 %v609, %v697
  %v716 = vadd.f32 %v610, %v702
  %v717 = vadd.f32 %v611, %v707
  %v718 = vadd.f32 %v612, %v712
  %s719 = scalar_lea.vmem %s4, 160
  %v720 = vld [vmem:[%s719] sm:$0xff]
  %v721 = vld [vmem:[%s719 + $0x8] sm:$0xff]
  %v722 = vld [vmem:[%s719 + $0x10] sm:$0xff]
  %v723 = vld [vmem:[%s719 + $0x18] sm:$0xff]
  %724 = vrot.lane.b32.xlu0 %v140, 127
  %v725 = vpop.permute.xlu0 %724
  %726 = vrot.lane.b32.xlu0 %v141, 127
  %v727 = vpop.permute.xlu0 %726
  %s728 = scalar_lea.vmem %s1, 5
  %v729 = vld [vmem:[%s728] sm:$0x1]
  %v731 = vlaneseq
  %v732 = vshrl.u32 %v731, 7
  %v733 = vsub.s32 0, %v732
  %v734 = vrot.slane %v729, %v733
  %v736 = vmul.f32 %v725, %v734
  %v737 = vmul.f32 %v727, %v734
  %v739 = vsel %vm178, %v720, 0
  %v742 = vsel %vm178, %v721, 0
  %v745 = vsel %vm178, %v722, 0
  %v748 = vsel %vm178, %v723, 0
  %750 = vmatprep.subr.mxu0 0.0
  %751 = vmatpush1.msra.mxu0 %v736
  %752 = vmatprep.subr.mxu0 0.0
  %753 = vmatpush1.msra.mxu0 %v737
  %754 = vmatprep.subr.mxu0 0.0
  %755 = vmatpush1.msra.mxu0 0.0
  %756 = vmatprep.subr.mxu0 0.0
  %757 = vmatpush1.msra.mxu0 0.0
  %758 = vmatprep.subr.mxu0 0.0
  %759 = vmatpush1.msra.mxu0 0.0
  %760 = vmatprep.subr.mxu0 0.0
  %761 = vmatpush1.msra.mxu0 0.0
  %762 = vmatprep.subr.mxu0 0.0
  %763 = vmatpush1.msra.mxu0 0.0
  %764 = vmatprep.subr.mxu0 0.0
  %765 = vmatpush1.msra.mxu0 0.0
  %766 = vmatprep.subr.mxu0 0.0
  %767 = vmatpush1.msra.mxu0 0.0
  %768 = vmatprep.subr.mxu0 0.0
  %769 = vmatpush1.msra.mxu0 0.0
  %770 = vmatprep.subr.mxu0 0.0
  %771 = vmatpush1.msra.mxu0 0.0
  %772 = vmatprep.subr.mxu0 0.0
  %773 = vmatpush1.msra.mxu0 0.0
  %774 = vmatprep.subr.mxu0 0.0
  %775 = vmatpush1.msra.mxu0 0.0
  %776 = vmatprep.subr.mxu0 0.0
  %777 = vmatpush1.msra.mxu0 0.0
  %778 = vmatprep.subr.mxu0 0.0
  %779 = vmatpush1.msra.mxu0 0.0
  %780 = vmatprep.subr.mxu0 0.0
  %781 = vmatpush1.msra.mxu0 0.0
  %782 = vmatprep.subr.mxu0 0.0
  %783 = vmatpush1.msra.mxu0 0.0
  %784 = vmatprep.subr.mxu0 0.0
  %785 = vmatpush1.msra.mxu0 0.0
  %786 = vmatprep.subr.mxu0 0.0
  %787 = vmatpush1.msra.mxu0 0.0
  %788 = vmatprep.subr.mxu0 0.0
  %789 = vmatpush1.msra.mxu0 0.0
  %790 = vmatprep.subr.mxu0 0.0
  %791 = vmatpush1.msra.mxu0 0.0
  %792 = vmatprep.subr.mxu0 0.0
  %793 = vmatpush1.msra.mxu0 0.0
  %794 = vmatprep.subr.mxu0 0.0
  %795 = vmatpush1.msra.mxu0 0.0
  %796 = vmatprep.subr.mxu0 0.0
  %797 = vmatpush1.msra.mxu0 0.0
  %798 = vmatprep.subr.mxu0 0.0
  %799 = vmatpush1.msra.mxu0 0.0
  %800 = vmatprep.subr.mxu0 0.0
  %801 = vmatpush1.msra.mxu0 0.0
  %802 = vmatprep.subr.mxu0 0.0
  %803 = vmatpush1.msra.mxu0 0.0
  %804 = vmatprep.subr.mxu0 0.0
  %805 = vmatpush1.msra.mxu0 0.0
  %806 = vmatprep.subr.mxu0 0.0
  %807 = vmatpush1.msra.mxu0 0.0
  %808 = vmatprep.subr.mxu0 0.0
  %809 = vmatpush1.msra.mxu0 0.0
  %810 = vmatprep.subr.mxu0 0.0
  %811 = vmatpush1.msra.mxu0 0.0
  %812 = vmatprep.subr.mxu0 0.0
  %813 = vmatpush1.msra.mxu0 0.0
  %814 = vmatprep.mubr.f32.mxu0 0.0
  %815 = vmatmul.mubr.f32.gmra.mrb[0].mxu0 %v739
  %v816 = vpop.f32.mrb[0].mxu0
  %v817 = vadd.f32 0.0, %v816
  %v818 = vpop.f32.mrb[0].mxu0
  %819 = vmatprep.mubr.f32.mxu0 0.0
  %820 = vmatmul.mubr.f32.gmra.mrb[0].mxu0 %v742
  %v821 = vpop.f32.mrb[0].mxu0
  %v822 = vadd.f32 0.0, %v821
  %v823 = vpop.f32.mrb[0].mxu0
  %824 = vmatprep.mubr.f32.mxu0 0.0
  %825 = vmatmul.mubr.f32.gmra.mrb[0].mxu0 %v745
  %v826 = vpop.f32.mrb[0].mxu0
  %v827 = vadd.f32 0.0, %v826
  %v828 = vpop.f32.mrb[0].mxu0
  %829 = vmatprep.mubr.f32.mxu0 0.0
  %830 = vmatmul.mubr.f32.gmra.mrb[0].mxu0 %v748
  %v831 = vpop.f32.mrb[0].mxu0
  %v832 = vadd.f32 0.0, %v831
  %v833 = vpop.f32.mrb[0].mxu0
  %834 = vdwg.mxu0
  %v835 = vadd.f32 %v715, %v817
  %v836 = vadd.f32 %v716, %v822
  %v837 = vadd.f32 %v717, %v827
  %v838 = vadd.f32 %v718, %v832
  %s839 = scalar_lea.vmem %s4, 192
  %v840 = vld [vmem:[%s839] sm:$0xff]
  %v841 = vld [vmem:[%s839 + $0x8] sm:$0xff]
  %v842 = vld [vmem:[%s839 + $0x10] sm:$0xff]
  %v843 = vld [vmem:[%s839 + $0x18] sm:$0xff]
  %844 = vrot.lane.b32.xlu0 %v140, 121
  %v845 = vpop.permute.xlu0 %844
  %846 = vrot.lane.b32.xlu0 %v141, 121
  %v847 = vpop.permute.xlu0 %846
  %s848 = scalar_lea.vmem %s1, 6
  %v849 = vld [vmem:[%s848] sm:$0x1]
  %v851 = vlaneseq
  %v852 = vshrl.u32 %v851, 7
  %v853 = vsub.s32 0, %v852
  %v854 = vrot.slane %v849, %v853
  %v856 = vmul.f32 %v845, %v854
  %v857 = vmul.f32 %v847, %v854
  %v859 = vsel %vm178, %v840, 0
  %v862 = vsel %vm178, %v841, 0
  %v865 = vsel %vm178, %v842, 0
  %v868 = vsel %vm178, %v843, 0
  %870 = vmatprep.subr.mxu0 0.0
  %871 = vmatpush1.msra.mxu0 %v856
  %872 = vmatprep.subr.mxu0 0.0
  %873 = vmatpush1.msra.mxu0 %v857
  %874 = vmatprep.subr.mxu0 0.0
  %875 = vmatpush1.msra.mxu0 0.0
  %876 = vmatprep.subr.mxu0 0.0
  %877 = vmatpush1.msra.mxu0 0.0
  %878 = vmatprep.subr.mxu0 0.0
  %879 = vmatpush1.msra.mxu0 0.0
  %880 = vmatprep.subr.mxu0 0.0
  %881 = vmatpush1.msra.mxu0 0.0
  %882 = vmatprep.subr.mxu0 0.0
  %883 = vmatpush1.msra.mxu0 0.0
  %884 = vmatprep.subr.mxu0 0.0
  %885 = vmatpush1.msra.mxu0 0.0
  %886 = vmatprep.subr.mxu0 0.0
  %887 = vmatpush1.msra.mxu0 0.0
  %888 = vmatprep.subr.mxu0 0.0
  %889 = vmatpush1.msra.mxu0 0.0
  %890 = vmatprep.subr.mxu0 0.0
  %891 = vmatpush1.msra.mxu0 0.0
  %892 = vmatprep.subr.mxu0 0.0
  %893 = vmatpush1.msra.mxu0 0.0
  %894 = vmatprep.subr.mxu0 0.0
  %895 = vmatpush1.msra.mxu0 0.0
  %896 = vmatprep.subr.mxu0 0.0
  %897 = vmatpush1.msra.mxu0 0.0
  %898 = vmatprep.subr.mxu0 0.0
  %899 = vmatpush1.msra.mxu0 0.0
  %900 = vmatprep.subr.mxu0 0.0
  %901 = vmatpush1.msra.mxu0 0.0
  %902 = vmatprep.subr.mxu0 0.0
  %903 = vmatpush1.msra.mxu0 0.0
  %904 = vmatprep.subr.mxu0 0.0
  %905 = vmatpush1.msra.mxu0 0.0
  %906 = vmatprep.subr.mxu0 0.0
  %907 = vmatpush1.msra.mxu0 0.0
  %908 = vmatprep.subr.mxu0 0.0
  %909 = vmatpush1.msra.mxu0 0.0
  %910 = vmatprep.subr.mxu0 0.0
  %911 = vmatpush1.msra.mxu0 0.0
  %912 = vmatprep.subr.mxu0 0.0
  %913 = vmatpush1.msra.mxu0 0.0
  %914 = vmatprep.subr.mxu0 0.0
  %915 = vmatpush1.msra.mxu0 0.0
  %916 = vmatprep.subr.mxu0 0.0
  %917 = vmatpush1.msra.mxu0 0.0
  %918 = vmatprep.subr.mxu0 0.0
  %919 = vmatpush1.msra.mxu0 0.0
  %920 = vmatprep.subr.mxu0 0.0
  %921 = vmatpush1.msra.mxu0 0.0
  %922 = vmatprep.subr.mxu0 0.0
  %923 = vmatpush1.msra.mxu0 0.0
  %924 = vmatprep.subr.mxu0 0.0
  %925 = vmatpush1.msra.mxu0 0.0
  %926 = vmatprep.subr.mxu0 0.0
  %927 = vmatpush1.msra.mxu0 0.0
  %928 = vmatprep.subr.mxu0 0.0
  %929 = vmatpush1.msra.mxu0 0.0
  %930 = vmatprep.subr.mxu0 0.0
  %931 = vmatpush1.msra.mxu0 0.0
  %932 = vmatprep.subr.mxu0 0.0
  %933 = vmatpush1.msra.mxu0 0.0
  %934 = vmatprep.mubr.f32.mxu0 0.0
  %935 = vmatmul.mubr.f32.gmra.mrb[0].mxu0 %v859
  %v936 = vpop.f32.mrb[0].mxu0
  %v937 = vadd.f32 0.0, %v936
  %v938 = vpop.f32.mrb[0].mxu0
  %939 = vmatprep.mubr.f32.mxu0 0.0
  %940 = vmatmul.mubr.f32.gmra.mrb[0].mxu0 %v862
  %v941 = vpop.f32.mrb[0].mxu0
  %v942 = vadd.f32 0.0, %v941
  %v943 = vpop.f32.mrb[0].mxu0
  %944 = vmatprep.mubr.f32.mxu0 0.0
  %945 = vmatmul.mubr.f32.gmra.mrb[0].mxu0 %v865
  %v946 = vpop.f32.mrb[0].mxu0
  %v947 = vadd.f32 0.0, %v946
  %v948 = vpop.f32.mrb[0].mxu0
  %949 = vmatprep.mubr.f32.mxu0 0.0
  %950 = vmatmul.mubr.f32.gmra.mrb[0].mxu0 %v868
  %v951 = vpop.f32.mrb[0].mxu0
  %v952 = vadd.f32 0.0, %v951
  %v953 = vpop.f32.mrb[0].mxu0
  %954 = vdwg.mxu0
  %v955 = vadd.f32 %v835, %v937
  %v956 = vadd.f32 %v836, %v942
  %v957 = vadd.f32 %v837, %v947
  %v958 = vadd.f32 %v838, %v952
  %s959 = scalar_lea.vmem %s4, 224
  %v960 = vld [vmem:[%s959] sm:$0xff]
  %v961 = vld [vmem:[%s959 + $0x8] sm:$0xff]
  %v962 = vld [vmem:[%s959 + $0x10] sm:$0xff]
  %v963 = vld [vmem:[%s959 + $0x18] sm:$0xff]
  %964 = vrot.lane.b32.xlu0 %v140, 120
  %v965 = vpop.permute.xlu0 %964
  %966 = vrot.lane.b32.xlu0 %v141, 120
  %v967 = vpop.permute.xlu0 %966
  %s968 = scalar_lea.vmem %s1, 7
  %v969 = vld [vmem:[%s968] sm:$0x1]
  %v971 = vlaneseq
  %v972 = vshrl.u32 %v971, 7
  %v973 = vsub.s32 0, %v972
  %v974 = vrot.slane %v969, %v973
  %v976 = vmul.f32 %v965, %v974
  %v977 = vmul.f32 %v967, %v974
  %v979 = vsel %vm178, %v960, 0
  %v982 = vsel %vm178, %v961, 0
  %v985 = vsel %vm178, %v962, 0
  %v988 = vsel %vm178, %v963, 0
  %990 = vmatprep.subr.mxu0 0.0
  %991 = vmatpush1.msra.mxu0 %v976
  %992 = vmatprep.subr.mxu0 0.0
  %993 = vmatpush1.msra.mxu0 %v977
  %994 = vmatprep.subr.mxu0 0.0
  %995 = vmatpush1.msra.mxu0 0.0
  %996 = vmatprep.subr.mxu0 0.0
  %997 = vmatpush1.msra.mxu0 0.0
  %998 = vmatprep.subr.mxu0 0.0
  %999 = vmatpush1.msra.mxu0 0.0
  %1000 = vmatprep.subr.mxu0 0.0
  %1001 = vmatpush1.msra.mxu0 0.0
  %1002 = vmatprep.subr.mxu0 0.0
  %1003 = vmatpush1.msra.mxu0 0.0
  %1004 = vmatprep.subr.mxu0 0.0
  %1005 = vmatpush1.msra.mxu0 0.0
  %1006 = vmatprep.subr.mxu0 0.0
  %1007 = vmatpush1.msra.mxu0 0.0
  %1008 = vmatprep.subr.mxu0 0.0
  %1009 = vmatpush1.msra.mxu0 0.0
  %1010 = vmatprep.subr.mxu0 0.0
  %1011 = vmatpush1.msra.mxu0 0.0
  %1012 = vmatprep.subr.mxu0 0.0
  %1013 = vmatpush1.msra.mxu0 0.0
  %1014 = vmatprep.subr.mxu0 0.0
  %1015 = vmatpush1.msra.mxu0 0.0
  %1016 = vmatprep.subr.mxu0 0.0
  %1017 = vmatpush1.msra.mxu0 0.0
  %1018 = vmatprep.subr.mxu0 0.0
  %1019 = vmatpush1.msra.mxu0 0.0
  %1020 = vmatprep.subr.mxu0 0.0
  %1021 = vmatpush1.msra.mxu0 0.0
  %1022 = vmatprep.subr.mxu0 0.0
  %1023 = vmatpush1.msra.mxu0 0.0
  %1024 = vmatprep.subr.mxu0 0.0
  %1025 = vmatpush1.msra.mxu0 0.0
  %1026 = vmatprep.subr.mxu0 0.0
  %1027 = vmatpush1.msra.mxu0 0.0
  %1028 = vmatprep.subr.mxu0 0.0
  %1029 = vmatpush1.msra.mxu0 0.0
  %1030 = vmatprep.subr.mxu0 0.0
  %1031 = vmatpush1.msra.mxu0 0.0
  %1032 = vmatprep.subr.mxu0 0.0
  %1033 = vmatpush1.msra.mxu0 0.0
  %1034 = vmatprep.subr.mxu0 0.0
  %1035 = vmatpush1.msra.mxu0 0.0
  %1036 = vmatprep.subr.mxu0 0.0
  %1037 = vmatpush1.msra.mxu0 0.0
  %1038 = vmatprep.subr.mxu0 0.0
  %1039 = vmatpush1.msra.mxu0 0.0
  %1040 = vmatprep.subr.mxu0 0.0
  %1041 = vmatpush1.msra.mxu0 0.0
  %1042 = vmatprep.subr.mxu0 0.0
  %1043 = vmatpush1.msra.mxu0 0.0
  %1044 = vmatprep.subr.mxu0 0.0
  %1045 = vmatpush1.msra.mxu0 0.0
  %1046 = vmatprep.subr.mxu0 0.0
  %1047 = vmatpush1.msra.mxu0 0.0
  %1048 = vmatprep.subr.mxu0 0.0
  %1049 = vmatpush1.msra.mxu0 0.0
  %1050 = vmatprep.subr.mxu0 0.0
  %1051 = vmatpush1.msra.mxu0 0.0
  %1052 = vmatprep.subr.mxu0 0.0
  %1053 = vmatpush1.msra.mxu0 0.0
  %1054 = vmatprep.mubr.f32.mxu0 0.0
  %1055 = vmatmul.mubr.f32.gmra.mrb[0].mxu0 %v979
  %v1056 = vpop.f32.mrb[0].mxu0
  %v1057 = vadd.f32 0.0, %v1056
  %v1058 = vpop.f32.mrb[0].mxu0
  %1059 = vmatprep.mubr.f32.mxu0 0.0
  %1060 = vmatmul.mubr.f32.gmra.mrb[0].mxu0 %v982
  %v1061 = vpop.f32.mrb[0].mxu0
  %v1062 = vadd.f32 0.0, %v1061
  %v1063 = vpop.f32.mrb[0].mxu0
  %1064 = vmatprep.mubr.f32.mxu0 0.0
  %1065 = vmatmul.mubr.f32.gmra.mrb[0].mxu0 %v985
  %v1066 = vpop.f32.mrb[0].mxu0
  %v1067 = vadd.f32 0.0, %v1066
  %v1068 = vpop.f32.mrb[0].mxu0
  %1069 = vmatprep.mubr.f32.mxu0 0.0
  %1070 = vmatmul.mubr.f32.gmra.mrb[0].mxu0 %v988
  %v1071 = vpop.f32.mrb[0].mxu0
  %v1072 = vadd.f32 0.0, %v1071
  %v1073 = vpop.f32.mrb[0].mxu0
  %1074 = vdwg.mxu0
  %v1075 = vadd.f32 %v955, %v1057
  %v1076 = vadd.f32 %v956, %v1062
  %v1077 = vadd.f32 %v957, %v1067
  %v1078 = vadd.f32 %v958, %v1072
  %s1079 = scalar_lea.vmem %s4, 256
  %v1080 = vld [vmem:[%s1079] sm:$0xff]
  %v1081 = vld [vmem:[%s1079 + $0x8] sm:$0xff]
  %v1082 = vld [vmem:[%s1079 + $0x10] sm:$0xff]
  %v1083 = vld [vmem:[%s1079 + $0x18] sm:$0xff]
  %1084 = vrot.lane.b32.xlu0 %v140, 119
  %v1085 = vpop.permute.xlu0 %1084
  %1086 = vrot.lane.b32.xlu0 %v141, 119
  %v1087 = vpop.permute.xlu0 %1086
  %s1088 = scalar_lea.vmem %s1, 8
  %v1089 = vld [vmem:[%s1088] sm:$0x1]
  %v1091 = vlaneseq
  %v1092 = vshrl.u32 %v1091, 7
  %v1093 = vsub.s32 0, %v1092
  %v1094 = vrot.slane %v1089, %v1093
  %v1096 = vmul.f32 %v1085, %v1094
  %v1097 = vmul.f32 %v1087, %v1094
  %v1099 = vsel %vm178, %v1080, 0
  %v1102 = vsel %vm178, %v1081, 0
  %v1105 = vsel %vm178, %v1082, 0
  %v1108 = vsel %vm178, %v1083, 0
  %1110 = vmatprep.subr.mxu0 0.0
  %1111 = vmatpush1.msra.mxu0 %v1096
  %1112 = vmatprep.subr.mxu0 0.0
  %1113 = vmatpush1.msra.mxu0 %v1097
  %1114 = vmatprep.subr.mxu0 0.0
  %1115 = vmatpush1.msra.mxu0 0.0
  %1116 = vmatprep.subr.mxu0 0.0
  %1117 = vmatpush1.msra.mxu0 0.0
  %1118 = vmatprep.subr.mxu0 0.0
  %1119 = vmatpush1.msra.mxu0 0.0
  %1120 = vmatprep.subr.mxu0 0.0
  %1121 = vmatpush1.msra.mxu0 0.0
  %1122 = vmatprep.subr.mxu0 0.0
  %1123 = vmatpush1.msra.mxu0 0.0
  %1124 = vmatprep.subr.mxu0 0.0
  %1125 = vmatpush1.msra.mxu0 0.0
  %1126 = vmatprep.subr.mxu0 0.0
  %1127 = vmatpush1.msra.mxu0 0.0
  %1128 = vmatprep.subr.mxu0 0.0
  %1129 = vmatpush1.msra.mxu0 0.0
  %1130 = vmatprep.subr.mxu0 0.0
  %1131 = vmatpush1.msra.mxu0 0.0
  %1132 = vmatprep.subr.mxu0 0.0
  %1133 = vmatpush1.msra.mxu0 0.0
  %1134 = vmatprep.subr.mxu0 0.0
  %1135 = vmatpush1.msra.mxu0 0.0
  %1136 = vmatprep.subr.mxu0 0.0
  %1137 = vmatpush1.msra.mxu0 0.0
  %1138 = vmatprep.subr.mxu0 0.0
  %1139 = vmatpush1.msra.mxu0 0.0
  %1140 = vmatprep.subr.mxu0 0.0
  %1141 = vmatpush1.msra.mxu0 0.0
  %1142 = vmatprep.subr.mxu0 0.0
  %1143 = vmatpush1.msra.mxu0 0.0
  %1144 = vmatprep.subr.mxu0 0.0
  %1145 = vmatpush1.msra.mxu0 0.0
  %1146 = vmatprep.subr.mxu0 0.0
  %1147 = vmatpush1.msra.mxu0 0.0
  %1148 = vmatprep.subr.mxu0 0.0
  %1149 = vmatpush1.msra.mxu0 0.0
  %1150 = vmatprep.subr.mxu0 0.0
  %1151 = vmatpush1.msra.mxu0 0.0
  %1152 = vmatprep.subr.mxu0 0.0
  %1153 = vmatpush1.msra.mxu0 0.0
  %1154 = vmatprep.subr.mxu0 0.0
  %1155 = vmatpush1.msra.mxu0 0.0
  %1156 = vmatprep.subr.mxu0 0.0
  %1157 = vmatpush1.msra.mxu0 0.0
  %1158 = vmatprep.subr.mxu0 0.0
  %1159 = vmatpush1.msra.mxu0 0.0
  %1160 = vmatprep.subr.mxu0 0.0
  %1161 = vmatpush1.msra.mxu0 0.0
  %1162 = vmatprep.subr.mxu0 0.0
  %1163 = vmatpush1.msra.mxu0 0.0
  %1164 = vmatprep.subr.mxu0 0.0
  %1165 = vmatpush1.msra.mxu0 0.0
  %1166 = vmatprep.subr.mxu0 0.0
  %1167 = vmatpush1.msra.mxu0 0.0
  %1168 = vmatprep.subr.mxu0 0.0
  %1169 = vmatpush1.msra.mxu0 0.0
  %1170 = vmatprep.subr.mxu0 0.0
  %1171 = vmatpush1.msra.mxu0 0.0
  %1172 = vmatprep.subr.mxu0 0.0
  %1173 = vmatpush1.msra.mxu0 0.0
  %1174 = vmatprep.mubr.f32.mxu0 0.0
  %1175 = vmatmul.mubr.f32.gmra.mrb[0].mxu0 %v1099
  %v1176 = vpop.f32.mrb[0].mxu0
  %v1177 = vadd.f32 0.0, %v1176
  %v1178 = vpop.f32.mrb[0].mxu0
  %1179 = vmatprep.mubr.f32.mxu0 0.0
  %1180 = vmatmul.mubr.f32.gmra.mrb[0].mxu0 %v1102
  %v1181 = vpop.f32.mrb[0].mxu0
  %v1182 = vadd.f32 0.0, %v1181
  %v1183 = vpop.f32.mrb[0].mxu0
  %1184 = vmatprep.mubr.f32.mxu0 0.0
  %1185 = vmatmul.mubr.f32.gmra.mrb[0].mxu0 %v1105
  %v1186 = vpop.f32.mrb[0].mxu0
  %v1187 = vadd.f32 0.0, %v1186
  %v1188 = vpop.f32.mrb[0].mxu0
  %1189 = vmatprep.mubr.f32.mxu0 0.0
  %1190 = vmatmul.mubr.f32.gmra.mrb[0].mxu0 %v1108
  %v1191 = vpop.f32.mrb[0].mxu0
  %v1192 = vadd.f32 0.0, %v1191
  %v1193 = vpop.f32.mrb[0].mxu0
  %1194 = vdwg.mxu0
  %v1195 = vadd.f32 %v1075, %v1177
  %v1196 = vadd.f32 %v1076, %v1182
  %v1197 = vadd.f32 %v1077, %v1187
  %v1198 = vadd.f32 %v1078, %v1192
  %v1199 = vld [vmem:[%s5] sm:$0xff]
  %v1200 = vld [vmem:[%s5 + $0x8] sm:$0xff]
  %v1201 = vld [vmem:[%s5 + $0x10] sm:$0xff]
  %v1202 = vld [vmem:[%s5 + $0x18] sm:$0xff]
  %1204 = vset.pattern.permute.xlu0 0
  %1205 = vperm.xlu0 %1204, %v1199
  %v1206 = vpop.permute.xlu0 %1205
  %1209 = vset.pattern.permute.xlu0 0
  %1210 = vperm.xlu0 %1209, %v1200
  %v1211 = vpop.permute.xlu0 %1210
  %1214 = vset.pattern.permute.xlu0 0
  %1215 = vperm.xlu0 %1214, %v1201
  %v1216 = vpop.permute.xlu0 %1215
  %1219 = vset.pattern.permute.xlu0 0
  %1220 = vperm.xlu0 %1219, %v1202
  %v1221 = vpop.permute.xlu0 %1220
  %v1223 = vadd.f32 %v1195, %v1206
  %v1224 = vadd.f32 %v1196, %v1211
  %v1225 = vadd.f32 %v1197, %v1216
  %v1226 = vadd.f32 %v1198, %v1221
  %v1227 = vmax.f32 %v1223, 0.0
  %v1228 = vmax.f32 %v1224, 0.0
  %v1229 = vmax.f32 %v1225, 0.0
  %v1230 = vmax.f32 %v1226, 0.0
  %1231 = vrot.lane.b32.xlu0 %v1227, 9
  %v1232 = vpop.permute.xlu0 %1231
  %1233 = vrot.lane.b32.xlu0 %v1228, 9
  %v1234 = vpop.permute.xlu0 %1233
  %1235 = vrot.lane.b32.xlu0 %v1229, 9
  %v1236 = vpop.permute.xlu0 %1235
  %1237 = vrot.lane.b32.xlu0 %v1230, 9
  %v1238 = vpop.permute.xlu0 %1237
  %v1239 = vmul.f32 %v1232, %v155
  %v1240 = vmul.f32 %v1234, %v155
  %v1241 = vmul.f32 %v1236, %v155
  %v1242 = vmul.f32 %v1238, %v155
  %1243 = vrot.lane.b32.xlu0 %v1227, 8
  %v1244 = vpop.permute.xlu0 %1243
  %1245 = vrot.lane.b32.xlu0 %v1228, 8
  %v1246 = vpop.permute.xlu0 %1245
  %1247 = vrot.lane.b32.xlu0 %v1229, 8
  %v1248 = vpop.permute.xlu0 %1247
  %1249 = vrot.lane.b32.xlu0 %v1230, 8
  %v1250 = vpop.permute.xlu0 %1249
  %v1251 = vmul.f32 %v1244, %v174
  %v1252 = vmul.f32 %v1246, %v174
  %v1253 = vmul.f32 %v1248, %v174
  %v1254 = vmul.f32 %v1250, %v174
  %1255 = vrot.lane.b32.xlu0 %v1227, 7
  %v1256 = vpop.permute.xlu0 %1255
  %1257 = vrot.lane.b32.xlu0 %v1228, 7
  %v1258 = vpop.permute.xlu0 %1257
  %1259 = vrot.lane.b32.xlu0 %v1229, 7
  %v1260 = vpop.permute.xlu0 %1259
  %1261 = vrot.lane.b32.xlu0 %v1230, 7
  %v1262 = vpop.permute.xlu0 %1261
  %v1263 = vmul.f32 %v1256, %v388
  %v1264 = vmul.f32 %v1258, %v388
  %v1265 = vmul.f32 %v1260, %v388
  %v1266 = vmul.f32 %v1262, %v388
  %1267 = vrot.lane.b32.xlu0 %v1227, 1
  %v1268 = vpop.permute.xlu0 %1267
  %1269 = vrot.lane.b32.xlu0 %v1228, 1
  %v1270 = vpop.permute.xlu0 %1269
  %1271 = vrot.lane.b32.xlu0 %v1229, 1
  %v1272 = vpop.permute.xlu0 %1271
  %1273 = vrot.lane.b32.xlu0 %v1230, 1
  %v1274 = vpop.permute.xlu0 %1273
  %v1275 = vmul.f32 %v1268, %v508
  %v1276 = vmul.f32 %v1270, %v508
  %v1277 = vmul.f32 %v1272, %v508
  %v1278 = vmul.f32 %v1274, %v508
  %1279 = vrot.lane.b32.xlu0 %v1227, 127
  %v1280 = vpop.permute.xlu0 %1279
  %1281 = vrot.lane.b32.xlu0 %v1228, 127
  %v1282 = vpop.permute.xlu0 %1281
  %1283 = vrot.lane.b32.xlu0 %v1229, 127
  %v1284 = vpop.permute.xlu0 %1283
  %1285 = vrot.lane.b32.xlu0 %v1230, 127
  %v1286 = vpop.permute.xlu0 %1285
  %v1287 = vmul.f32 %v1280, %v734
  %v1288 = vmul.f32 %v1282, %v734
  %v1289 = vmul.f32 %v1284, %v734
  %v1290 = vmul.f32 %v1286, %v734
  %1291 = vrot.lane.b32.xlu0 %v1227, 121
  %v1292 = vpop.permute.xlu0 %1291
  %1293 = vrot.lane.b32.xlu0 %v1228, 121
  %v1294 = vpop.permute.xlu0 %1293
  %1295 = vrot.lane.b32.xlu0 %v1229, 121
  %v1296 = vpop.permute.xlu0 %1295
  %1297 = vrot.lane.b32.xlu0 %v1230, 121
  %v1298 = vpop.permute.xlu0 %1297
  %v1299 = vmul.f32 %v1292, %v854
  %v1300 = vmul.f32 %v1294, %v854
  %v1301 = vmul.f32 %v1296, %v854
  %v1302 = vmul.f32 %v1298, %v854
  %1303 = vrot.lane.b32.xlu0 %v1227, 120
  %v1304 = vpop.permute.xlu0 %1303
  %1305 = vrot.lane.b32.xlu0 %v1228, 120
  %v1306 = vpop.permute.xlu0 %1305
  %1307 = vrot.lane.b32.xlu0 %v1229, 120
  %v1308 = vpop.permute.xlu0 %1307
  %1309 = vrot.lane.b32.xlu0 %v1230, 120
  %v1310 = vpop.permute.xlu0 %1309
  %v1311 = vmul.f32 %v1304, %v974
  %v1312 = vmul.f32 %v1306, %v974
  %v1313 = vmul.f32 %v1308, %v974
  %v1314 = vmul.f32 %v1310, %v974
  %1315 = vrot.lane.b32.xlu0 %v1227, 119
  %v1316 = vpop.permute.xlu0 %1315
  %1317 = vrot.lane.b32.xlu0 %v1228, 119
  %v1318 = vpop.permute.xlu0 %1317
  %1319 = vrot.lane.b32.xlu0 %v1229, 119
  %v1320 = vpop.permute.xlu0 %1319
  %1321 = vrot.lane.b32.xlu0 %v1230, 119
  %v1322 = vpop.permute.xlu0 %1321
  %v1323 = vmul.f32 %v1316, %v1094
  %v1324 = vmul.f32 %v1318, %v1094
  %v1325 = vmul.f32 %v1320, %v1094
  %v1326 = vmul.f32 %v1322, %v1094
  %s1327 = scalar_lea.vmem %s6, 80
  %v1328 = vld [vmem:[%s1327] sm:$0xff]
  %v1329 = vld [vmem:[%s1327 + $0x8] sm:$0xff]
  %s1330 = scalar_lea.vmem %s6, 112
  %v1331 = vld [vmem:[%s1330] sm:$0xff]
  %v1332 = vld [vmem:[%s1330 + $0x8] sm:$0xff]
  %vm1333 = vcmask 261120
  %v1335 = vsel %vm1333, %v1331, 0
  %v1338 = vsel %vm1333, %v1332, 0
  %1340 = vmatprep.subr.mxu0 0.0
  %1341 = vmatpush1.msra.mxu0 %v1275
  %1342 = vmatprep.subr.mxu0 0.0
  %1343 = vmatpush1.msra.mxu0 %v1276
  %1344 = vmatprep.subr.mxu0 0.0
  %1345 = vmatpush1.msra.mxu0 %v1277
  %1346 = vmatprep.subr.mxu0 0.0
  %1347 = vmatpush1.msra.mxu0 %v1278
  %1348 = vmatprep.subr.mxu0 0.0
  %1349 = vmatpush1.msra.mxu0 0.0
  %1350 = vmatprep.subr.mxu0 0.0
  %1351 = vmatpush1.msra.mxu0 0.0
  %1352 = vmatprep.subr.mxu0 0.0
  %1353 = vmatpush1.msra.mxu0 0.0
  %1354 = vmatprep.subr.mxu0 0.0
  %1355 = vmatpush1.msra.mxu0 0.0
  %1356 = vmatprep.subr.mxu0 0.0
  %1357 = vmatpush1.msra.mxu0 0.0
  %1358 = vmatprep.subr.mxu0 0.0
  %1359 = vmatpush1.msra.mxu0 0.0
  %1360 = vmatprep.subr.mxu0 0.0
  %1361 = vmatpush1.msra.mxu0 0.0
  %1362 = vmatprep.subr.mxu0 0.0
  %1363 = vmatpush1.msra.mxu0 0.0
  %1364 = vmatprep.subr.mxu0 0.0
  %1365 = vmatpush1.msra.mxu0 0.0
  %1366 = vmatprep.subr.mxu0 0.0
  %1367 = vmatpush1.msra.mxu0 0.0
  %1368 = vmatprep.subr.mxu0 0.0
  %1369 = vmatpush1.msra.mxu0 0.0
  %1370 = vmatprep.subr.mxu0 0.0
  %1371 = vmatpush1.msra.mxu0 0.0
  %1372 = vmatprep.subr.mxu0 0.0
  %1373 = vmatpush1.msra.mxu0 0.0
  %1374 = vmatprep.subr.mxu0 0.0
  %1375 = vmatpush1.msra.mxu0 0.0
  %1376 = vmatprep.subr.mxu0 0.0
  %1377 = vmatpush1.msra.mxu0 0.0
  %1378 = vmatprep.subr.mxu0 0.0
  %1379 = vmatpush1.msra.mxu0 0.0
  %1380 = vmatprep.subr.mxu0 0.0
  %1381 = vmatpush1.msra.mxu0 0.0
  %1382 = vmatprep.subr.mxu0 0.0
  %1383 = vmatpush1.msra.mxu0 0.0
  %1384 = vmatprep.subr.mxu0 0.0
  %1385 = vmatpush1.msra.mxu0 0.0
  %1386 = vmatprep.subr.mxu0 0.0
  %1387 = vmatpush1.msra.mxu0 0.0
  %1388 = vmatprep.subr.mxu0 0.0
  %1389 = vmatpush1.msra.mxu0 0.0
  %1390 = vmatprep.subr.mxu0 0.0
  %1391 = vmatpush1.msra.mxu0 0.0
  %1392 = vmatprep.subr.mxu0 0.0
  %1393 = vmatpush1.msra.mxu0 0.0
  %1394 = vmatprep.subr.mxu0 0.0
  %1395 = vmatpush1.msra.mxu0 0.0
  %1396 = vmatprep.subr.mxu0 0.0
  %1397 = vmatpush1.msra.mxu0 0.0
  %1398 = vmatprep.subr.mxu0 0.0
  %1399 = vmatpush1.msra.mxu0 0.0
  %1400 = vmatprep.subr.mxu0 0.0
  %1401 = vmatpush1.msra.mxu0 0.0
  %1402 = vmatprep.subr.mxu0 0.0
  %1403 = vmatpush1.msra.mxu0 0.0
  %1404 = vmatprep.mubr.f32.mxu0 0.0
  %1405 = vmatmul.mubr.f32.gmra.mrb[0].mxu0 %v1335
  %v1406 = vpop.f32.mrb[0].mxu0
  %v1407 = vadd.f32 0.0, %v1406
  %v1408 = vpop.f32.mrb[0].mxu0
  %1409 = vmatprep.mubr.f32.mxu0 0.0
  %1410 = vmatmul.mubr.f32.gmra.mrb[0].mxu0 %v1338
  %v1411 = vpop.f32.mrb[0].mxu0
  %v1412 = vadd.f32 0.0, %v1411
  %v1413 = vpop.f32.mrb[0].mxu0
  %1414 = vdwg.mxu0
  %v1416 = vsel %vm1333, %v1328, 0
  %v1419 = vsel %vm1333, %v1329, 0
  %1421 = vmatprep.subr.mxu0 0.0
  %1422 = vmatpush1.msra.mxu0 %v1227
  %1423 = vmatprep.subr.mxu0 0.0
  %1424 = vmatpush1.msra.mxu0 %v1228
  %1425 = vmatprep.subr.mxu0 0.0
  %1426 = vmatpush1.msra.mxu0 %v1229
  %1427 = vmatprep.subr.mxu0 0.0
  %1428 = vmatpush1.msra.mxu0 %v1230
  %1429 = vmatprep.subr.mxu0 0.0
  %1430 = vmatpush1.msra.mxu0 0.0
  %1431 = vmatprep.subr.mxu0 0.0
  %1432 = vmatpush1.msra.mxu0 0.0
  %1433 = vmatprep.subr.mxu0 0.0
  %1434 = vmatpush1.msra.mxu0 0.0
  %1435 = vmatprep.subr.mxu0 0.0
  %1436 = vmatpush1.msra.mxu0 0.0
  %1437 = vmatprep.subr.mxu0 0.0
  %1438 = vmatpush1.msra.mxu0 0.0
  %1439 = vmatprep.subr.mxu0 0.0
  %1440 = vmatpush1.msra.mxu0 0.0
  %1441 = vmatprep.subr.mxu0 0.0
  %1442 = vmatpush1.msra.mxu0 0.0
  %1443 = vmatprep.subr.mxu0 0.0
  %1444 = vmatpush1.msra.mxu0 0.0
  %1445 = vmatprep.subr.mxu0 0.0
  %1446 = vmatpush1.msra.mxu0 0.0
  %1447 = vmatprep.subr.mxu0 0.0
  %1448 = vmatpush1.msra.mxu0 0.0
  %1449 = vmatprep.subr.mxu0 0.0
  %1450 = vmatpush1.msra.mxu0 0.0
  %1451 = vmatprep.subr.mxu0 0.0
  %1452 = vmatpush1.msra.mxu0 0.0
  %1453 = vmatprep.subr.mxu0 0.0
  %1454 = vmatpush1.msra.mxu0 0.0
  %1455 = vmatprep.subr.mxu0 0.0
  %1456 = vmatpush1.msra.mxu0 0.0
  %1457 = vmatprep.subr.mxu0 0.0
  %1458 = vmatpush1.msra.mxu0 0.0
  %1459 = vmatprep.subr.mxu0 0.0
  %1460 = vmatpush1.msra.mxu0 0.0
  %1461 = vmatprep.subr.mxu0 0.0
  %1462 = vmatpush1.msra.mxu0 0.0
  %1463 = vmatprep.subr.mxu0 0.0
  %1464 = vmatpush1.msra.mxu0 0.0
  %1465 = vmatprep.subr.mxu0 0.0
  %1466 = vmatpush1.msra.mxu0 0.0
  %1467 = vmatprep.subr.mxu0 0.0
  %1468 = vmatpush1.msra.mxu0 0.0
  %1469 = vmatprep.subr.mxu0 0.0
  %1470 = vmatpush1.msra.mxu0 0.0
  %1471 = vmatprep.subr.mxu0 0.0
  %1472 = vmatpush1.msra.mxu0 0.0
  %1473 = vmatprep.subr.mxu0 0.0
  %1474 = vmatpush1.msra.mxu0 0.0
  %1475 = vmatprep.subr.mxu0 0.0
  %1476 = vmatpush1.msra.mxu0 0.0
  %1477 = vmatprep.subr.mxu0 0.0
  %1478 = vmatpush1.msra.mxu0 0.0
  %1479 = vmatprep.subr.mxu0 0.0
  %1480 = vmatpush1.msra.mxu0 0.0
  %1481 = vmatprep.subr.mxu0 0.0
  %1482 = vmatpush1.msra.mxu0 0.0
  %1483 = vmatprep.subr.mxu0 0.0
  %1484 = vmatpush1.msra.mxu0 0.0
  %1485 = vmatprep.mubr.f32.mxu0 0.0
  %1486 = vmatmul.mubr.f32.gmra.mrb[0].mxu0 %v1416
  %v1487 = vpop.f32.mrb[0].mxu0
  %v1488 = vadd.f32 %v1407, %v1487
  %v1489 = vpop.f32.mrb[0].mxu0
  %1490 = vmatprep.mubr.f32.mxu0 0.0
  %1491 = vmatmul.mubr.f32.gmra.mrb[0].mxu0 %v1419
  %v1492 = vpop.f32.mrb[0].mxu0
  %v1493 = vadd.f32 %v1412, %v1492
  %v1494 = vpop.f32.mrb[0].mxu0
  %1495 = vdwg.mxu0
  %s1496 = scalar_lea.vmem %s6, 208
  %v1497 = vld [vmem:[%s1496] sm:$0xff]
  %v1498 = vld [vmem:[%s1496 + $0x8] sm:$0xff]
  %v1500 = vsel %vm1333, %v1497, 0
  %v1503 = vsel %vm1333, %v1498, 0
  %1505 = vmatprep.subr.mxu0 0.0
  %1506 = vmatpush1.msra.mxu0 %v1251
  %1507 = vmatprep.subr.mxu0 0.0
  %1508 = vmatpush1.msra.mxu0 %v1252
  %1509 = vmatprep.subr.mxu0 0.0
  %1510 = vmatpush1.msra.mxu0 %v1253
  %1511 = vmatprep.subr.mxu0 0.0
  %1512 = vmatpush1.msra.mxu0 %v1254
  %1513 = vmatprep.subr.mxu0 0.0
  %1514 = vmatpush1.msra.mxu0 0.0
  %1515 = vmatprep.subr.mxu0 0.0
  %1516 = vmatpush1.msra.mxu0 0.0
  %1517 = vmatprep.subr.mxu0 0.0
  %1518 = vmatpush1.msra.mxu0 0.0
  %1519 = vmatprep.subr.mxu0 0.0
  %1520 = vmatpush1.msra.mxu0 0.0
  %1521 = vmatprep.subr.mxu0 0.0
  %1522 = vmatpush1.msra.mxu0 0.0
  %1523 = vmatprep.subr.mxu0 0.0
  %1524 = vmatpush1.msra.mxu0 0.0
  %1525 = vmatprep.subr.mxu0 0.0
  %1526 = vmatpush1.msra.mxu0 0.0
  %1527 = vmatprep.subr.mxu0 0.0
  %1528 = vmatpush1.msra.mxu0 0.0
  %1529 = vmatprep.subr.mxu0 0.0
  %1530 = vmatpush1.msra.mxu0 0.0
  %1531 = vmatprep.subr.mxu0 0.0
  %1532 = vmatpush1.msra.mxu0 0.0
  %1533 = vmatprep.subr.mxu0 0.0
  %1534 = vmatpush1.msra.mxu0 0.0
  %1535 = vmatprep.subr.mxu0 0.0
  %1536 = vmatpush1.msra.mxu0 0.0
  %1537 = vmatprep.subr.mxu0 0.0
  %1538 = vmatpush1.msra.mxu0 0.0
  %1539 = vmatprep.subr.mxu0 0.0
  %1540 = vmatpush1.msra.mxu0 0.0
  %1541 = vmatprep.subr.mxu0 0.0
  %1542 = vmatpush1.msra.mxu0 0.0
  %1543 = vmatprep.subr.mxu0 0.0
  %1544 = vmatpush1.msra.mxu0 0.0
  %1545 = vmatprep.subr.mxu0 0.0
  %1546 = vmatpush1.msra.mxu0 0.0
  %1547 = vmatprep.subr.mxu0 0.0
  %1548 = vmatpush1.msra.mxu0 0.0
  %1549 = vmatprep.subr.mxu0 0.0
  %1550 = vmatpush1.msra.mxu0 0.0
  %1551 = vmatprep.subr.mxu0 0.0
  %1552 = vmatpush1.msra.mxu0 0.0
  %1553 = vmatprep.subr.mxu0 0.0
  %1554 = vmatpush1.msra.mxu0 0.0
  %1555 = vmatprep.subr.mxu0 0.0
  %1556 = vmatpush1.msra.mxu0 0.0
  %1557 = vmatprep.subr.mxu0 0.0
  %1558 = vmatpush1.msra.mxu0 0.0
  %1559 = vmatprep.subr.mxu0 0.0
  %1560 = vmatpush1.msra.mxu0 0.0
  %1561 = vmatprep.subr.mxu0 0.0
  %1562 = vmatpush1.msra.mxu0 0.0
  %1563 = vmatprep.subr.mxu0 0.0
  %1564 = vmatpush1.msra.mxu0 0.0
  %1565 = vmatprep.subr.mxu0 0.0
  %1566 = vmatpush1.msra.mxu0 0.0
  %1567 = vmatprep.subr.mxu0 0.0
  %1568 = vmatpush1.msra.mxu0 0.0
  %1569 = vmatprep.mubr.f32.mxu0 0.0
  %1570 = vmatmul.mubr.f32.gmra.mrb[0].mxu0 %v1500
  %v1571 = vpop.f32.mrb[0].mxu0
  %v1572 = vadd.f32 0.0, %v1571
  %v1573 = vpop.f32.mrb[0].mxu0
  %1574 = vmatprep.mubr.f32.mxu0 0.0
  %1575 = vmatmul.mubr.f32.gmra.mrb[0].mxu0 %v1503
  %v1576 = vpop.f32.mrb[0].mxu0
  %v1577 = vadd.f32 0.0, %v1576
  %v1578 = vpop.f32.mrb[0].mxu0
  %1579 = vdwg.mxu0
  %v1580 = vadd.f32 %v1488, %v1572
  %v1581 = vadd.f32 %v1493, %v1577
  %s1582 = scalar_lea.vmem %s6, 240
  %v1583 = vld [vmem:[%s1582] sm:$0xff]
  %v1584 = vld [vmem:[%s1582 + $0x8] sm:$0xff]
  %v1586 = vsel %vm1333, %v1583, 0
  %v1589 = vsel %vm1333, %v1584, 0
  %1591 = vmatprep.subr.mxu0 0.0
  %1592 = vmatpush1.msra.mxu0 %v1239
  %1593 = vmatprep.subr.mxu0 0.0
  %1594 = vmatpush1.msra.mxu0 %v1240
  %1595 = vmatprep.subr.mxu0 0.0
  %1596 = vmatpush1.msra.mxu0 %v1241
  %1597 = vmatprep.subr.mxu0 0.0
  %1598 = vmatpush1.msra.mxu0 %v1242
  %1599 = vmatprep.subr.mxu0 0.0
  %1600 = vmatpush1.msra.mxu0 0.0
  %1601 = vmatprep.subr.mxu0 0.0
  %1602 = vmatpush1.msra.mxu0 0.0
  %1603 = vmatprep.subr.mxu0 0.0
  %1604 = vmatpush1.msra.mxu0 0.0
  %1605 = vmatprep.subr.mxu0 0.0
  %1606 = vmatpush1.msra.mxu0 0.0
  %1607 = vmatprep.subr.mxu0 0.0
  %1608 = vmatpush1.msra.mxu0 0.0
  %1609 = vmatprep.subr.mxu0 0.0
  %1610 = vmatpush1.msra.mxu0 0.0
  %1611 = vmatprep.subr.mxu0 0.0
  %1612 = vmatpush1.msra.mxu0 0.0
  %1613 = vmatprep.subr.mxu0 0.0
  %1614 = vmatpush1.msra.mxu0 0.0
  %1615 = vmatprep.subr.mxu0 0.0
  %1616 = vmatpush1.msra.mxu0 0.0
  %1617 = vmatprep.subr.mxu0 0.0
  %1618 = vmatpush1.msra.mxu0 0.0
  %1619 = vmatprep.subr.mxu0 0.0
  %1620 = vmatpush1.msra.mxu0 0.0
  %1621 = vmatprep.subr.mxu0 0.0
  %1622 = vmatpush1.msra.mxu0 0.0
  %1623 = vmatprep.subr.mxu0 0.0
  %1624 = vmatpush1.msra.mxu0 0.0
  %1625 = vmatprep.subr.mxu0 0.0
  %1626 = vmatpush1.msra.mxu0 0.0
  %1627 = vmatprep.subr.mxu0 0.0
  %1628 = vmatpush1.msra.mxu0 0.0
  %1629 = vmatprep.subr.mxu0 0.0
  %1630 = vmatpush1.msra.mxu0 0.0
  %1631 = vmatprep.subr.mxu0 0.0
  %1632 = vmatpush1.msra.mxu0 0.0
  %1633 = vmatprep.subr.mxu0 0.0
  %1634 = vmatpush1.msra.mxu0 0.0
  %1635 = vmatprep.subr.mxu0 0.0
  %1636 = vmatpush1.msra.mxu0 0.0
  %1637 = vmatprep.subr.mxu0 0.0
  %1638 = vmatpush1.msra.mxu0 0.0
  %1639 = vmatprep.subr.mxu0 0.0
  %1640 = vmatpush1.msra.mxu0 0.0
  %1641 = vmatprep.subr.mxu0 0.0
  %1642 = vmatpush1.msra.mxu0 0.0
  %1643 = vmatprep.subr.mxu0 0.0
  %1644 = vmatpush1.msra.mxu0 0.0
  %1645 = vmatprep.subr.mxu0 0.0
  %1646 = vmatpush1.msra.mxu0 0.0
  %1647 = vmatprep.subr.mxu0 0.0
  %1648 = vmatpush1.msra.mxu0 0.0
  %1649 = vmatprep.subr.mxu0 0.0
  %1650 = vmatpush1.msra.mxu0 0.0
  %1651 = vmatprep.subr.mxu0 0.0
  %1652 = vmatpush1.msra.mxu0 0.0
  %1653 = vmatprep.subr.mxu0 0.0
  %1654 = vmatpush1.msra.mxu0 0.0
  %1655 = vmatprep.mubr.f32.mxu0 0.0
  %1656 = vmatmul.mubr.f32.gmra.mrb[0].mxu0 %v1586
  %v1657 = vpop.f32.mrb[0].mxu0
  %v1658 = vadd.f32 0.0, %v1657
  %v1659 = vpop.f32.mrb[0].mxu0
  %1660 = vmatprep.mubr.f32.mxu0 0.0
  %1661 = vmatmul.mubr.f32.gmra.mrb[0].mxu0 %v1589
  %v1662 = vpop.f32.mrb[0].mxu0
  %v1663 = vadd.f32 0.0, %v1662
  %v1664 = vpop.f32.mrb[0].mxu0
  %1665 = vdwg.mxu0
  %v1666 = vadd.f32 %v1580, %v1658
  %v1667 = vadd.f32 %v1581, %v1663
  %v1668 = vld [vmem:[%s7] sm:$0xff]
  %v1669 = vld [vmem:[%s7 + $0x8] sm:$0xff]
  %1671 = vset.pattern.permute.xlu0 0
  %1672 = vperm.xlu0 %1671, %v1668
  %v1673 = vpop.permute.xlu0 %1672
  %1676 = vset.pattern.permute.xlu0 0
  %1677 = vperm.xlu0 %1676, %v1669
  %v1678 = vpop.permute.xlu0 %1677
  %v1680 = vadd.f32 %v1666, %v1673
  %v1681 = vadd.f32 %v1667, %v1678
  %v1682 = vmax.f32 %v1680, 0.0
  %v1683 = vmax.f32 %v1681, 0.0
  %v1684 = vld [vmem:[%s8] sm:$0xff]
  %v1685 = vld [vmem:[%s9] sm:$0xff]
  %1687 = vset.pattern.permute.xlu0 0
  %1688 = vperm.xlu0 %1687, %v1685
  %v1689 = vpop.permute.xlu0 %1688
  %v1692 = vsel %vm178, %v1684, 0
  %1694 = vmatprep.subr.mxu0 0.0
  %1695 = vmatpush1.msra.mxu0 %v1682
  %1696 = vmatprep.subr.mxu0 0.0
  %1697 = vmatpush1.msra.mxu0 %v1683
  %1698 = vmatprep.subr.mxu0 0.0
  %1699 = vmatpush1.msra.mxu0 0.0
  %1700 = vmatprep.subr.mxu0 0.0
  %1701 = vmatpush1.msra.mxu0 0.0
  %1702 = vmatprep.subr.mxu0 0.0
  %1703 = vmatpush1.msra.mxu0 0.0
  %1704 = vmatprep.subr.mxu0 0.0
  %1705 = vmatpush1.msra.mxu0 0.0
  %1706 = vmatprep.subr.mxu0 0.0
  %1707 = vmatpush1.msra.mxu0 0.0
  %1708 = vmatprep.subr.mxu0 0.0
  %1709 = vmatpush1.msra.mxu0 0.0
  %1710 = vmatprep.subr.mxu0 0.0
  %1711 = vmatpush1.msra.mxu0 0.0
  %1712 = vmatprep.subr.mxu0 0.0
  %1713 = vmatpush1.msra.mxu0 0.0
  %1714 = vmatprep.subr.mxu0 0.0
  %1715 = vmatpush1.msra.mxu0 0.0
  %1716 = vmatprep.subr.mxu0 0.0
  %1717 = vmatpush1.msra.mxu0 0.0
  %1718 = vmatprep.subr.mxu0 0.0
  %1719 = vmatpush1.msra.mxu0 0.0
  %1720 = vmatprep.subr.mxu0 0.0
  %1721 = vmatpush1.msra.mxu0 0.0
  %1722 = vmatprep.subr.mxu0 0.0
  %1723 = vmatpush1.msra.mxu0 0.0
  %1724 = vmatprep.subr.mxu0 0.0
  %1725 = vmatpush1.msra.mxu0 0.0
  %1726 = vmatprep.subr.mxu0 0.0
  %1727 = vmatpush1.msra.mxu0 0.0
  %1728 = vmatprep.subr.mxu0 0.0
  %1729 = vmatpush1.msra.mxu0 0.0
  %1730 = vmatprep.subr.mxu0 0.0
  %1731 = vmatpush1.msra.mxu0 0.0
  %1732 = vmatprep.subr.mxu0 0.0
  %1733 = vmatpush1.msra.mxu0 0.0
  %1734 = vmatprep.subr.mxu0 0.0
  %1735 = vmatpush1.msra.mxu0 0.0
  %1736 = vmatprep.subr.mxu0 0.0
  %1737 = vmatpush1.msra.mxu0 0.0
  %1738 = vmatprep.subr.mxu0 0.0
  %1739 = vmatpush1.msra.mxu0 0.0
  %1740 = vmatprep.subr.mxu0 0.0
  %1741 = vmatpush1.msra.mxu0 0.0
  %1742 = vmatprep.subr.mxu0 0.0
  %1743 = vmatpush1.msra.mxu0 0.0
  %1744 = vmatprep.subr.mxu0 0.0
  %1745 = vmatpush1.msra.mxu0 0.0
  %1746 = vmatprep.subr.mxu0 0.0
  %1747 = vmatpush1.msra.mxu0 0.0
  %1748 = vmatprep.subr.mxu0 0.0
  %1749 = vmatpush1.msra.mxu0 0.0
  %1750 = vmatprep.subr.mxu0 0.0
  %1751 = vmatpush1.msra.mxu0 0.0
  %1752 = vmatprep.subr.mxu0 0.0
  %1753 = vmatpush1.msra.mxu0 0.0
  %1754 = vmatprep.subr.mxu0 0.0
  %1755 = vmatpush1.msra.mxu0 0.0
  %1756 = vmatprep.subr.mxu0 0.0
  %1757 = vmatpush1.msra.mxu0 0.0
  %1758 = vmatprep.mubr.f32.mxu0 0.0
  %1759 = vmatmul.mubr.f32.gmra.mrb[0].mxu0 %v1692
  %v1760 = vpop.f32.mrb[0].mxu0
  %v1761 = vadd.f32 %v1689, %v1760
  %v1762 = vpop.f32.mrb[0].mxu0
  %1763 = vdwg.mxu0
  %1764 = vst [vmem:[%s10] sm:$0xff] %v1761
  %s1765 = scalar_lea.vmem %s6, 64
  %v1766 = vld [vmem:[%s1765] sm:$0xff]
  %v1767 = vld [vmem:[%s1765 + $0x8] sm:$0xff]
  %s1768 = scalar_lea.vmem %s6, 96
  %v1769 = vld [vmem:[%s1768] sm:$0xff]
  %v1770 = vld [vmem:[%s1768 + $0x8] sm:$0xff]
  %v1772 = vsel %vm1333, %v1769, 0
  %v1775 = vsel %vm1333, %v1770, 0
  %1777 = vmatprep.subr.mxu0 0.0
  %1778 = vmatpush1.msra.mxu0 %v1227
  %1779 = vmatprep.subr.mxu0 0.0
  %1780 = vmatpush1.msra.mxu0 %v1228
  %1781 = vmatprep.subr.mxu0 0.0
  %1782 = vmatpush1.msra.mxu0 %v1229
  %1783 = vmatprep.subr.mxu0 0.0
  %1784 = vmatpush1.msra.mxu0 %v1230
  %1785 = vmatprep.subr.mxu0 0.0
  %1786 = vmatpush1.msra.mxu0 0.0
  %1787 = vmatprep.subr.mxu0 0.0
  %1788 = vmatpush1.msra.mxu0 0.0
  %1789 = vmatprep.subr.mxu0 0.0
  %1790 = vmatpush1.msra.mxu0 0.0
  %1791 = vmatprep.subr.mxu0 0.0
  %1792 = vmatpush1.msra.mxu0 0.0
  %1793 = vmatprep.subr.mxu0 0.0
  %1794 = vmatpush1.msra.mxu0 0.0
  %1795 = vmatprep.subr.mxu0 0.0
  %1796 = vmatpush1.msra.mxu0 0.0
  %1797 = vmatprep.subr.mxu0 0.0
  %1798 = vmatpush1.msra.mxu0 0.0
  %1799 = vmatprep.subr.mxu0 0.0
  %1800 = vmatpush1.msra.mxu0 0.0
  %1801 = vmatprep.subr.mxu0 0.0
  %1802 = vmatpush1.msra.mxu0 0.0
  %1803 = vmatprep.subr.mxu0 0.0
  %1804 = vmatpush1.msra.mxu0 0.0
  %1805 = vmatprep.subr.mxu0 0.0
  %1806 = vmatpush1.msra.mxu0 0.0
  %1807 = vmatprep.subr.mxu0 0.0
  %1808 = vmatpush1.msra.mxu0 0.0
  %1809 = vmatprep.subr.mxu0 0.0
  %1810 = vmatpush1.msra.mxu0 0.0
  %1811 = vmatprep.subr.mxu0 0.0
  %1812 = vmatpush1.msra.mxu0 0.0
  %1813 = vmatprep.subr.mxu0 0.0
  %1814 = vmatpush1.msra.mxu0 0.0
  %1815 = vmatprep.subr.mxu0 0.0
  %1816 = vmatpush1.msra.mxu0 0.0
  %1817 = vmatprep.subr.mxu0 0.0
  %1818 = vmatpush1.msra.mxu0 0.0
  %1819 = vmatprep.subr.mxu0 0.0
  %1820 = vmatpush1.msra.mxu0 0.0
  %1821 = vmatprep.subr.mxu0 0.0
  %1822 = vmatpush1.msra.mxu0 0.0
  %1823 = vmatprep.subr.mxu0 0.0
  %1824 = vmatpush1.msra.mxu0 0.0
  %1825 = vmatprep.subr.mxu0 0.0
  %1826 = vmatpush1.msra.mxu0 0.0
  %1827 = vmatprep.subr.mxu0 0.0
  %1828 = vmatpush1.msra.mxu0 0.0
  %1829 = vmatprep.subr.mxu0 0.0
  %1830 = vmatpush1.msra.mxu0 0.0
  %1831 = vmatprep.subr.mxu0 0.0
  %1832 = vmatpush1.msra.mxu0 0.0
  %1833 = vmatprep.subr.mxu0 0.0
  %1834 = vmatpush1.msra.mxu0 0.0
  %1835 = vmatprep.subr.mxu0 0.0
  %1836 = vmatpush1.msra.mxu0 0.0
  %1837 = vmatprep.subr.mxu0 0.0
  %1838 = vmatpush1.msra.mxu0 0.0
  %1839 = vmatprep.subr.mxu0 0.0
  %1840 = vmatpush1.msra.mxu0 0.0
  %1841 = vmatprep.mubr.f32.mxu0 0.0
  %1842 = vmatmul.mubr.f32.gmra.mrb[0].mxu0 %v1772
  %v1843 = vpop.f32.mrb[0].mxu0
  %v1844 = vadd.f32 0.0, %v1843
  %v1845 = vpop.f32.mrb[0].mxu0
  %1846 = vmatprep.mubr.f32.mxu0 0.0
  %1847 = vmatmul.mubr.f32.gmra.mrb[0].mxu0 %v1775
  %v1848 = vpop.f32.mrb[0].mxu0
  %v1849 = vadd.f32 0.0, %v1848
  %v1850 = vpop.f32.mrb[0].mxu0
  %1851 = vdwg.mxu0
  %v1853 = vsel %vm1333, %v1766, 0
  %v1856 = vsel %vm1333, %v1767, 0
  %1858 = vmatprep.subr.mxu0 0.0
  %1859 = vmatpush1.msra.mxu0 %v1287
  %1860 = vmatprep.subr.mxu0 0.0
  %1861 = vmatpush1.msra.mxu0 %v1288
  %1862 = vmatprep.subr.mxu0 0.0
  %1863 = vmatpush1.msra.mxu0 %v1289
  %1864 = vmatprep.subr.mxu0 0.0
  %1865 = vmatpush1.msra.mxu0 %v1290
  %1866 = vmatprep.subr.mxu0 0.0
  %1867 = vmatpush1.msra.mxu0 0.0
  %1868 = vmatprep.subr.mxu0 0.0
  %1869 = vmatpush1.msra.mxu0 0.0
  %1870 = vmatprep.subr.mxu0 0.0
  %1871 = vmatpush1.msra.mxu0 0.0
  %1872 = vmatprep.subr.mxu0 0.0
  %1873 = vmatpush1.msra.mxu0 0.0
  %1874 = vmatprep.subr.mxu0 0.0
  %1875 = vmatpush1.msra.mxu0 0.0
  %1876 = vmatprep.subr.mxu0 0.0
  %1877 = vmatpush1.msra.mxu0 0.0
  %1878 = vmatprep.subr.mxu0 0.0
  %1879 = vmatpush1.msra.mxu0 0.0
  %1880 = vmatprep.subr.mxu0 0.0
  %1881 = vmatpush1.msra.mxu0 0.0
  %1882 = vmatprep.subr.mxu0 0.0
  %1883 = vmatpush1.msra.mxu0 0.0
  %1884 = vmatprep.subr.mxu0 0.0
  %1885 = vmatpush1.msra.mxu0 0.0
  %1886 = vmatprep.subr.mxu0 0.0
  %1887 = vmatpush1.msra.mxu0 0.0
  %1888 = vmatprep.subr.mxu0 0.0
  %1889 = vmatpush1.msra.mxu0 0.0
  %1890 = vmatprep.subr.mxu0 0.0
  %1891 = vmatpush1.msra.mxu0 0.0
  %1892 = vmatprep.subr.mxu0 0.0
  %1893 = vmatpush1.msra.mxu0 0.0
  %1894 = vmatprep.subr.mxu0 0.0
  %1895 = vmatpush1.msra.mxu0 0.0
  %1896 = vmatprep.subr.mxu0 0.0
  %1897 = vmatpush1.msra.mxu0 0.0
  %1898 = vmatprep.subr.mxu0 0.0
  %1899 = vmatpush1.msra.mxu0 0.0
  %1900 = vmatprep.subr.mxu0 0.0
  %1901 = vmatpush1.msra.mxu0 0.0
  %1902 = vmatprep.subr.mxu0 0.0
  %1903 = vmatpush1.msra.mxu0 0.0
  %1904 = vmatprep.subr.mxu0 0.0
  %1905 = vmatpush1.msra.mxu0 0.0
  %1906 = vmatprep.subr.mxu0 0.0
  %1907 = vmatpush1.msra.mxu0 0.0
  %1908 = vmatprep.subr.mxu0 0.0
  %1909 = vmatpush1.msra.mxu0 0.0
  %1910 = vmatprep.subr.mxu0 0.0
  %1911 = vmatpush1.msra.mxu0 0.0
  %1912 = vmatprep.subr.mxu0 0.0
  %1913 = vmatpush1.msra.mxu0 0.0
  %1914 = vmatprep.subr.mxu0 0.0
  %1915 = vmatpush1.msra.mxu0 0.0
  %1916 = vmatprep.subr.mxu0 0.0
  %1917 = vmatpush1.msra.mxu0 0.0
  %1918 = vmatprep.subr.mxu0 0.0
  %1919 = vmatpush1.msra.mxu0 0.0
  %1920 = vmatprep.subr.mxu0 0.0
  %1921 = vmatpush1.msra.mxu0 0.0
  %1922 = vmatprep.mubr.f32.mxu0 0.0
  %1923 = vmatmul.mubr.f32.gmra.mrb[0].mxu0 %v1853
  %v1924 = vpop.f32.mrb[0].mxu0
  %v1925 = vadd.f32 %v1844, %v1924
  %v1926 = vpop.f32.mrb[0].mxu0
  %1927 = vmatprep.mubr.f32.mxu0 0.0
  %1928 = vmatmul.mubr.f32.gmra.mrb[0].mxu0 %v1856
  %v1929 = vpop.f32.mrb[0].mxu0
  %v1930 = vadd.f32 %v1849, %v1929
  %v1931 = vpop.f32.mrb[0].mxu0
  %1932 = vdwg.mxu0
  %s1933 = scalar_lea.vmem %s6, 192
  %v1934 = vld [vmem:[%s1933] sm:$0xff]
  %v1935 = vld [vmem:[%s1933 + $0x8] sm:$0xff]
  %v1937 = vsel %vm1333, %v1934, 0
  %v1940 = vsel %vm1333, %v1935, 0
  %1942 = vmatprep.subr.mxu0 0.0
  %1943 = vmatpush1.msra.mxu0 %v1263
  %1944 = vmatprep.subr.mxu0 0.0
  %1945 = vmatpush1.msra.mxu0 %v1264
  %1946 = vmatprep.subr.mxu0 0.0
  %1947 = vmatpush1.msra.mxu0 %v1265
  %1948 = vmatprep.subr.mxu0 0.0
  %1949 = vmatpush1.msra.mxu0 %v1266
  %1950 = vmatprep.subr.mxu0 0.0
  %1951 = vmatpush1.msra.mxu0 0.0
  %1952 = vmatprep.subr.mxu0 0.0
  %1953 = vmatpush1.msra.mxu0 0.0
  %1954 = vmatprep.subr.mxu0 0.0
  %1955 = vmatpush1.msra.mxu0 0.0
  %1956 = vmatprep.subr.mxu0 0.0
  %1957 = vmatpush1.msra.mxu0 0.0
  %1958 = vmatprep.subr.mxu0 0.0
  %1959 = vmatpush1.msra.mxu0 0.0
  %1960 = vmatprep.subr.mxu0 0.0
  %1961 = vmatpush1.msra.mxu0 0.0
  %1962 = vmatprep.subr.mxu0 0.0
  %1963 = vmatpush1.msra.mxu0 0.0
  %1964 = vmatprep.subr.mxu0 0.0
  %1965 = vmatpush1.msra.mxu0 0.0
  %1966 = vmatprep.subr.mxu0 0.0
  %1967 = vmatpush1.msra.mxu0 0.0
  %1968 = vmatprep.subr.mxu0 0.0
  %1969 = vmatpush1.msra.mxu0 0.0
  %1970 = vmatprep.subr.mxu0 0.0
  %1971 = vmatpush1.msra.mxu0 0.0
  %1972 = vmatprep.subr.mxu0 0.0
  %1973 = vmatpush1.msra.mxu0 0.0
  %1974 = vmatprep.subr.mxu0 0.0
  %1975 = vmatpush1.msra.mxu0 0.0
  %1976 = vmatprep.subr.mxu0 0.0
  %1977 = vmatpush1.msra.mxu0 0.0
  %1978 = vmatprep.subr.mxu0 0.0
  %1979 = vmatpush1.msra.mxu0 0.0
  %1980 = vmatprep.subr.mxu0 0.0
  %1981 = vmatpush1.msra.mxu0 0.0
  %1982 = vmatprep.subr.mxu0 0.0
  %1983 = vmatpush1.msra.mxu0 0.0
  %1984 = vmatprep.subr.mxu0 0.0
  %1985 = vmatpush1.msra.mxu0 0.0
  %1986 = vmatprep.subr.mxu0 0.0
  %1987 = vmatpush1.msra.mxu0 0.0
  %1988 = vmatprep.subr.mxu0 0.0
  %1989 = vmatpush1.msra.mxu0 0.0
  %1990 = vmatprep.subr.mxu0 0.0
  %1991 = vmatpush1.msra.mxu0 0.0
  %1992 = vmatprep.subr.mxu0 0.0
  %1993 = vmatpush1.msra.mxu0 0.0
  %1994 = vmatprep.subr.mxu0 0.0
  %1995 = vmatpush1.msra.mxu0 0.0
  %1996 = vmatprep.subr.mxu0 0.0
  %1997 = vmatpush1.msra.mxu0 0.0
  %1998 = vmatprep.subr.mxu0 0.0
  %1999 = vmatpush1.msra.mxu0 0.0
  %2000 = vmatprep.subr.mxu0 0.0
  %2001 = vmatpush1.msra.mxu0 0.0
  %2002 = vmatprep.subr.mxu0 0.0
  %2003 = vmatpush1.msra.mxu0 0.0
  %2004 = vmatprep.subr.mxu0 0.0
  %2005 = vmatpush1.msra.mxu0 0.0
  %2006 = vmatprep.mubr.f32.mxu0 0.0
  %2007 = vmatmul.mubr.f32.gmra.mrb[0].mxu0 %v1937
  %v2008 = vpop.f32.mrb[0].mxu0
  %v2009 = vadd.f32 0.0, %v2008
  %v2010 = vpop.f32.mrb[0].mxu0
  %2011 = vmatprep.mubr.f32.mxu0 0.0
  %2012 = vmatmul.mubr.f32.gmra.mrb[0].mxu0 %v1940
  %v2013 = vpop.f32.mrb[0].mxu0
  %v2014 = vadd.f32 0.0, %v2013
  %v2015 = vpop.f32.mrb[0].mxu0
  %2016 = vdwg.mxu0
  %v2017 = vadd.f32 %v1925, %v2009
  %v2018 = vadd.f32 %v1930, %v2014
  %s2019 = scalar_lea.vmem %s6, 224
  %v2020 = vld [vmem:[%s2019] sm:$0xff]
  %v2021 = vld [vmem:[%s2019 + $0x8] sm:$0xff]
  %v2023 = vsel %vm1333, %v2020, 0
  %v2026 = vsel %vm1333, %v2021, 0
  %2028 = vmatprep.subr.mxu0 0.0
  %2029 = vmatpush1.msra.mxu0 %v1251
  %2030 = vmatprep.subr.mxu0 0.0
  %2031 = vmatpush1.msra.mxu0 %v1252
  %2032 = vmatprep.subr.mxu0 0.0
  %2033 = vmatpush1.msra.mxu0 %v1253
  %2034 = vmatprep.subr.mxu0 0.0
  %2035 = vmatpush1.msra.mxu0 %v1254
  %2036 = vmatprep.subr.mxu0 0.0
  %2037 = vmatpush1.msra.mxu0 0.0
  %2038 = vmatprep.subr.mxu0 0.0
  %2039 = vmatpush1.msra.mxu0 0.0
  %2040 = vmatprep.subr.mxu0 0.0
  %2041 = vmatpush1.msra.mxu0 0.0
  %2042 = vmatprep.subr.mxu0 0.0
  %2043 = vmatpush1.msra.mxu0 0.0
  %2044 = vmatprep.subr.mxu0 0.0
  %2045 = vmatpush1.msra.mxu0 0.0
  %2046 = vmatprep.subr.mxu0 0.0
  %2047 = vmatpush1.msra.mxu0 0.0
  %2048 = vmatprep.subr.mxu0 0.0
  %2049 = vmatpush1.msra.mxu0 0.0
  %2050 = vmatprep.subr.mxu0 0.0
  %2051 = vmatpush1.msra.mxu0 0.0
  %2052 = vmatprep.subr.mxu0 0.0
  %2053 = vmatpush1.msra.mxu0 0.0
  %2054 = vmatprep.subr.mxu0 0.0
  %2055 = vmatpush1.msra.mxu0 0.0
  %2056 = vmatprep.subr.mxu0 0.0
  %2057 = vmatpush1.msra.mxu0 0.0
  %2058 = vmatprep.subr.mxu0 0.0
  %2059 = vmatpush1.msra.mxu0 0.0
  %2060 = vmatprep.subr.mxu0 0.0
  %2061 = vmatpush1.msra.mxu0 0.0
  %2062 = vmatprep.subr.mxu0 0.0
  %2063 = vmatpush1.msra.mxu0 0.0
  %2064 = vmatprep.subr.mxu0 0.0
  %2065 = vmatpush1.msra.mxu0 0.0
  %2066 = vmatprep.subr.mxu0 0.0
  %2067 = vmatpush1.msra.mxu0 0.0
  %2068 = vmatprep.subr.mxu0 0.0
  %2069 = vmatpush1.msra.mxu0 0.0
  %2070 = vmatprep.subr.mxu0 0.0
  %2071 = vmatpush1.msra.mxu0 0.0
  %2072 = vmatprep.subr.mxu0 0.0
  %2073 = vmatpush1.msra.mxu0 0.0
  %2074 = vmatprep.subr.mxu0 0.0
  %2075 = vmatpush1.msra.mxu0 0.0
  %2076 = vmatprep.subr.mxu0 0.0
  %2077 = vmatpush1.msra.mxu0 0.0
  %2078 = vmatprep.subr.mxu0 0.0
  %2079 = vmatpush1.msra.mxu0 0.0
  %2080 = vmatprep.subr.mxu0 0.0
  %2081 = vmatpush1.msra.mxu0 0.0
  %2082 = vmatprep.subr.mxu0 0.0
  %2083 = vmatpush1.msra.mxu0 0.0
  %2084 = vmatprep.subr.mxu0 0.0
  %2085 = vmatpush1.msra.mxu0 0.0
  %2086 = vmatprep.subr.mxu0 0.0
  %2087 = vmatpush1.msra.mxu0 0.0
  %2088 = vmatprep.subr.mxu0 0.0
  %2089 = vmatpush1.msra.mxu0 0.0
  %2090 = vmatprep.subr.mxu0 0.0
  %2091 = vmatpush1.msra.mxu0 0.0
  %2092 = vmatprep.mubr.f32.mxu0 0.0
  %2093 = vmatmul.mubr.f32.gmra.mrb[0].mxu0 %v2023
  %v2094 = vpop.f32.mrb[0].mxu0
  %v2095 = vadd.f32 0.0, %v2094
  %v2096 = vpop.f32.mrb[0].mxu0
  %2097 = vmatprep.mubr.f32.mxu0 0.0
  %2098 = vmatmul.mubr.f32.gmra.mrb[0].mxu0 %v2026
  %v2099 = vpop.f32.mrb[0].mxu0
  %v2100 = vadd.f32 0.0, %v2099
  %v2101 = vpop.f32.mrb[0].mxu0
  %2102 = vdwg.mxu0
  %v2103 = vadd.f32 %v2017, %v2095
  %v2104 = vadd.f32 %v2018, %v2100
  %v2105 = vld [vmem:[%s7] sm:$0xff]
  %v2106 = vld [vmem:[%s7 + $0x8] sm:$0xff]
  %2108 = vset.pattern.permute.xlu0 0
  %2109 = vperm.xlu0 %2108, %v2105
  %v2110 = vpop.permute.xlu0 %2109
  %2113 = vset.pattern.permute.xlu0 0
  %2114 = vperm.xlu0 %2113, %v2106
  %v2115 = vpop.permute.xlu0 %2114
  %v2117 = vadd.f32 %v2103, %v2110
  %v2118 = vadd.f32 %v2104, %v2115
  %v2119 = vmax.f32 %v2117, 0.0
  %v2120 = vmax.f32 %v2118, 0.0
  %v2121 = vld [vmem:[%s8] sm:$0xff]
  %v2122 = vld [vmem:[%s9] sm:$0xff]
  %2124 = vset.pattern.permute.xlu0 0
  %2125 = vperm.xlu0 %2124, %v2122
  %v2126 = vpop.permute.xlu0 %2125
  %v2129 = vsel %vm178, %v2121, 0
  %2131 = vmatprep.subr.mxu0 0.0
  %2132 = vmatpush1.msra.mxu0 %v2119
  %2133 = vmatprep.subr.mxu0 0.0
  %2134 = vmatpush1.msra.mxu0 %v2120
  %2135 = vmatprep.subr.mxu0 0.0
  %2136 = vmatpush1.msra.mxu0 0.0
  %2137 = vmatprep.subr.mxu0 0.0
  %2138 = vmatpush1.msra.mxu0 0.0
  %2139 = vmatprep.subr.mxu0 0.0
  %2140 = vmatpush1.msra.mxu0 0.0
  %2141 = vmatprep.subr.mxu0 0.0
  %2142 = vmatpush1.msra.mxu0 0.0
  %2143 = vmatprep.subr.mxu0 0.0
  %2144 = vmatpush1.msra.mxu0 0.0
  %2145 = vmatprep.subr.mxu0 0.0
  %2146 = vmatpush1.msra.mxu0 0.0
  %2147 = vmatprep.subr.mxu0 0.0
  %2148 = vmatpush1.msra.mxu0 0.0
  %2149 = vmatprep.subr.mxu0 0.0
  %2150 = vmatpush1.msra.mxu0 0.0
  %2151 = vmatprep.subr.mxu0 0.0
  %2152 = vmatpush1.msra.mxu0 0.0
  %2153 = vmatprep.subr.mxu0 0.0
  %2154 = vmatpush1.msra.mxu0 0.0
  %2155 = vmatprep.subr.mxu0 0.0
  %2156 = vmatpush1.msra.mxu0 0.0
  %2157 = vmatprep.subr.mxu0 0.0
  %2158 = vmatpush1.msra.mxu0 0.0
  %2159 = vmatprep.subr.mxu0 0.0
  %2160 = vmatpush1.msra.mxu0 0.0
  %2161 = vmatprep.subr.mxu0 0.0
  %2162 = vmatpush1.msra.mxu0 0.0
  %2163 = vmatprep.subr.mxu0 0.0
  %2164 = vmatpush1.msra.mxu0 0.0
  %2165 = vmatprep.subr.mxu0 0.0
  %2166 = vmatpush1.msra.mxu0 0.0
  %2167 = vmatprep.subr.mxu0 0.0
  %2168 = vmatpush1.msra.mxu0 0.0
  %2169 = vmatprep.subr.mxu0 0.0
  %2170 = vmatpush1.msra.mxu0 0.0
  %2171 = vmatprep.subr.mxu0 0.0
  %2172 = vmatpush1.msra.mxu0 0.0
  %2173 = vmatprep.subr.mxu0 0.0
  %2174 = vmatpush1.msra.mxu0 0.0
  %2175 = vmatprep.subr.mxu0 0.0
  %2176 = vmatpush1.msra.mxu0 0.0
  %2177 = vmatprep.subr.mxu0 0.0
  %2178 = vmatpush1.msra.mxu0 0.0
  %2179 = vmatprep.subr.mxu0 0.0
  %2180 = vmatpush1.msra.mxu0 0.0
  %2181 = vmatprep.subr.mxu0 0.0
  %2182 = vmatpush1.msra.mxu0 0.0
  %2183 = vmatprep.subr.mxu0 0.0
  %2184 = vmatpush1.msra.mxu0 0.0
  %2185 = vmatprep.subr.mxu0 0.0
  %2186 = vmatpush1.msra.mxu0 0.0
  %2187 = vmatprep.subr.mxu0 0.0
  %2188 = vmatpush1.msra.mxu0 0.0
  %2189 = vmatprep.subr.mxu0 0.0
  %2190 = vmatpush1.msra.mxu0 0.0
  %2191 = vmatprep.subr.mxu0 0.0
  %2192 = vmatpush1.msra.mxu0 0.0
  %2193 = vmatprep.subr.mxu0 0.0
  %2194 = vmatpush1.msra.mxu0 0.0
  %2195 = vmatprep.mubr.f32.mxu0 0.0
  %2196 = vmatmul.mubr.f32.gmra.mrb[0].mxu0 %v2129
  %v2197 = vpop.f32.mrb[0].mxu0
  %v2198 = vadd.f32 %v2126, %v2197
  %v2199 = vpop.f32.mrb[0].mxu0
  %2200 = vdwg.mxu0
  %2201 = vst [vmem:[%s10 + $0x8] sm:$0xff] %v2198
  %s2202 = scalar_lea.vmem %s6, 16
  %v2203 = vld [vmem:[%s2202] sm:$0xff]
  %v2204 = vld [vmem:[%s2202 + $0x8] sm:$0xff]
  %s2205 = scalar_lea.vmem %s6, 48
  %v2206 = vld [vmem:[%s2205] sm:$0xff]
  %v2207 = vld [vmem:[%s2205 + $0x8] sm:$0xff]
  %v2209 = vsel %vm1333, %v2206, 0
  %v2212 = vsel %vm1333, %v2207, 0
  %2214 = vmatprep.subr.mxu0 0.0
  %2215 = vmatpush1.msra.mxu0 %v1299
  %2216 = vmatprep.subr.mxu0 0.0
  %2217 = vmatpush1.msra.mxu0 %v1300
  %2218 = vmatprep.subr.mxu0 0.0
  %2219 = vmatpush1.msra.mxu0 %v1301
  %2220 = vmatprep.subr.mxu0 0.0
  %2221 = vmatpush1.msra.mxu0 %v1302
  %2222 = vmatprep.subr.mxu0 0.0
  %2223 = vmatpush1.msra.mxu0 0.0
  %2224 = vmatprep.subr.mxu0 0.0
  %2225 = vmatpush1.msra.mxu0 0.0
  %2226 = vmatprep.subr.mxu0 0.0
  %2227 = vmatpush1.msra.mxu0 0.0
  %2228 = vmatprep.subr.mxu0 0.0
  %2229 = vmatpush1.msra.mxu0 0.0
  %2230 = vmatprep.subr.mxu0 0.0
  %2231 = vmatpush1.msra.mxu0 0.0
  %2232 = vmatprep.subr.mxu0 0.0
  %2233 = vmatpush1.msra.mxu0 0.0
  %2234 = vmatprep.subr.mxu0 0.0
  %2235 = vmatpush1.msra.mxu0 0.0
  %2236 = vmatprep.subr.mxu0 0.0
  %2237 = vmatpush1.msra.mxu0 0.0
  %2238 = vmatprep.subr.mxu0 0.0
  %2239 = vmatpush1.msra.mxu0 0.0
  %2240 = vmatprep.subr.mxu0 0.0
  %2241 = vmatpush1.msra.mxu0 0.0
  %2242 = vmatprep.subr.mxu0 0.0
  %2243 = vmatpush1.msra.mxu0 0.0
  %2244 = vmatprep.subr.mxu0 0.0
  %2245 = vmatpush1.msra.mxu0 0.0
  %2246 = vmatprep.subr.mxu0 0.0
  %2247 = vmatpush1.msra.mxu0 0.0
  %2248 = vmatprep.subr.mxu0 0.0
  %2249 = vmatpush1.msra.mxu0 0.0
  %2250 = vmatprep.subr.mxu0 0.0
  %2251 = vmatpush1.msra.mxu0 0.0
  %2252 = vmatprep.subr.mxu0 0.0
  %2253 = vmatpush1.msra.mxu0 0.0
  %2254 = vmatprep.subr.mxu0 0.0
  %2255 = vmatpush1.msra.mxu0 0.0
  %2256 = vmatprep.subr.mxu0 0.0
  %2257 = vmatpush1.msra.mxu0 0.0
  %2258 = vmatprep.subr.mxu0 0.0
  %2259 = vmatpush1.msra.mxu0 0.0
  %2260 = vmatprep.subr.mxu0 0.0
  %2261 = vmatpush1.msra.mxu0 0.0
  %2262 = vmatprep.subr.mxu0 0.0
  %2263 = vmatpush1.msra.mxu0 0.0
  %2264 = vmatprep.subr.mxu0 0.0
  %2265 = vmatpush1.msra.mxu0 0.0
  %2266 = vmatprep.subr.mxu0 0.0
  %2267 = vmatpush1.msra.mxu0 0.0
  %2268 = vmatprep.subr.mxu0 0.0
  %2269 = vmatpush1.msra.mxu0 0.0
  %2270 = vmatprep.subr.mxu0 0.0
  %2271 = vmatpush1.msra.mxu0 0.0
  %2272 = vmatprep.subr.mxu0 0.0
  %2273 = vmatpush1.msra.mxu0 0.0
  %2274 = vmatprep.subr.mxu0 0.0
  %2275 = vmatpush1.msra.mxu0 0.0
  %2276 = vmatprep.subr.mxu0 0.0
  %2277 = vmatpush1.msra.mxu0 0.0
  %2278 = vmatprep.mubr.f32.mxu0 0.0
  %2279 = vmatmul.mubr.f32.gmra.mrb[0].mxu0 %v2209
  %v2280 = vpop.f32.mrb[0].mxu0
  %v2281 = vadd.f32 0.0, %v2280
  %v2282 = vpop.f32.mrb[0].mxu0
  %2283 = vmatprep.mubr.f32.mxu0 0.0
  %2284 = vmatmul.mubr.f32.gmra.mrb[0].mxu0 %v2212
  %v2285 = vpop.f32.mrb[0].mxu0
  %v2286 = vadd.f32 0.0, %v2285
  %v2287 = vpop.f32.mrb[0].mxu0
  %2288 = vdwg.mxu0
  %v2290 = vsel %vm1333, %v2203, 0
  %v2293 = vsel %vm1333, %v2204, 0
  %2295 = vmatprep.subr.mxu0 0.0
  %2296 = vmatpush1.msra.mxu0 %v1311
  %2297 = vmatprep.subr.mxu0 0.0
  %2298 = vmatpush1.msra.mxu0 %v1312
  %2299 = vmatprep.subr.mxu0 0.0
  %2300 = vmatpush1.msra.mxu0 %v1313
  %2301 = vmatprep.subr.mxu0 0.0
  %2302 = vmatpush1.msra.mxu0 %v1314
  %2303 = vmatprep.subr.mxu0 0.0
  %2304 = vmatpush1.msra.mxu0 0.0
  %2305 = vmatprep.subr.mxu0 0.0
  %2306 = vmatpush1.msra.mxu0 0.0
  %2307 = vmatprep.subr.mxu0 0.0
  %2308 = vmatpush1.msra.mxu0 0.0
  %2309 = vmatprep.subr.mxu0 0.0
  %2310 = vmatpush1.msra.mxu0 0.0
  %2311 = vmatprep.subr.mxu0 0.0
  %2312 = vmatpush1.msra.mxu0 0.0
  %2313 = vmatprep.subr.mxu0 0.0
  %2314 = vmatpush1.msra.mxu0 0.0
  %2315 = vmatprep.subr.mxu0 0.0
  %2316 = vmatpush1.msra.mxu0 0.0
  %2317 = vmatprep.subr.mxu0 0.0
  %2318 = vmatpush1.msra.mxu0 0.0
  %2319 = vmatprep.subr.mxu0 0.0
  %2320 = vmatpush1.msra.mxu0 0.0
  %2321 = vmatprep.subr.mxu0 0.0
  %2322 = vmatpush1.msra.mxu0 0.0
  %2323 = vmatprep.subr.mxu0 0.0
  %2324 = vmatpush1.msra.mxu0 0.0
  %2325 = vmatprep.subr.mxu0 0.0
  %2326 = vmatpush1.msra.mxu0 0.0
  %2327 = vmatprep.subr.mxu0 0.0
  %2328 = vmatpush1.msra.mxu0 0.0
  %2329 = vmatprep.subr.mxu0 0.0
  %2330 = vmatpush1.msra.mxu0 0.0
  %2331 = vmatprep.subr.mxu0 0.0
  %2332 = vmatpush1.msra.mxu0 0.0
  %2333 = vmatprep.subr.mxu0 0.0
  %2334 = vmatpush1.msra.mxu0 0.0
  %2335 = vmatprep.subr.mxu0 0.0
  %2336 = vmatpush1.msra.mxu0 0.0
  %2337 = vmatprep.subr.mxu0 0.0
  %2338 = vmatpush1.msra.mxu0 0.0
  %2339 = vmatprep.subr.mxu0 0.0
  %2340 = vmatpush1.msra.mxu0 0.0
  %2341 = vmatprep.subr.mxu0 0.0
  %2342 = vmatpush1.msra.mxu0 0.0
  %2343 = vmatprep.subr.mxu0 0.0
  %2344 = vmatpush1.msra.mxu0 0.0
  %2345 = vmatprep.subr.mxu0 0.0
  %2346 = vmatpush1.msra.mxu0 0.0
  %2347 = vmatprep.subr.mxu0 0.0
  %2348 = vmatpush1.msra.mxu0 0.0
  %2349 = vmatprep.subr.mxu0 0.0
  %2350 = vmatpush1.msra.mxu0 0.0
  %2351 = vmatprep.subr.mxu0 0.0
  %2352 = vmatpush1.msra.mxu0 0.0
  %2353 = vmatprep.subr.mxu0 0.0
  %2354 = vmatpush1.msra.mxu0 0.0
  %2355 = vmatprep.subr.mxu0 0.0
  %2356 = vmatpush1.msra.mxu0 0.0
  %2357 = vmatprep.subr.mxu0 0.0
  %2358 = vmatpush1.msra.mxu0 0.0
  %2359 = vmatprep.mubr.f32.mxu0 0.0
  %2360 = vmatmul.mubr.f32.gmra.mrb[0].mxu0 %v2290
  %v2361 = vpop.f32.mrb[0].mxu0
  %v2362 = vadd.f32 %v2281, %v2361
  %v2363 = vpop.f32.mrb[0].mxu0
  %2364 = vmatprep.mubr.f32.mxu0 0.0
  %2365 = vmatmul.mubr.f32.gmra.mrb[0].mxu0 %v2293
  %v2366 = vpop.f32.mrb[0].mxu0
  %v2367 = vadd.f32 %v2286, %v2366
  %v2368 = vpop.f32.mrb[0].mxu0
  %2369 = vdwg.mxu0
  %s2370 = scalar_lea.vmem %s6, 144
  %v2371 = vld [vmem:[%s2370] sm:$0xff]
  %v2372 = vld [vmem:[%s2370 + $0x8] sm:$0xff]
  %v2374 = vsel %vm1333, %v2371, 0
  %v2377 = vsel %vm1333, %v2372, 0
  %2379 = vmatprep.subr.mxu0 0.0
  %2380 = vmatpush1.msra.mxu0 %v1227
  %2381 = vmatprep.subr.mxu0 0.0
  %2382 = vmatpush1.msra.mxu0 %v1228
  %2383 = vmatprep.subr.mxu0 0.0
  %2384 = vmatpush1.msra.mxu0 %v1229
  %2385 = vmatprep.subr.mxu0 0.0
  %2386 = vmatpush1.msra.mxu0 %v1230
  %2387 = vmatprep.subr.mxu0 0.0
  %2388 = vmatpush1.msra.mxu0 0.0
  %2389 = vmatprep.subr.mxu0 0.0
  %2390 = vmatpush1.msra.mxu0 0.0
  %2391 = vmatprep.subr.mxu0 0.0
  %2392 = vmatpush1.msra.mxu0 0.0
  %2393 = vmatprep.subr.mxu0 0.0
  %2394 = vmatpush1.msra.mxu0 0.0
  %2395 = vmatprep.subr.mxu0 0.0
  %2396 = vmatpush1.msra.mxu0 0.0
  %2397 = vmatprep.subr.mxu0 0.0
  %2398 = vmatpush1.msra.mxu0 0.0
  %2399 = vmatprep.subr.mxu0 0.0
  %2400 = vmatpush1.msra.mxu0 0.0
  %2401 = vmatprep.subr.mxu0 0.0
  %2402 = vmatpush1.msra.mxu0 0.0
  %2403 = vmatprep.subr.mxu0 0.0
  %2404 = vmatpush1.msra.mxu0 0.0
  %2405 = vmatprep.subr.mxu0 0.0
  %2406 = vmatpush1.msra.mxu0 0.0
  %2407 = vmatprep.subr.mxu0 0.0
  %2408 = vmatpush1.msra.mxu0 0.0
  %2409 = vmatprep.subr.mxu0 0.0
  %2410 = vmatpush1.msra.mxu0 0.0
  %2411 = vmatprep.subr.mxu0 0.0
  %2412 = vmatpush1.msra.mxu0 0.0
  %2413 = vmatprep.subr.mxu0 0.0
  %2414 = vmatpush1.msra.mxu0 0.0
  %2415 = vmatprep.subr.mxu0 0.0
  %2416 = vmatpush1.msra.mxu0 0.0
  %2417 = vmatprep.subr.mxu0 0.0
  %2418 = vmatpush1.msra.mxu0 0.0
  %2419 = vmatprep.subr.mxu0 0.0
  %2420 = vmatpush1.msra.mxu0 0.0
  %2421 = vmatprep.subr.mxu0 0.0
  %2422 = vmatpush1.msra.mxu0 0.0
  %2423 = vmatprep.subr.mxu0 0.0
  %2424 = vmatpush1.msra.mxu0 0.0
  %2425 = vmatprep.subr.mxu0 0.0
  %2426 = vmatpush1.msra.mxu0 0.0
  %2427 = vmatprep.subr.mxu0 0.0
  %2428 = vmatpush1.msra.mxu0 0.0
  %2429 = vmatprep.subr.mxu0 0.0
  %2430 = vmatpush1.msra.mxu0 0.0
  %2431 = vmatprep.subr.mxu0 0.0
  %2432 = vmatpush1.msra.mxu0 0.0
  %2433 = vmatprep.subr.mxu0 0.0
  %2434 = vmatpush1.msra.mxu0 0.0
  %2435 = vmatprep.subr.mxu0 0.0
  %2436 = vmatpush1.msra.mxu0 0.0
  %2437 = vmatprep.subr.mxu0 0.0
  %2438 = vmatpush1.msra.mxu0 0.0
  %2439 = vmatprep.subr.mxu0 0.0
  %2440 = vmatpush1.msra.mxu0 0.0
  %2441 = vmatprep.subr.mxu0 0.0
  %2442 = vmatpush1.msra.mxu0 0.0
  %2443 = vmatprep.mubr.f32.mxu0 0.0
  %2444 = vmatmul.mubr.f32.gmra.mrb[0].mxu0 %v2374
  %v2445 = vpop.f32.mrb[0].mxu0
  %v2446 = vadd.f32 0.0, %v2445
  %v2447 = vpop.f32.mrb[0].mxu0
  %2448 = vmatprep.mubr.f32.mxu0 0.0
  %2449 = vmatmul.mubr.f32.gmra.mrb[0].mxu0 %v2377
  %v2450 = vpop.f32.mrb[0].mxu0
  %v2451 = vadd.f32 0.0, %v2450
  %v2452 = vpop.f32.mrb[0].mxu0
  %2453 = vdwg.mxu0
  %v2454 = vadd.f32 %v2362, %v2446
  %v2455 = vadd.f32 %v2367, %v2451
  %s2456 = scalar_lea.vmem %s6, 176
  %v2457 = vld [vmem:[%s2456] sm:$0xff]
  %v2458 = vld [vmem:[%s2456 + $0x8] sm:$0xff]
  %v2460 = vsel %vm1333, %v2457, 0
  %v2463 = vsel %vm1333, %v2458, 0
  %2465 = vmatprep.subr.mxu0 0.0
  %2466 = vmatpush1.msra.mxu0 %v1275
  %2467 = vmatprep.subr.mxu0 0.0
  %2468 = vmatpush1.msra.mxu0 %v1276
  %2469 = vmatprep.subr.mxu0 0.0
  %2470 = vmatpush1.msra.mxu0 %v1277
  %2471 = vmatprep.subr.mxu0 0.0
  %2472 = vmatpush1.msra.mxu0 %v1278
  %2473 = vmatprep.subr.mxu0 0.0
  %2474 = vmatpush1.msra.mxu0 0.0
  %2475 = vmatprep.subr.mxu0 0.0
  %2476 = vmatpush1.msra.mxu0 0.0
  %2477 = vmatprep.subr.mxu0 0.0
  %2478 = vmatpush1.msra.mxu0 0.0
  %2479 = vmatprep.subr.mxu0 0.0
  %2480 = vmatpush1.msra.mxu0 0.0
  %2481 = vmatprep.subr.mxu0 0.0
  %2482 = vmatpush1.msra.mxu0 0.0
  %2483 = vmatprep.subr.mxu0 0.0
  %2484 = vmatpush1.msra.mxu0 0.0
  %2485 = vmatprep.subr.mxu0 0.0
  %2486 = vmatpush1.msra.mxu0 0.0
  %2487 = vmatprep.subr.mxu0 0.0
  %2488 = vmatpush1.msra.mxu0 0.0
  %2489 = vmatprep.subr.mxu0 0.0
  %2490 = vmatpush1.msra.mxu0 0.0
  %2491 = vmatprep.subr.mxu0 0.0
  %2492 = vmatpush1.msra.mxu0 0.0
  %2493 = vmatprep.subr.mxu0 0.0
  %2494 = vmatpush1.msra.mxu0 0.0
  %2495 = vmatprep.subr.mxu0 0.0
  %2496 = vmatpush1.msra.mxu0 0.0
  %2497 = vmatprep.subr.mxu0 0.0
  %2498 = vmatpush1.msra.mxu0 0.0
  %2499 = vmatprep.subr.mxu0 0.0
  %2500 = vmatpush1.msra.mxu0 0.0
  %2501 = vmatprep.subr.mxu0 0.0
  %2502 = vmatpush1.msra.mxu0 0.0
  %2503 = vmatprep.subr.mxu0 0.0
  %2504 = vmatpush1.msra.mxu0 0.0
  %2505 = vmatprep.subr.mxu0 0.0
  %2506 = vmatpush1.msra.mxu0 0.0
  %2507 = vmatprep.subr.mxu0 0.0
  %2508 = vmatpush1.msra.mxu0 0.0
  %2509 = vmatprep.subr.mxu0 0.0
  %2510 = vmatpush1.msra.mxu0 0.0
  %2511 = vmatprep.subr.mxu0 0.0
  %2512 = vmatpush1.msra.mxu0 0.0
  %2513 = vmatprep.subr.mxu0 0.0
  %2514 = vmatpush1.msra.mxu0 0.0
  %2515 = vmatprep.subr.mxu0 0.0
  %2516 = vmatpush1.msra.mxu0 0.0
  %2517 = vmatprep.subr.mxu0 0.0
  %2518 = vmatpush1.msra.mxu0 0.0
  %2519 = vmatprep.subr.mxu0 0.0
  %2520 = vmatpush1.msra.mxu0 0.0
  %2521 = vmatprep.subr.mxu0 0.0
  %2522 = vmatpush1.msra.mxu0 0.0
  %2523 = vmatprep.subr.mxu0 0.0
  %2524 = vmatpush1.msra.mxu0 0.0
  %2525 = vmatprep.subr.mxu0 0.0
  %2526 = vmatpush1.msra.mxu0 0.0
  %2527 = vmatprep.subr.mxu0 0.0
  %2528 = vmatpush1.msra.mxu0 0.0
  %2529 = vmatprep.mubr.f32.mxu0 0.0
  %2530 = vmatmul.mubr.f32.gmra.mrb[0].mxu0 %v2460
  %v2531 = vpop.f32.mrb[0].mxu0
  %v2532 = vadd.f32 0.0, %v2531
  %v2533 = vpop.f32.mrb[0].mxu0
  %2534 = vmatprep.mubr.f32.mxu0 0.0
  %2535 = vmatmul.mubr.f32.gmra.mrb[0].mxu0 %v2463
  %v2536 = vpop.f32.mrb[0].mxu0
  %v2537 = vadd.f32 0.0, %v2536
  %v2538 = vpop.f32.mrb[0].mxu0
  %2539 = vdwg.mxu0
  %v2540 = vadd.f32 %v2454, %v2532
  %v2541 = vadd.f32 %v2455, %v2537
  %v2542 = vld [vmem:[%s7] sm:$0xff]
  %v2543 = vld [vmem:[%s7 + $0x8] sm:$0xff]
  %2545 = vset.pattern.permute.xlu0 0
  %2546 = vperm.xlu0 %2545, %v2542
  %v2547 = vpop.permute.xlu0 %2546
  %2550 = vset.pattern.permute.xlu0 0
  %2551 = vperm.xlu0 %2550, %v2543
  %v2552 = vpop.permute.xlu0 %2551
  %v2554 = vadd.f32 %v2540, %v2547
  %v2555 = vadd.f32 %v2541, %v2552
  %v2556 = vmax.f32 %v2554, 0.0
  %v2557 = vmax.f32 %v2555, 0.0
  %v2558 = vld [vmem:[%s8] sm:$0xff]
  %v2559 = vld [vmem:[%s9] sm:$0xff]
  %2561 = vset.pattern.permute.xlu0 0
  %2562 = vperm.xlu0 %2561, %v2559
  %v2563 = vpop.permute.xlu0 %2562
  %v2566 = vsel %vm178, %v2558, 0
  %2568 = vmatprep.subr.mxu0 0.0
  %2569 = vmatpush1.msra.mxu0 %v2556
  %2570 = vmatprep.subr.mxu0 0.0
  %2571 = vmatpush1.msra.mxu0 %v2557
  %2572 = vmatprep.subr.mxu0 0.0
  %2573 = vmatpush1.msra.mxu0 0.0
  %2574 = vmatprep.subr.mxu0 0.0
  %2575 = vmatpush1.msra.mxu0 0.0
  %2576 = vmatprep.subr.mxu0 0.0
  %2577 = vmatpush1.msra.mxu0 0.0
  %2578 = vmatprep.subr.mxu0 0.0
  %2579 = vmatpush1.msra.mxu0 0.0
  %2580 = vmatprep.subr.mxu0 0.0
  %2581 = vmatpush1.msra.mxu0 0.0
  %2582 = vmatprep.subr.mxu0 0.0
  %2583 = vmatpush1.msra.mxu0 0.0
  %2584 = vmatprep.subr.mxu0 0.0
  %2585 = vmatpush1.msra.mxu0 0.0
  %2586 = vmatprep.subr.mxu0 0.0
  %2587 = vmatpush1.msra.mxu0 0.0
  %2588 = vmatprep.subr.mxu0 0.0
  %2589 = vmatpush1.msra.mxu0 0.0
  %2590 = vmatprep.subr.mxu0 0.0
  %2591 = vmatpush1.msra.mxu0 0.0
  %2592 = vmatprep.subr.mxu0 0.0
  %2593 = vmatpush1.msra.mxu0 0.0
  %2594 = vmatprep.subr.mxu0 0.0
  %2595 = vmatpush1.msra.mxu0 0.0
  %2596 = vmatprep.subr.mxu0 0.0
  %2597 = vmatpush1.msra.mxu0 0.0
  %2598 = vmatprep.subr.mxu0 0.0
  %2599 = vmatpush1.msra.mxu0 0.0
  %2600 = vmatprep.subr.mxu0 0.0
  %2601 = vmatpush1.msra.mxu0 0.0
  %2602 = vmatprep.subr.mxu0 0.0
  %2603 = vmatpush1.msra.mxu0 0.0
  %2604 = vmatprep.subr.mxu0 0.0
  %2605 = vmatpush1.msra.mxu0 0.0
  %2606 = vmatprep.subr.mxu0 0.0
  %2607 = vmatpush1.msra.mxu0 0.0
  %2608 = vmatprep.subr.mxu0 0.0
  %2609 = vmatpush1.msra.mxu0 0.0
  %2610 = vmatprep.subr.mxu0 0.0
  %2611 = vmatpush1.msra.mxu0 0.0
  %2612 = vmatprep.subr.mxu0 0.0
  %2613 = vmatpush1.msra.mxu0 0.0
  %2614 = vmatprep.subr.mxu0 0.0
  %2615 = vmatpush1.msra.mxu0 0.0
  %2616 = vmatprep.subr.mxu0 0.0
  %2617 = vmatpush1.msra.mxu0 0.0
  %2618 = vmatprep.subr.mxu0 0.0
  %2619 = vmatpush1.msra.mxu0 0.0
  %2620 = vmatprep.subr.mxu0 0.0
  %2621 = vmatpush1.msra.mxu0 0.0
  %2622 = vmatprep.subr.mxu0 0.0
  %2623 = vmatpush1.msra.mxu0 0.0
  %2624 = vmatprep.subr.mxu0 0.0
  %2625 = vmatpush1.msra.mxu0 0.0
  %2626 = vmatprep.subr.mxu0 0.0
  %2627 = vmatpush1.msra.mxu0 0.0
  %2628 = vmatprep.subr.mxu0 0.0
  %2629 = vmatpush1.msra.mxu0 0.0
  %2630 = vmatprep.subr.mxu0 0.0
  %2631 = vmatpush1.msra.mxu0 0.0
  %2632 = vmatprep.mubr.f32.mxu0 0.0
  %2633 = vmatmul.mubr.f32.gmra.mrb[0].mxu0 %v2566
  %v2634 = vpop.f32.mrb[0].mxu0
  %v2635 = vadd.f32 %v2563, %v2634
  %v2636 = vpop.f32.mrb[0].mxu0
  %2637 = vdwg.mxu0
  %2638 = vst [vmem:[%s10 + $0x10] sm:$0xff] %v2635
  %v2639 = vld [vmem:[%s6] sm:$0xff]
  %v2640 = vld [vmem:[%s6 + $0x8] sm:$0xff]
  %s2641 = scalar_lea.vmem %s6, 32
  %v2642 = vld [vmem:[%s2641] sm:$0xff]
  %v2643 = vld [vmem:[%s2641 + $0x8] sm:$0xff]
  %v2645 = vsel %vm1333, %v2642, 0
  %v2648 = vsel %vm1333, %v2643, 0
  %2650 = vmatprep.subr.mxu0 0.0
  %2651 = vmatpush1.msra.mxu0 %v1311
  %2652 = vmatprep.subr.mxu0 0.0
  %2653 = vmatpush1.msra.mxu0 %v1312
  %2654 = vmatprep.subr.mxu0 0.0
  %2655 = vmatpush1.msra.mxu0 %v1313
  %2656 = vmatprep.subr.mxu0 0.0
  %2657 = vmatpush1.msra.mxu0 %v1314
  %2658 = vmatprep.subr.mxu0 0.0
  %2659 = vmatpush1.msra.mxu0 0.0
  %2660 = vmatprep.subr.mxu0 0.0
  %2661 = vmatpush1.msra.mxu0 0.0
  %2662 = vmatprep.subr.mxu0 0.0
  %2663 = vmatpush1.msra.mxu0 0.0
  %2664 = vmatprep.subr.mxu0 0.0
  %2665 = vmatpush1.msra.mxu0 0.0
  %2666 = vmatprep.subr.mxu0 0.0
  %2667 = vmatpush1.msra.mxu0 0.0
  %2668 = vmatprep.subr.mxu0 0.0
  %2669 = vmatpush1.msra.mxu0 0.0
  %2670 = vmatprep.subr.mxu0 0.0
  %2671 = vmatpush1.msra.mxu0 0.0
  %2672 = vmatprep.subr.mxu0 0.0
  %2673 = vmatpush1.msra.mxu0 0.0
  %2674 = vmatprep.subr.mxu0 0.0
  %2675 = vmatpush1.msra.mxu0 0.0
  %2676 = vmatprep.subr.mxu0 0.0
  %2677 = vmatpush1.msra.mxu0 0.0
  %2678 = vmatprep.subr.mxu0 0.0
  %2679 = vmatpush1.msra.mxu0 0.0
  %2680 = vmatprep.subr.mxu0 0.0
  %2681 = vmatpush1.msra.mxu0 0.0
  %2682 = vmatprep.subr.mxu0 0.0
  %2683 = vmatpush1.msra.mxu0 0.0
  %2684 = vmatprep.subr.mxu0 0.0
  %2685 = vmatpush1.msra.mxu0 0.0
  %2686 = vmatprep.subr.mxu0 0.0
  %2687 = vmatpush1.msra.mxu0 0.0
  %2688 = vmatprep.subr.mxu0 0.0
  %2689 = vmatpush1.msra.mxu0 0.0
  %2690 = vmatprep.subr.mxu0 0.0
  %2691 = vmatpush1.msra.mxu0 0.0
  %2692 = vmatprep.subr.mxu0 0.0
  %2693 = vmatpush1.msra.mxu0 0.0
  %2694 = vmatprep.subr.mxu0 0.0
  %2695 = vmatpush1.msra.mxu0 0.0
  %2696 = vmatprep.subr.mxu0 0.0
  %2697 = vmatpush1.msra.mxu0 0.0
  %2698 = vmatprep.subr.mxu0 0.0
  %2699 = vmatpush1.msra.mxu0 0.0
  %2700 = vmatprep.subr.mxu0 0.0
  %2701 = vmatpush1.msra.mxu0 0.0
  %2702 = vmatprep.subr.mxu0 0.0
  %2703 = vmatpush1.msra.mxu0 0.0
  %2704 = vmatprep.subr.mxu0 0.0
  %2705 = vmatpush1.msra.mxu0 0.0
  %2706 = vmatprep.subr.mxu0 0.0
  %2707 = vmatpush1.msra.mxu0 0.0
  %2708 = vmatprep.subr.mxu0 0.0
  %2709 = vmatpush1.msra.mxu0 0.0
  %2710 = vmatprep.subr.mxu0 0.0
  %2711 = vmatpush1.msra.mxu0 0.0
  %2712 = vmatprep.subr.mxu0 0.0
  %2713 = vmatpush1.msra.mxu0 0.0
  %2714 = vmatprep.mubr.f32.mxu0 0.0
  %2715 = vmatmul.mubr.f32.gmra.mrb[0].mxu0 %v2645
  %v2716 = vpop.f32.mrb[0].mxu0
  %v2717 = vadd.f32 0.0, %v2716
  %v2718 = vpop.f32.mrb[0].mxu0
  %2719 = vmatprep.mubr.f32.mxu0 0.0
  %2720 = vmatmul.mubr.f32.gmra.mrb[0].mxu0 %v2648
  %v2721 = vpop.f32.mrb[0].mxu0
  %v2722 = vadd.f32 0.0, %v2721
  %v2723 = vpop.f32.mrb[0].mxu0
  %2724 = vdwg.mxu0
  %v2726 = vsel %vm1333, %v2639, 0
  %v2729 = vsel %vm1333, %v2640, 0
  %2731 = vmatprep.subr.mxu0 0.0
  %2732 = vmatpush1.msra.mxu0 %v1323
  %2733 = vmatprep.subr.mxu0 0.0
  %2734 = vmatpush1.msra.mxu0 %v1324
  %2735 = vmatprep.subr.mxu0 0.0
  %2736 = vmatpush1.msra.mxu0 %v1325
  %2737 = vmatprep.subr.mxu0 0.0
  %2738 = vmatpush1.msra.mxu0 %v1326
  %2739 = vmatprep.subr.mxu0 0.0
  %2740 = vmatpush1.msra.mxu0 0.0
  %2741 = vmatprep.subr.mxu0 0.0
  %2742 = vmatpush1.msra.mxu0 0.0
  %2743 = vmatprep.subr.mxu0 0.0
  %2744 = vmatpush1.msra.mxu0 0.0
  %2745 = vmatprep.subr.mxu0 0.0
  %2746 = vmatpush1.msra.mxu0 0.0
  %2747 = vmatprep.subr.mxu0 0.0
  %2748 = vmatpush1.msra.mxu0 0.0
  %2749 = vmatprep.subr.mxu0 0.0
  %2750 = vmatpush1.msra.mxu0 0.0
  %2751 = vmatprep.subr.mxu0 0.0
  %2752 = vmatpush1.msra.mxu0 0.0
  %2753 = vmatprep.subr.mxu0 0.0
  %2754 = vmatpush1.msra.mxu0 0.0
  %2755 = vmatprep.subr.mxu0 0.0
  %2756 = vmatpush1.msra.mxu0 0.0
  %2757 = vmatprep.subr.mxu0 0.0
  %2758 = vmatpush1.msra.mxu0 0.0
  %2759 = vmatprep.subr.mxu0 0.0
  %2760 = vmatpush1.msra.mxu0 0.0
  %2761 = vmatprep.subr.mxu0 0.0
  %2762 = vmatpush1.msra.mxu0 0.0
  %2763 = vmatprep.subr.mxu0 0.0
  %2764 = vmatpush1.msra.mxu0 0.0
  %2765 = vmatprep.subr.mxu0 0.0
  %2766 = vmatpush1.msra.mxu0 0.0
  %2767 = vmatprep.subr.mxu0 0.0
  %2768 = vmatpush1.msra.mxu0 0.0
  %2769 = vmatprep.subr.mxu0 0.0
  %2770 = vmatpush1.msra.mxu0 0.0
  %2771 = vmatprep.subr.mxu0 0.0
  %2772 = vmatpush1.msra.mxu0 0.0
  %2773 = vmatprep.subr.mxu0 0.0
  %2774 = vmatpush1.msra.mxu0 0.0
  %2775 = vmatprep.subr.mxu0 0.0
  %2776 = vmatpush1.msra.mxu0 0.0
  %2777 = vmatprep.subr.mxu0 0.0
  %2778 = vmatpush1.msra.mxu0 0.0
  %2779 = vmatprep.subr.mxu0 0.0
  %2780 = vmatpush1.msra.mxu0 0.0
  %2781 = vmatprep.subr.mxu0 0.0
  %2782 = vmatpush1.msra.mxu0 0.0
  %2783 = vmatprep.subr.mxu0 0.0
  %2784 = vmatpush1.msra.mxu0 0.0
  %2785 = vmatprep.subr.mxu0 0.0
  %2786 = vmatpush1.msra.mxu0 0.0
  %2787 = vmatprep.subr.mxu0 0.0
  %2788 = vmatpush1.msra.mxu0 0.0
  %2789 = vmatprep.subr.mxu0 0.0
  %2790 = vmatpush1.msra.mxu0 0.0
  %2791 = vmatprep.subr.mxu0 0.0
  %2792 = vmatpush1.msra.mxu0 0.0
  %2793 = vmatprep.subr.mxu0 0.0
  %2794 = vmatpush1.msra.mxu0 0.0
  %2795 = vmatprep.mubr.f32.mxu0 0.0
  %2796 = vmatmul.mubr.f32.gmra.mrb[0].mxu0 %v2726
  %v2797 = vpop.f32.mrb[0].mxu0
  %v2798 = vadd.f32 %v2717, %v2797
  %v2799 = vpop.f32.mrb[0].mxu0
  %2800 = vmatprep.mubr.f32.mxu0 0.0
  %2801 = vmatmul.mubr.f32.gmra.mrb[0].mxu0 %v2729
  %v2802 = vpop.f32.mrb[0].mxu0
  %v2803 = vadd.f32 %v2722, %v2802
  %v2804 = vpop.f32.mrb[0].mxu0
  %2805 = vdwg.mxu0
  %s2806 = scalar_lea.vmem %s6, 128
  %v2807 = vld [vmem:[%s2806] sm:$0xff]
  %v2808 = vld [vmem:[%s2806 + $0x8] sm:$0xff]
  %v2810 = vsel %vm1333, %v2807, 0
  %v2813 = vsel %vm1333, %v2808, 0
  %2815 = vmatprep.subr.mxu0 0.0
  %2816 = vmatpush1.msra.mxu0 %v1287
  %2817 = vmatprep.subr.mxu0 0.0
  %2818 = vmatpush1.msra.mxu0 %v1288
  %2819 = vmatprep.subr.mxu0 0.0
  %2820 = vmatpush1.msra.mxu0 %v1289
  %2821 = vmatprep.subr.mxu0 0.0
  %2822 = vmatpush1.msra.mxu0 %v1290
  %2823 = vmatprep.subr.mxu0 0.0
  %2824 = vmatpush1.msra.mxu0 0.0
  %2825 = vmatprep.subr.mxu0 0.0
  %2826 = vmatpush1.msra.mxu0 0.0
  %2827 = vmatprep.subr.mxu0 0.0
  %2828 = vmatpush1.msra.mxu0 0.0
  %2829 = vmatprep.subr.mxu0 0.0
  %2830 = vmatpush1.msra.mxu0 0.0
  %2831 = vmatprep.subr.mxu0 0.0
  %2832 = vmatpush1.msra.mxu0 0.0
  %2833 = vmatprep.subr.mxu0 0.0
  %2834 = vmatpush1.msra.mxu0 0.0
  %2835 = vmatprep.subr.mxu0 0.0
  %2836 = vmatpush1.msra.mxu0 0.0
  %2837 = vmatprep.subr.mxu0 0.0
  %2838 = vmatpush1.msra.mxu0 0.0
  %2839 = vmatprep.subr.mxu0 0.0
  %2840 = vmatpush1.msra.mxu0 0.0
  %2841 = vmatprep.subr.mxu0 0.0
  %2842 = vmatpush1.msra.mxu0 0.0
  %2843 = vmatprep.subr.mxu0 0.0
  %2844 = vmatpush1.msra.mxu0 0.0
  %2845 = vmatprep.subr.mxu0 0.0
  %2846 = vmatpush1.msra.mxu0 0.0
  %2847 = vmatprep.subr.mxu0 0.0
  %2848 = vmatpush1.msra.mxu0 0.0
  %2849 = vmatprep.subr.mxu0 0.0
  %2850 = vmatpush1.msra.mxu0 0.0
  %2851 = vmatprep.subr.mxu0 0.0
  %2852 = vmatpush1.msra.mxu0 0.0
  %2853 = vmatprep.subr.mxu0 0.0
  %2854 = vmatpush1.msra.mxu0 0.0
  %2855 = vmatprep.subr.mxu0 0.0
  %2856 = vmatpush1.msra.mxu0 0.0
  %2857 = vmatprep.subr.mxu0 0.0
  %2858 = vmatpush1.msra.mxu0 0.0
  %2859 = vmatprep.subr.mxu0 0.0
  %2860 = vmatpush1.msra.mxu0 0.0
  %2861 = vmatprep.subr.mxu0 0.0
  %2862 = vmatpush1.msra.mxu0 0.0
  %2863 = vmatprep.subr.mxu0 0.0
  %2864 = vmatpush1.msra.mxu0 0.0
  %2865 = vmatprep.subr.mxu0 0.0
  %2866 = vmatpush1.msra.mxu0 0.0
  %2867 = vmatprep.subr.mxu0 0.0
  %2868 = vmatpush1.msra.mxu0 0.0
  %2869 = vmatprep.subr.mxu0 0.0
  %2870 = vmatpush1.msra.mxu0 0.0
  %2871 = vmatprep.subr.mxu0 0.0
  %2872 = vmatpush1.msra.mxu0 0.0
  %2873 = vmatprep.subr.mxu0 0.0
  %2874 = vmatpush1.msra.mxu0 0.0
  %2875 = vmatprep.subr.mxu0 0.0
  %2876 = vmatpush1.msra.mxu0 0.0
  %2877 = vmatprep.subr.mxu0 0.0
  %2878 = vmatpush1.msra.mxu0 0.0
  %2879 = vmatprep.mubr.f32.mxu0 0.0
  %2880 = vmatmul.mubr.f32.gmra.mrb[0].mxu0 %v2810
  %v2881 = vpop.f32.mrb[0].mxu0
  %v2882 = vadd.f32 0.0, %v2881
  %v2883 = vpop.f32.mrb[0].mxu0
  %2884 = vmatprep.mubr.f32.mxu0 0.0
  %2885 = vmatmul.mubr.f32.gmra.mrb[0].mxu0 %v2813
  %v2886 = vpop.f32.mrb[0].mxu0
  %v2887 = vadd.f32 0.0, %v2886
  %v2888 = vpop.f32.mrb[0].mxu0
  %2889 = vdwg.mxu0
  %v2890 = vadd.f32 %v2798, %v2882
  %v2891 = vadd.f32 %v2803, %v2887
  %s2892 = scalar_lea.vmem %s6, 160
  %v2893 = vld [vmem:[%s2892] sm:$0xff]
  %v2894 = vld [vmem:[%s2892 + $0x8] sm:$0xff]
  %v2896 = vsel %vm1333, %v2893, 0
  %v2899 = vsel %vm1333, %v2894, 0
  %2901 = vmatprep.subr.mxu0 0.0
  %2902 = vmatpush1.msra.mxu0 %v1227
  %2903 = vmatprep.subr.mxu0 0.0
  %2904 = vmatpush1.msra.mxu0 %v1228
  %2905 = vmatprep.subr.mxu0 0.0
  %2906 = vmatpush1.msra.mxu0 %v1229
  %2907 = vmatprep.subr.mxu0 0.0
  %2908 = vmatpush1.msra.mxu0 %v1230
  %2909 = vmatprep.subr.mxu0 0.0
  %2910 = vmatpush1.msra.mxu0 0.0
  %2911 = vmatprep.subr.mxu0 0.0
  %2912 = vmatpush1.msra.mxu0 0.0
  %2913 = vmatprep.subr.mxu0 0.0
  %2914 = vmatpush1.msra.mxu0 0.0
  %2915 = vmatprep.subr.mxu0 0.0
  %2916 = vmatpush1.msra.mxu0 0.0
  %2917 = vmatprep.subr.mxu0 0.0
  %2918 = vmatpush1.msra.mxu0 0.0
  %2919 = vmatprep.subr.mxu0 0.0
  %2920 = vmatpush1.msra.mxu0 0.0
  %2921 = vmatprep.subr.mxu0 0.0
  %2922 = vmatpush1.msra.mxu0 0.0
  %2923 = vmatprep.subr.mxu0 0.0
  %2924 = vmatpush1.msra.mxu0 0.0
  %2925 = vmatprep.subr.mxu0 0.0
  %2926 = vmatpush1.msra.mxu0 0.0
  %2927 = vmatprep.subr.mxu0 0.0
  %2928 = vmatpush1.msra.mxu0 0.0
  %2929 = vmatprep.subr.mxu0 0.0
  %2930 = vmatpush1.msra.mxu0 0.0
  %2931 = vmatprep.subr.mxu0 0.0
  %2932 = vmatpush1.msra.mxu0 0.0
  %2933 = vmatprep.subr.mxu0 0.0
  %2934 = vmatpush1.msra.mxu0 0.0
  %2935 = vmatprep.subr.mxu0 0.0
  %2936 = vmatpush1.msra.mxu0 0.0
  %2937 = vmatprep.subr.mxu0 0.0
  %2938 = vmatpush1.msra.mxu0 0.0
  %2939 = vmatprep.subr.mxu0 0.0
  %2940 = vmatpush1.msra.mxu0 0.0
  %2941 = vmatprep.subr.mxu0 0.0
  %2942 = vmatpush1.msra.mxu0 0.0
  %2943 = vmatprep.subr.mxu0 0.0
  %2944 = vmatpush1.msra.mxu0 0.0
  %2945 = vmatprep.subr.mxu0 0.0
  %2946 = vmatpush1.msra.mxu0 0.0
  %2947 = vmatprep.subr.mxu0 0.0
  %2948 = vmatpush1.msra.mxu0 0.0
  %2949 = vmatprep.subr.mxu0 0.0
  %2950 = vmatpush1.msra.mxu0 0.0
  %2951 = vmatprep.subr.mxu0 0.0
  %2952 = vmatpush1.msra.mxu0 0.0
  %2953 = vmatprep.subr.mxu0 0.0
  %2954 = vmatpush1.msra.mxu0 0.0
  %2955 = vmatprep.subr.mxu0 0.0
  %2956 = vmatpush1.msra.mxu0 0.0
  %2957 = vmatprep.subr.mxu0 0.0
  %2958 = vmatpush1.msra.mxu0 0.0
  %2959 = vmatprep.subr.mxu0 0.0
  %2960 = vmatpush1.msra.mxu0 0.0
  %2961 = vmatprep.subr.mxu0 0.0
  %2962 = vmatpush1.msra.mxu0 0.0
  %2963 = vmatprep.subr.mxu0 0.0
  %2964 = vmatpush1.msra.mxu0 0.0
  %2965 = vmatprep.mubr.f32.mxu0 0.0
  %2966 = vmatmul.mubr.f32.gmra.mrb[0].mxu0 %v2896
  %v2967 = vpop.f32.mrb[0].mxu0
  %v2968 = vadd.f32 0.0, %v2967
  %v2969 = vpop.f32.mrb[0].mxu0
  %2970 = vmatprep.mubr.f32.mxu0 0.0
  %2971 = vmatmul.mubr.f32.gmra.mrb[0].mxu0 %v2899
  %v2972 = vpop.f32.mrb[0].mxu0
  %v2973 = vadd.f32 0.0, %v2972
  %v2974 = vpop.f32.mrb[0].mxu0
  %2975 = vdwg.mxu0
  %v2976 = vadd.f32 %v2890, %v2968
  %v2977 = vadd.f32 %v2891, %v2973
  %v2978 = vld [vmem:[%s7] sm:$0xff]
  %v2979 = vld [vmem:[%s7 + $0x8] sm:$0xff]
  %2981 = vset.pattern.permute.xlu0 0
  %2982 = vperm.xlu0 %2981, %v2978
  %v2983 = vpop.permute.xlu0 %2982
  %2986 = vset.pattern.permute.xlu0 0
  %2987 = vperm.xlu0 %2986, %v2979
  %v2988 = vpop.permute.xlu0 %2987
  %v2990 = vadd.f32 %v2976, %v2983
  %v2991 = vadd.f32 %v2977, %v2988
  %v2992 = vmax.f32 %v2990, 0.0
  %v2993 = vmax.f32 %v2991, 0.0
  %v2994 = vld [vmem:[%s8] sm:$0xff]
  %v2995 = vld [vmem:[%s9] sm:$0xff]
  %2997 = vset.pattern.permute.xlu0 0
  %2998 = vperm.xlu0 %2997, %v2995
  %v2999 = vpop.permute.xlu0 %2998
  %v3002 = vsel %vm178, %v2994, 0
  %3004 = vmatprep.subr.mxu0 0.0
  %3005 = vmatpush1.msra.mxu0 %v2992
  %3006 = vmatprep.subr.mxu0 0.0
  %3007 = vmatpush1.msra.mxu0 %v2993
  %3008 = vmatprep.subr.mxu0 0.0
  %3009 = vmatpush1.msra.mxu0 0.0
  %3010 = vmatprep.subr.mxu0 0.0
  %3011 = vmatpush1.msra.mxu0 0.0
  %3012 = vmatprep.subr.mxu0 0.0
  %3013 = vmatpush1.msra.mxu0 0.0
  %3014 = vmatprep.subr.mxu0 0.0
  %3015 = vmatpush1.msra.mxu0 0.0
  %3016 = vmatprep.subr.mxu0 0.0
  %3017 = vmatpush1.msra.mxu0 0.0
  %3018 = vmatprep.subr.mxu0 0.0
  %3019 = vmatpush1.msra.mxu0 0.0
  %3020 = vmatprep.subr.mxu0 0.0
  %3021 = vmatpush1.msra.mxu0 0.0
  %3022 = vmatprep.subr.mxu0 0.0
  %3023 = vmatpush1.msra.mxu0 0.0
  %3024 = vmatprep.subr.mxu0 0.0
  %3025 = vmatpush1.msra.mxu0 0.0
  %3026 = vmatprep.subr.mxu0 0.0
  %3027 = vmatpush1.msra.mxu0 0.0
  %3028 = vmatprep.subr.mxu0 0.0
  %3029 = vmatpush1.msra.mxu0 0.0
  %3030 = vmatprep.subr.mxu0 0.0
  %3031 = vmatpush1.msra.mxu0 0.0
  %3032 = vmatprep.subr.mxu0 0.0
  %3033 = vmatpush1.msra.mxu0 0.0
  %3034 = vmatprep.subr.mxu0 0.0
  %3035 = vmatpush1.msra.mxu0 0.0
  %3036 = vmatprep.subr.mxu0 0.0
  %3037 = vmatpush1.msra.mxu0 0.0
  %3038 = vmatprep.subr.mxu0 0.0
  %3039 = vmatpush1.msra.mxu0 0.0
  %3040 = vmatprep.subr.mxu0 0.0
  %3041 = vmatpush1.msra.mxu0 0.0
  %3042 = vmatprep.subr.mxu0 0.0
  %3043 = vmatpush1.msra.mxu0 0.0
  %3044 = vmatprep.subr.mxu0 0.0
  %3045 = vmatpush1.msra.mxu0 0.0
  %3046 = vmatprep.subr.mxu0 0.0
  %3047 = vmatpush1.msra.mxu0 0.0
  %3048 = vmatprep.subr.mxu0 0.0
  %3049 = vmatpush1.msra.mxu0 0.0
  %3050 = vmatprep.subr.mxu0 0.0
  %3051 = vmatpush1.msra.mxu0 0.0
  %3052 = vmatprep.subr.mxu0 0.0
  %3053 = vmatpush1.msra.mxu0 0.0
  %3054 = vmatprep.subr.mxu0 0.0
  %3055 = vmatpush1.msra.mxu0 0.0
  %3056 = vmatprep.subr.mxu0 0.0
  %3057 = vmatpush1.msra.mxu0 0.0
  %3058 = vmatprep.subr.mxu0 0.0
  %3059 = vmatpush1.msra.mxu0 0.0
  %3060 = vmatprep.subr.mxu0 0.0
  %3061 = vmatpush1.msra.mxu0 0.0
  %3062 = vmatprep.subr.mxu0 0.0
  %3063 = vmatpush1.msra.mxu0 0.0
  %3064 = vmatprep.subr.mxu0 0.0
  %3065 = vmatpush1.msra.mxu0 0.0
  %3066 = vmatprep.subr.mxu0 0.0
  %3067 = vmatpush1.msra.mxu0 0.0
  %3068 = vmatprep.mubr.f32.mxu0 0.0
  %3069 = vmatmul.mubr.f32.gmra.mrb[0].mxu0 %v3002
  %v3070 = vpop.f32.mrb[0].mxu0
  %v3071 = vadd.f32 %v2999, %v3070
  %v3072 = vpop.f32.mrb[0].mxu0
  %3073 = vdwg.mxu0
  %3074 = vst [vmem:[%s10 + $0x18] sm:$0xff] %v3071
  // Predicated region
  $region42: #{pose_resnet_forward.1} parent=0 // pred_check
    _
  $region43: #{pose_resnet_forward.1} parent=0 // pred_check_branch
    %3076 = sbr.rel (0) target = $region45
  $region44: #{pose_resnet_forward.1} parent=0 // pred_region
    _
  $region45: #{pose_resnet_forward.1} parent=0 // pred_fallthru
    _
  // Predicated region
  $region46: #{pose_resnet_forward.1} parent=0 // pred_check
    _
  $region47: #{pose_resnet_forward.1} parent=0 // pred_check_branch
    %3078 = sbr.rel (0) target = $region49
  $region48: #{pose_resnet_forward.1} parent=0 // pred_region
    _
  $region49: #{pose_resnet_forward.1} parent=0 // pred_fallthru
    _

</llo_original>
